<compile_context>
chip_gen: v7x
topology: tpu7x:2x2x1
jax: 0.10.0
libtpu: 0.0.40
codegen_flags: <defaults>
</compile_context>

<pallas_src>
import functools

import jax
import jax.numpy as jnp
from jax.experimental import pallas as pl
from jax.experimental.pallas import tpu as pltpu

LEAKY = 0.8            # negative_slope of leaky_relu (== module's `leaky`)
GCN_LAYERS = 3         # module's `layers`
SELF_LOOP = 0.8        # hard-coded 0.8 in HSCD_Net.convolution
TB = 256               # batch tile for the prediction head (lane-dense output)
EMB_RESIDENT_MAX = 4 * 1024 * 1024   # keep emb VMEM-resident in the GCN if <= this


def _round_up(x, m):
    return ((x + m - 1) // m) * m


def _pad_cols(x, cols):
    return jnp.pad(x, ((0, 0), (0, cols - x.shape[1])))


@functools.lru_cache(maxsize=1)
def _vmem_limit_bytes():
    # ~70% of physical VMEM, capped: v5e/v6e (128 MiB) -> ~90 MiB, v7x (64 MiB)
    # -> ~44 MiB.  Conservative fallback if the query is unavailable.
    try:
        cap = int(pltpu.get_tpu_info().vmem_capacity_bytes)
    except Exception:
        cap = 64 << 20
    return max(32 << 20, min(int(cap * 0.7), 96 << 20))


# ---------------------------------------------------------------------------
# Kernel 1: one GCN layer, tiled over the dense adjacency.
#   out = (adj + 0.8*I) @ emb          (self-loop pre-folded into adj)
# grid = (n_pad/tile_i rows, n_pad/tile_k reduction); adjacency streamed in
# rectangular (tile_i, tile_k) blocks; the embedding is VMEM-resident for the
# whole layer (sliced in-kernel) when small, otherwise streamed per k-step.
# ---------------------------------------------------------------------------
def _gcn_layer_kernel(adj_ref, emb_ref, out_ref, acc_ref, *, tile_k, resident):
    k = pl.program_id(1)

    @pl.when(k == 0)
    def _init():
        acc_ref[...] = jnp.zeros_like(acc_ref)

    if resident:
        off = pl.multiple_of(k * tile_k, tile_k)
        emb_blk = emb_ref[pl.ds(off, tile_k), :]
    else:
        emb_blk = emb_ref[...]

    acc_ref[...] += jnp.dot(adj_ref[...], emb_blk,
                            preferred_element_type=jnp.float32)

    @pl.when(k == pl.num_programs(1) - 1)
    def _store():
        out_ref[...] = acc_ref[...]


def _gcn_tiles(n):
    """Pick (n_pad, tile_i, tile_k) for the GCN adjacency tiling."""
    n_pad = _round_up(n, 128)
    if n_pad <= 256:
        # Small graph (demo sizes): one right-sized block, no extra padding.
        return n_pad, n_pad, n_pad
    tile_i = 256                       # >= 2 row blocks so both v7x TCs get work
    n_pad = _round_up(n_pad, tile_i)
    if n_pad % 1024 == 0:
        tile_k = 1024                  # 1 MiB adj DMAs amortize per-step overhead
    elif n_pad % 512 == 0:
        tile_k = 512
    else:
        tile_k = 256
    return n_pad, tile_i, tile_k


def _gcn_layer_step(adj_p, emb_p, tile_i, tile_k, resident):
    n_pad, e = emb_p.shape
    grid = (n_pad // tile_i, n_pad // tile_k)
    if resident:
        emb_spec = pl.BlockSpec((n_pad, e), lambda i, k: (0, 0))   # resident, DMA'd once
    else:
        emb_spec = pl.BlockSpec((tile_k, e), lambda i, k: (k, 0))  # streamed per k-step
    kernel = functools.partial(_gcn_layer_kernel, tile_k=tile_k, resident=resident)
    return pl.pallas_call(
        kernel,
        out_shape=jax.ShapeDtypeStruct((n_pad, e), jnp.float32),
        grid_spec=pltpu.PrefetchScalarGridSpec(
            num_scalar_prefetch=0,
            grid=grid,
            in_specs=[
                pl.BlockSpec((tile_i, tile_k), lambda i, k: (i, k)),  # adj tile (streamed)
                emb_spec,
            ],
            out_specs=pl.BlockSpec((tile_i, e), lambda i, k: (i, 0)),
            scratch_shapes=[pltpu.VMEM((tile_i, e), jnp.float32)],
        ),
        compiler_params=pltpu.CompilerParams(
            dimension_semantics=("parallel", "arbitrary"),
            vmem_limit_bytes=_vmem_limit_bytes(),
        ),
    )(adj_p, emb_p)


def gcn_convolution(adj, emb, layers=GCN_LAYERS):
    """mean over {emb_0, ..., emb_layers} with emb_{l+1} = adj@emb_l + 0.8*emb_l."""
    n, e = emb.shape
    n_pad, tile_i, tile_k = _gcn_tiles(n)
    adj_p = jnp.pad(adj.astype(jnp.float32), ((0, n_pad - n), (0, n_pad - n)))
    # Fold the 0.8*emb self-loop into the adjacency: (adj + 0.8*I) @ emb.
    adj_p = adj_p + SELF_LOOP * jnp.eye(n_pad, dtype=jnp.float32)
    cur = jnp.pad(emb.astype(jnp.float32), ((0, n_pad - n), (0, 0)))
    resident = (n_pad * e * 4) <= EMB_RESIDENT_MAX
    acc = cur
    for _ in range(layers):
        cur = _gcn_layer_step(adj_p, cur, tile_i, tile_k, resident)
        acc = acc + cur          # tiny [N,E] adds: plain-JAX glue
        # TODO(synk): for very large N*E, fuse this running sum + /(layers+1)
        # into the layer kernel via a second aliased output.
    return (acc / jnp.float32(layers + 1))[:n]


# ---------------------------------------------------------------------------
# Kernel 2: knowledge feature projection (batch-invariant, computed ONCE).
#   kf = leaky_relu(conv_k @ Wk_pad + bk_pad)        -> [K, fpad]
# ---------------------------------------------------------------------------
def _kf_kernel(kemb_ref, wk_ref, bk_ref, out_ref):
    z = jnp.dot(kemb_ref[...], wk_ref[...],
                preferred_element_type=jnp.float32) + bk_ref[...]
    out_ref[...] = jnp.where(z >= 0, z, LEAKY * z)


def knowledge_feature(kemb, wk_pad, bk_pad):
    k_num, emb = kemb.shape
    fpad = wk_pad.shape[1]
    return pl.pallas_call(
        _kf_kernel,
        out_shape=jax.ShapeDtypeStruct((k_num, fpad), jnp.float32),
        grid_spec=pltpu.PrefetchScalarGridSpec(
            num_scalar_prefetch=0,
            grid=(1,),
            in_specs=[pl.BlockSpec((k_num, emb), lambda i: (0, 0)),
                      pl.BlockSpec((emb, fpad), lambda i: (0, 0)),
                      pl.BlockSpec((1, fpad), lambda i: (0, 0))],
            out_specs=pl.BlockSpec((k_num, fpad), lambda i: (0, 0)),
        ),
        compiler_params=pltpu.CompilerParams(
            vmem_limit_bytes=_vmem_limit_bytes(),
        ),
    )(kemb, wk_pad, bk_pad)


# ---------------------------------------------------------------------------
# Kernel 3: fused prediction head, gridded over the batch (TB rows / step).
#   student projection, exercise+discrimination projection (one matmul with a
#   lane-aligned 128-wide disc column group), interaction state, state2response
#   MLP, lane-dense (1, TB) sigmoid output.  kf is a precomputed resident input.
# ---------------------------------------------------------------------------
def _head_kernel(xs_ref, xe_ref, kn_ref, kf_ref,
                 ws_ref, bs_ref, wed_ref, bed_ref,
                 w1_ref, b1_ref, w2_ref, b2_ref,
                 w3_ref, b3_ref, w4t_ref, b4_ref,
                 out_ref):
    fpad = kf_ref.shape[1]              # feature_dim rounded up to 128 (zero-padded)

    def leaky(x):
        return jnp.where(x >= 0, x, LEAKY * x)

    def linear(x, w_ref, b_ref):
        return jnp.dot(x, w_ref[...], preferred_element_type=jnp.float32) + b_ref[...]

    nt = (((1,), (1,)), ((), ()))       # contract last dims: MXU absorbs the transpose

    sf = leaky(linear(xs_ref[...], ws_ref, bs_ref))                # [tb, fpad]
    ye = linear(xe_ref[...], wed_ref, bed_ref)                     # [tb, fpad+128]
    ef = leaky(ye[:, :fpad])                                       # padded cols stay 0
    disc = jax.nn.sigmoid(ye[:, fpad:fpad + 1])                    # [tb, 1]

    # (sf @ kf.T - ef @ kf.T) == (sf - ef) @ kf.T : one MXU pass instead of two.
    dk = jax.lax.dot_general(sf - ef, kf_ref[...], nt,
                             preferred_element_type=jnp.float32)   # [tb, K]
    state = disc * dk * kn_ref[...]                                # [tb, K]

    h = jnp.tanh(linear(state, w1_ref, b1_ref))                    # [tb, 512]
    h = jnp.tanh(linear(h, w2_ref, b2_ref))                        # [tb, 256]
    h = jnp.tanh(linear(h, w3_ref, b3_ref))                        # [tb, 128]
    # Final 128->1 layer emitted lane-dense: contract w4's 128 input dim against
    # h's feature dim so the result is directly [1, tb] (no XLU transpose,
    # unmasked 128-wide stores).
    logits = jax.lax.dot_general(w4t_ref[...], h, nt,
                                 preferred_element_type=jnp.float32)  # [1, tb]
    out_ref[...] = jax.nn.sigmoid(logits + b4_ref[...])


def prediction_head(xs, xe, kn, kf, params):
    b_pad, emb = xs.shape
    k_num, fpad = kf.shape

    ws = _pad_cols(params["ws"], fpad)                             # [emb, fpad]
    bs = _pad_cols(params["bs"], fpad)                             # [1, fpad]
    # Exercise feature + discrimination share one matmul; the disc column gets
    # its own lane-aligned, zero-padded 128-wide group.
    wed = jnp.concatenate([_pad_cols(params["we"], fpad),
                           _pad_cols(params["wd"], 128)], axis=1)  # [emb, fpad+128]
    bed = jnp.concatenate([_pad_cols(params["be"], fpad),
                           _pad_cols(params["bd"], 128)], axis=1)  # [1, fpad+128]
    w4t = params["w4"].reshape(1, -1)                              # [1, 128]

    weights = (ws, bs, wed, bed,
               params["w1"], params["b1"], params["w2"], params["b2"],
               params["w3"], params["b3"], w4t, params["b4"])

    def batch_map(i):
        return (i, 0)

    def const_map(i):
        return (0, 0)

    in_specs = ([pl.BlockSpec((TB, emb), batch_map),       # student rows
                 pl.BlockSpec((TB, emb), batch_map),       # exercise rows
                 pl.BlockSpec((TB, k_num), batch_map),     # Q-matrix rows
                 pl.BlockSpec((k_num, fpad), const_map)]   # precomputed kf (resident)
                + [pl.BlockSpec(w.shape, const_map) for w in weights])  # resident weights

    return pl.pallas_call(
        _head_kernel,
        out_shape=jax.ShapeDtypeStruct((1, b_pad), jnp.float32),
        grid_spec=pltpu.PrefetchScalarGridSpec(
            num_scalar_prefetch=0,
            grid=(b_pad // TB,),
            in_specs=in_specs,
            out_specs=pl.BlockSpec((1, TB), lambda i: (0, i)),
        ),
        compiler_params=pltpu.CompilerParams(
            dimension_semantics=("parallel",),
            vmem_limit_bytes=_vmem_limit_bytes(),
        ),
    )(xs, xe, kn, kf, *weights)


# ---------------------------------------------------------------------------
# Full forward pass (matches HSCD_Net.forward)
# ---------------------------------------------------------------------------
def hscd_forward(params, student_id, exercise_id, knowledge):
    conv_s = gcn_convolution(params["student_adj"], params["student_emb"])
    conv_e = gcn_convolution(params["exercise_adj"], params["exercise_emb"])
    conv_k = gcn_convolution(params["knowledge_adj"], params["knowledge_emb"])

    # Batch-invariant knowledge projection computed ONCE (hoisted out of the head).
    f = params["ws"].shape[1]
    fpad = _round_up(f, 128)
    kf = knowledge_feature(conv_k, _pad_cols(params["wk"], fpad),
                           _pad_cols(params["bk"], fpad))

    # Embedding row gathers kept as plain-JAX glue.
    # TODO(synk): fold the gathers into the head kernel via scalar-prefetch
    # row-gather BlockSpecs for very large batches.
    batch_student = jnp.take(conv_s, student_id, axis=0)
    batch_exercise = jnp.take(conv_e, exercise_id, axis=0)

    b = student_id.shape[0]
    b_pad = _round_up(b, TB)
    row_pad = ((0, b_pad - b), (0, 0))
    xs = jnp.pad(batch_student, row_pad)
    xe = jnp.pad(batch_exercise, row_pad)
    kn = jnp.pad(knowledge.astype(jnp.float32), row_pad)

    out = prediction_head(xs, xe, kn, kf, params)   # [1, b_pad], lane-dense
    return out[0, :b]                               # state.view(-1)


# ---------------------------------------------------------------------------
# Deterministic parameter construction (xavier-normal weights, zero biases)
# ---------------------------------------------------------------------------
def xavier_normal(key, torch_shape):
    # torch_shape follows the PyTorch convention [fan_out, fan_in] (or [num, emb]).
    fan_out, fan_in = torch_shape
    std = (2.0 / (fan_in + fan_out)) ** 0.5
    return std * jax.random.normal(key, torch_shape, dtype=jnp.float32)


def make_linear(key, in_dim, out_dim):
    w_torch = xavier_normal(key, (out_dim, in_dim))          # [out, in]
    return w_torch.T, jnp.zeros((1, out_dim), jnp.float32)   # pre-transposed [in, out]


def make_adj(key, n):
    # Dense stand-in for the sparse adjacency: non-negative, row-normalized.
    a = jax.nn.relu(jax.random.normal(key, (n, n), dtype=jnp.float32))
    return a / (jnp.sum(a, axis=1, keepdims=True) + 1e-6)


def init_params(key, student_num, exercise_num, knowledge_num, emb_dim, feature_dim):
    ks = jax.random.split(key, 16)
    p = {}
    p["student_emb"] = xavier_normal(ks[0], (student_num, emb_dim))
    p["exercise_emb"] = xavier_normal(ks[1], (exercise_num, emb_dim))
    p["knowledge_emb"] = xavier_normal(ks[2], (knowledge_num, emb_dim))
    p["student_adj"] = make_adj(ks[3], student_num)
    p["exercise_adj"] = make_adj(ks[4], exercise_num)
    p["knowledge_adj"] = make_adj(ks[5], knowledge_num)
    p["ws"], p["bs"] = make_linear(ks[6], emb_dim, feature_dim)
    p["we"], p["be"] = make_linear(ks[7], emb_dim, feature_dim)
    p["wk"], p["bk"] = make_linear(ks[8], emb_dim, feature_dim)
    p["wd"], p["bd"] = make_linear(ks[9], emb_dim, 1)
    p["w1"], p["b1"] = make_linear(ks[10], knowledge_num, 512)
    p["w2"], p["b2"] = make_linear(ks[11], 512, 256)
    p["w3"], p["b3"] = make_linear(ks[12], 256, 128)
    p["w4"], p["b4"] = make_linear(ks[13], 128, 1)
    return p


if __name__ == "__main__":
    student_num, exercise_num, knowledge_num = 32, 24, 16
    emb_dim, feature_dim, batch = 8, 8, 8

    key = jax.random.PRNGKey(0)
    k_param, k_sid, k_eid, k_kn = jax.random.split(key, 4)

    params = init_params(k_param, student_num, exercise_num, knowledge_num,
                         emb_dim, feature_dim)

    student_id = jax.random.randint(k_sid, (batch,), 0, student_num)
    exercise_id = jax.random.randint(k_eid, (batch,), 0, exercise_num)
    # Q-matrix rows: binary knowledge-relevance vectors per sample.
    knowledge = jax.random.bernoulli(k_kn, 0.5, (batch, knowledge_num)).astype(jnp.float32)

    out = jax.jit(hscd_forward)(params, student_id, exercise_id, knowledge)
    out = jax.block_until_ready(out)
    assert out.shape == (batch,)
    assert bool(jnp.all(jnp.isfinite(out)))
    print("KERNEL_OK")
</pallas_src>

<mosaic_0001>
module attributes {stable_mosaic.version = 11 : i64} {
  func.func @_gcn_layer_kernel(%arg0: i32, %arg1: i32, %arg2: memref<128x128xf32, #tpu.memory_space<vmem>>, %arg3: memref<128x8xf32, #tpu.memory_space<vmem>>, %arg4: memref<128x8xf32, #tpu.memory_space<vmem>>, %arg5: memref<128x8xf32, #tpu.memory_space<vmem>>) attributes {dimension_semantics = [#tpu.dimension_semantics<parallel>, #tpu.dimension_semantics<arbitrary>], iteration_bounds = array<i64: 1, 1>, scalar_prefetch = 0 : i64, scratch_operands = 1 : i64, tpu.core_type = #tpu.core_type<tc>, window_params = [{transform_indices = @transform_0, window_bounds = array<i64: 128, 128>}, {pipeline_mode = #tpu.pipeline_mode<synchronous>, transform_indices = @transform_1, window_bounds = array<i64: 128, 8>}, {transform_indices = @transform_2, window_bounds = array<i64: 128, 8>}]} {
    %c0_i32 = arith.constant 0 : i32
    %0 = arith.cmpi eq, %arg1, %c0_i32 : i32
    %1 = arith.extui %0 : i1 to i32
    %c0_i32_0 = arith.constant 0 : i32
    %2 = arith.cmpi ne, %1, %c0_i32_0 : i32
    scf.if %2 {
      %cst_9 = arith.constant 0.000000e+00 : f32
      %15 = vector.broadcast %cst_9 : f32 to vector<128x8xf32>
      %c0_10 = arith.constant 0 : index
      %c0_11 = arith.constant 0 : index
      %16 = vector.load %arg5[%c0_10, %c0_11] : memref<128x8xf32, #tpu.memory_space<vmem>>, vector<128x8xf32>
      tpu.vector_store %arg5[%c0_10, %c0_11], %15 {strides = array<i32>} : memref<128x8xf32, #tpu.memory_space<vmem>>, vector<128x8xf32>,
    } else {
    }
    %c128_i32 = arith.constant 128 : i32
    %3 = arith.muli %arg1, %c128_i32 : i32
    %4 = tpu.assume_multiple %3, 128 : i32
    %5 = arith.index_cast %4 : i32 to index
    %c0 = arith.constant 0 : index
    %6 = vector.load %arg3[%5, %c0] : memref<128x8xf32, #tpu.memory_space<vmem>>, vector<128x8xf32>
    %c0_1 = arith.constant 0 : index
    %c0_2 = arith.constant 0 : index
    %7 = vector.load %arg5[%c0_1, %c0_2] : memref<128x8xf32, #tpu.memory_space<vmem>>, vector<128x8xf32>
    %c0_3 = arith.constant 0 : index
    %c0_4 = arith.constant 0 : index
    %8 = vector.load %arg2[%c0_3, %c0_4] : memref<128x128xf32, #tpu.memory_space<vmem>>, vector<128x128xf32>
    %cst = arith.constant dense<0.000000e+00> : vector<128x8xf32>
    %9 = tpu.matmul %8, %6, %cst {dimension_numbers = #tpu.dot_dimension_numbers<[1], [0], [0], [1], [0, 0, 1, 1], [], []>} : vector<128x128xf32>, vector<128x8xf32>, vector<128x8xf32> -> vector<128x8xf32>
    %10 = arith.addf %7, %9 : vector<128x8xf32>
    %c0_5 = arith.constant 0 : index
    %c0_6 = arith.constant 0 : index
    %11 = vector.load %arg5[%c0_5, %c0_6] : memref<128x8xf32, #tpu.memory_space<vmem>>, vector<128x8xf32>
    tpu.vector_store %arg5[%c0_5, %c0_6], %10 {strides = array<i32>} : memref<128x8xf32, #tpu.memory_space<vmem>>, vector<128x8xf32>,
    %c0_i32_7 = arith.constant 0 : i32
    %12 = arith.cmpi eq, %arg1, %c0_i32_7 : i32
    %13 = arith.extui %12 : i1 to i32
    %c0_i32_8 = arith.constant 0 : i32
    %14 = arith.cmpi ne, %13, %c0_i32_8 : i32
    scf.if %14 {
      %c0_9 = arith.constant 0 : index
      %c0_10 = arith.constant 0 : index
      %15 = vector.load %arg5[%c0_9, %c0_10] : memref<128x8xf32, #tpu.memory_space<vmem>>, vector<128x8xf32>
      %c0_11 = arith.constant 0 : index
      %c0_12 = arith.constant 0 : index
      %16 = vector.load %arg4[%c0_11, %c0_12] : memref<128x8xf32, #tpu.memory_space<vmem>>, vector<128x8xf32>
      tpu.vector_store %arg4[%c0_11, %c0_12], %15 {strides = array<i32>} : memref<128x8xf32, #tpu.memory_space<vmem>>, vector<128x8xf32>,
    } else {
    }
    return
  }
  func.func @transform_0(%arg0: i32, %arg1: i32) -> (i32, i32) {
    %c0_i32 = arith.constant 0 : i32
    return %arg0, %arg1 : i32, i32
  }
  func.func @transform_1(%arg0: i32, %arg1: i32) -> (i32, i32) {
    %c0_i32 = arith.constant 0 : i32
    %c0_i32_0 = arith.constant 0 : i32
    %c0_i32_1 = arith.constant 0 : i32
    return %c0_i32, %c0_i32_0 : i32, i32
  }
  func.func @transform_2(%arg0: i32, %arg1: i32) -> (i32, i32) {
    %c0_i32 = arith.constant 0 : i32
    %c0_i32_0 = arith.constant 0 : i32
    return %arg0, %c0_i32 : i32, i32
  }
}

module attributes {stable_mosaic.version = 11 : i64} {
  func.func @_kf_kernel(%arg0: i32, %arg1: memref<16x8xf32, #tpu.memory_space<vmem>>, %arg2: memref<8x128xf32, #tpu.memory_space<vmem>>, %arg3: memref<1x128xf32, #tpu.memory_space<vmem>>, %arg4: memref<16x128xf32, #tpu.memory_space<vmem>>) attributes {dimension_semantics = [#tpu.dimension_semantics<arbitrary>], iteration_bounds = array<i64: 1>, scalar_prefetch = 0 : i64, scratch_operands = 0 : i64, tpu.core_type = #tpu.core_type<tc>, window_params = [{pipeline_mode = #tpu.pipeline_mode<synchronous>, transform_indices = @transform_0, window_bounds = array<i64: 16, 8>}, {pipeline_mode = #tpu.pipeline_mode<synchronous>, transform_indices = @transform_1, window_bounds = array<i64: 8, 128>}, {pipeline_mode = #tpu.pipeline_mode<synchronous>, transform_indices = @transform_2, window_bounds = array<i64: 1, 128>}, {pipeline_mode = #tpu.pipeline_mode<synchronous>, transform_indices = @transform_3, window_bounds = array<i64: 16, 128>}]} {
    %c0 = arith.constant 0 : index
    %c0_0 = arith.constant 0 : index
    %0 = vector.load %arg1[%c0, %c0_0] : memref<16x8xf32, #tpu.memory_space<vmem>>, vector<16x8xf32>
    %c0_1 = arith.constant 0 : index
    %c0_2 = arith.constant 0 : index
    %1 = vector.load %arg2[%c0_1, %c0_2] : memref<8x128xf32, #tpu.memory_space<vmem>>, vector<8x128xf32>
    %cst = arith.constant dense<0.000000e+00> : vector<16x128xf32>
    %2 = tpu.matmul %0, %1, %cst {dimension_numbers = #tpu.dot_dimension_numbers<[1], [0], [0], [1], [0, 0, 1, 1], [], []>} : vector<16x8xf32>, vector<8x128xf32>, vector<16x128xf32> -> vector<16x128xf32>
    %c0_3 = arith.constant 0 : index
    %c0_4 = arith.constant 0 : index
    %3 = vector.load %arg3[%c0_3, %c0_4] : memref<1x128xf32, #tpu.memory_space<vmem>>, vector<1x128xf32>
    %4 = vector.broadcast %3 : vector<1x128xf32> to vector<16x128xf32>
    %5 = arith.addf %2, %4 : vector<16x128xf32>
    %cst_5 = arith.constant 0.000000e+00 : f32
    %6 = vector.broadcast %cst_5 : f32 to vector<16x128xf32>
    %7 = arith.cmpf oge, %5, %6 : vector<16x128xf32>
    %cst_6 = arith.constant 8.000000e-01 : f32
    %8 = vector.broadcast %cst_6 : f32 to vector<16x128xf32>
    %9 = arith.mulf %8, %5 : vector<16x128xf32>
    %10 = arith.select %7, %5, %9 : vector<16x128xi1>, vector<16x128xf32>
    %c0_7 = arith.constant 0 : index
    %c0_8 = arith.constant 0 : index
    %11 = vector.load %arg4[%c0_7, %c0_8] : memref<16x128xf32, #tpu.memory_space<vmem>>, vector<16x128xf32>
    tpu.vector_store %arg4[%c0_7, %c0_8], %10 {strides = array<i32>} : memref<16x128xf32, #tpu.memory_space<vmem>>, vector<16x128xf32>,
    return
  }
  func.func @transform_0(%arg0: i32) -> (i32, i32) {
    %c0_i32 = arith.constant 0 : i32
    %c0_i32_0 = arith.constant 0 : i32
    %c0_i32_1 = arith.constant 0 : i32
    return %c0_i32, %c0_i32_0 : i32, i32
  }
  func.func @transform_1(%arg0: i32) -> (i32, i32) {
    %c0_i32 = arith.constant 0 : i32
    %c0_i32_0 = arith.constant 0 : i32
    %c0_i32_1 = arith.constant 0 : i32
    return %c0_i32, %c0_i32_0 : i32, i32
  }
  func.func @transform_2(%arg0: i32) -> (i32, i32) {
    %c0_i32 = arith.constant 0 : i32
    %c0_i32_0 = arith.constant 0 : i32
    %c0_i32_1 = arith.constant 0 : i32
    return %c0_i32, %c0_i32_0 : i32, i32
  }
  func.func @transform_3(%arg0: i32) -> (i32, i32) {
    %c0_i32 = arith.constant 0 : i32
    %c0_i32_0 = arith.constant 0 : i32
    %c0_i32_1 = arith.constant 0 : i32
    return %c0_i32, %c0_i32_0 : i32, i32
  }
}

module attributes {stable_mosaic.version = 11 : i64} {
  func.func @_head_kernel(%arg0: i32, %arg1: memref<256x8xf32, #tpu.memory_space<vmem>>, %arg2: memref<256x8xf32, #tpu.memory_space<vmem>>, %arg3: memref<256x16xf32, #tpu.memory_space<vmem>>, %arg4: memref<16x128xf32, #tpu.memory_space<vmem>>, %arg5: memref<8x128xf32, #tpu.memory_space<vmem>>, %arg6: memref<1x128xf32, #tpu.memory_space<vmem>>, %arg7: memref<8x256xf32, #tpu.memory_space<vmem>>, %arg8: memref<1x256xf32, #tpu.memory_space<vmem>>, %arg9: memref<16x512xf32, #tpu.memory_space<vmem>>, %arg10: memref<1x512xf32, #tpu.memory_space<vmem>>, %arg11: memref<512x256xf32, #tpu.memory_space<vmem>>, %arg12: memref<1x256xf32, #tpu.memory_space<vmem>>, %arg13: memref<256x128xf32, #tpu.memory_space<vmem>>, %arg14: memref<1x128xf32, #tpu.memory_space<vmem>>, %arg15: memref<1x128xf32, #tpu.memory_space<vmem>>, %arg16: memref<1x1xf32, #tpu.memory_space<vmem>>, %arg17: memref<1x256xf32, #tpu.memory_space<vmem>>) attributes {dimension_semantics = [#tpu.dimension_semantics<parallel>], iteration_bounds = array<i64: 1>, scalar_prefetch = 0 : i64, scratch_operands = 0 : i64, tpu.core_type = #tpu.core_type<tc>, window_params = [{transform_indices = @transform_0, window_bounds = array<i64: 256, 8>}, {transform_indices = @transform_1, window_bounds = array<i64: 256, 8>}, {transform_indices = @transform_2, window_bounds = array<i64: 256, 16>}, {pipeline_mode = #tpu.pipeline_mode<synchronous>, transform_indices = @transform_3, window_bounds = array<i64: 16, 128>}, {pipeline_mode = #tpu.pipeline_mode<synchronous>, transform_indices = @transform_4, window_bounds = array<i64: 8, 128>}, {pipeline_mode = #tpu.pipeline_mode<synchronous>, transform_indices = @transform_5, window_bounds = array<i64: 1, 128>}, {pipeline_mode = #tpu.pipeline_mode<synchronous>, transform_indices = @transform_6, window_bounds = array<i64: 8, 256>}, {pipeline_mode = #tpu.pipeline_mode<synchronous>, transform_indices = @transform_7, window_bounds = array<i64: 1, 256>}, {pipeline_mode = #tpu.pipeline_mode<synchronous>, transform_indices = @transform_8, window_bounds = array<i64: 16, 512>}, {pipeline_mode = #tpu.pipeline_mode<synchronous>, transform_indices = @transform_9, window_bounds = array<i64: 1, 512>}, {pipeline_mode = #tpu.pipeline_mode<synchronous>, transform_indices = @transform_10, window_bounds = array<i64: 512, 256>}, {pipeline_mode = #tpu.pipeline_mode<synchronous>, transform_indices = @transform_11, window_bounds = array<i64: 1, 256>}, {pipeline_mode = #tpu.pipeline_mode<synchronous>, transform_indices = @transform_12, window_bounds = array<i64: 256, 128>}, {pipeline_mode = #tpu.pipeline_mode<synchronous>, transform_indices = @transform_13, window_bounds = array<i64: 1, 128>}, {pipeline_mode = #tpu.pipeline_mode<synchronous>, transform_indices = @transform_14, window_bounds = array<i64: 1, 128>}, {pipeline_mode = #tpu.pipeline_mode<synchronous>, transform_indices = @transform_15, window_bounds = array<i64: 1, 1>}, {transform_indices = @transform_16, window_bounds = array<i64: 1, 256>}]} {
    %c0 = arith.constant 0 : index
    %c0_0 = arith.constant 0 : index
    %0 = vector.load %arg1[%c0, %c0_0] : memref<256x8xf32, #tpu.memory_space<vmem>>, vector<256x8xf32>
    %c0_1 = arith.constant 0 : index
    %c0_2 = arith.constant 0 : index
    %1 = vector.load %arg5[%c0_1, %c0_2] : memref<8x128xf32, #tpu.memory_space<vmem>>, vector<8x128xf32>
    %cst = arith.constant dense<0.000000e+00> : vector<256x128xf32>
    %2 = tpu.matmul %0, %1, %cst {dimension_numbers = #tpu.dot_dimension_numbers<[1], [0], [0], [1], [0, 0, 1, 1], [], []>} : vector<256x8xf32>, vector<8x128xf32>, vector<256x128xf32> -> vector<256x128xf32>
    %c0_3 = arith.constant 0 : index
    %c0_4 = arith.constant 0 : index
    %3 = vector.load %arg6[%c0_3, %c0_4] : memref<1x128xf32, #tpu.memory_space<vmem>>, vector<1x128xf32>
    %4 = vector.broadcast %3 : vector<1x128xf32> to vector<256x128xf32>
    %5 = arith.addf %2, %4 : vector<256x128xf32>
    %cst_5 = arith.constant 0.000000e+00 : f32
    %6 = vector.broadcast %cst_5 : f32 to vector<256x128xf32>
    %7 = arith.cmpf oge, %5, %6 : vector<256x128xf32>
    %cst_6 = arith.constant 8.000000e-01 : f32
    %8 = vector.broadcast %cst_6 : f32 to vector<256x128xf32>
    %9 = arith.mulf %8, %5 : vector<256x128xf32>
    %10 = arith.select %7, %5, %9 : vector<256x128xi1>, vector<256x128xf32>
    %c0_7 = arith.constant 0 : index
    %c0_8 = arith.constant 0 : index
    %11 = vector.load %arg2[%c0_7, %c0_8] : memref<256x8xf32, #tpu.memory_space<vmem>>, vector<256x8xf32>
    %c0_9 = arith.constant 0 : index
    %c0_10 = arith.constant 0 : index
    %12 = vector.load %arg7[%c0_9, %c0_10] : memref<8x256xf32, #tpu.memory_space<vmem>>, vector<8x256xf32>
    %cst_11 = arith.constant dense<0.000000e+00> : vector<256x256xf32>
    %13 = tpu.matmul %11, %12, %cst_11 {dimension_numbers = #tpu.dot_dimension_numbers<[1], [0], [0], [1], [0, 0, 1, 1], [], []>} : vector<256x8xf32>, vector<8x256xf32>, vector<256x256xf32> -> vector<256x256xf32>
    %c0_12 = arith.constant 0 : index
    %c0_13 = arith.constant 0 : index
    %14 = vector.load %arg8[%c0_12, %c0_13] : memref<1x256xf32, #tpu.memory_space<vmem>>, vector<1x256xf32>
    %15 = vector.broadcast %14 : vector<1x256xf32> to vector<256x256xf32>
    %16 = arith.addf %13, %15 : vector<256x256xf32>
    %17 = vector.extract_strided_slice %16 {offsets = [0, 0], sizes = [256, 128], strides = [1, 1]} : vector<256x256xf32> to vector<256x128xf32>
    %cst_14 = arith.constant 0.000000e+00 : f32
    %18 = vector.broadcast %cst_14 : f32 to vector<256x128xf32>
    %19 = arith.cmpf oge, %17, %18 : vector<256x128xf32>
    %cst_15 = arith.constant 8.000000e-01 : f32
    %20 = vector.broadcast %cst_15 : f32 to vector<256x128xf32>
    %21 = arith.mulf %20, %17 : vector<256x128xf32>
    %22 = arith.select %19, %17, %21 : vector<256x128xi1>, vector<256x128xf32>
    %23 = vector.extract_strided_slice %16 {offsets = [0, 128], sizes = [256, 1], strides = [1, 1]} : vector<256x256xf32> to vector<256x1xf32>
    %24 = arith.negf %23 : vector<256x1xf32>
    %25 = math.exp %24 : vector<256x1xf32>
    %cst_16 = arith.constant 1.000000e+00 : f32
    %26 = vector.broadcast %cst_16 : f32 to vector<256x1xf32>
    %27 = arith.addf %26, %25 : vector<256x1xf32>
    %28 = arith.divf %26, %27 : vector<256x1xf32>
    %29 = arith.subf %10, %22 : vector<256x128xf32>
    %c0_17 = arith.constant 0 : index
    %c0_18 = arith.constant 0 : index
    %30 = vector.load %arg4[%c0_17, %c0_18] : memref<16x128xf32, #tpu.memory_space<vmem>>, vector<16x128xf32>
    %cst_19 = arith.constant dense<0.000000e+00> : vector<256x16xf32>
    %31 = tpu.matmul %29, %30, %cst_19 {dimension_numbers = #tpu.dot_dimension_numbers<[1], [1], [0], [0], [0, 0, 1, 0], [], []>} : vector<256x128xf32>, vector<16x128xf32>, vector<256x16xf32> -> vector<256x16xf32>
    %32 = vector.broadcast %28 : vector<256x1xf32> to vector<256x16xf32>
    %33 = arith.mulf %32, %31 : vector<256x16xf32>
    %c0_20 = arith.constant 0 : index
    %c0_21 = arith.constant 0 : index
    %34 = vector.load %arg3[%c0_20, %c0_21] : memref<256x16xf32, #tpu.memory_space<vmem>>, vector<256x16xf32>
    %35 = arith.mulf %33, %34 : vector<256x16xf32>
    %c0_22 = arith.constant 0 : index
    %c0_23 = arith.constant 0 : index
    %36 = vector.load %arg9[%c0_22, %c0_23] : memref<16x512xf32, #tpu.memory_space<vmem>>, vector<16x512xf32>
    %cst_24 = arith.constant dense<0.000000e+00> : vector<256x512xf32>
    %37 = tpu.matmul %35, %36, %cst_24 {dimension_numbers = #tpu.dot_dimension_numbers<[1], [0], [0], [1], [0, 0, 1, 1], [], []>} : vector<256x16xf32>, vector<16x512xf32>, vector<256x512xf32> -> vector<256x512xf32>
    %c0_25 = arith.constant 0 : index
    %c0_26 = arith.constant 0 : index
    %38 = vector.load %arg10[%c0_25, %c0_26] : memref<1x512xf32, #tpu.memory_space<vmem>>, vector<1x512xf32>
    %39 = vector.broadcast %38 : vector<1x512xf32> to vector<256x512xf32>
    %40 = arith.addf %37, %39 : vector<256x512xf32>
    %41 = math.tanh %40 : vector<256x512xf32>
    %c0_27 = arith.constant 0 : index
    %c0_28 = arith.constant 0 : index
    %42 = vector.load %arg11[%c0_27, %c0_28] : memref<512x256xf32, #tpu.memory_space<vmem>>, vector<512x256xf32>
    %cst_29 = arith.constant dense<0.000000e+00> : vector<256x256xf32>
    %43 = tpu.matmul %41, %42, %cst_29 {dimension_numbers = #tpu.dot_dimension_numbers<[1], [0], [0], [1], [0, 0, 1, 1], [], []>} : vector<256x512xf32>, vector<512x256xf32>, vector<256x256xf32> -> vector<256x256xf32>
    %c0_30 = arith.constant 0 : index
    %c0_31 = arith.constant 0 : index
    %44 = vector.load %arg12[%c0_30, %c0_31] : memref<1x256xf32, #tpu.memory_space<vmem>>, vector<1x256xf32>
    %45 = vector.broadcast %44 : vector<1x256xf32> to vector<256x256xf32>
    %46 = arith.addf %43, %45 : vector<256x256xf32>
    %47 = math.tanh %46 : vector<256x256xf32>
    %c0_32 = arith.constant 0 : index
    %c0_33 = arith.constant 0 : index
    %48 = vector.load %arg13[%c0_32, %c0_33] : memref<256x128xf32, #tpu.memory_space<vmem>>, vector<256x128xf32>
    %cst_34 = arith.constant dense<0.000000e+00> : vector<256x128xf32>
    %49 = tpu.matmul %47, %48, %cst_34 {dimension_numbers = #tpu.dot_dimension_numbers<[1], [0], [0], [1], [0, 0, 1, 1], [], []>} : vector<256x256xf32>, vector<256x128xf32>, vector<256x128xf32> -> vector<256x128xf32>
    %c0_35 = arith.constant 0 : index
    %c0_36 = arith.constant 0 : index
    %50 = vector.load %arg14[%c0_35, %c0_36] : memref<1x128xf32, #tpu.memory_space<vmem>>, vector<1x128xf32>
    %51 = vector.broadcast %50 : vector<1x128xf32> to vector<256x128xf32>
    %52 = arith.addf %49, %51 : vector<256x128xf32>
    %53 = math.tanh %52 : vector<256x128xf32>
    %c0_37 = arith.constant 0 : index
    %c0_38 = arith.constant 0 : index
    %54 = vector.load %arg15[%c0_37, %c0_38] : memref<1x128xf32, #tpu.memory_space<vmem>>, vector<1x128xf32>
    %cst_39 = arith.constant dense<0.000000e+00> : vector<1x256xf32>
    %55 = tpu.matmul %54, %53, %cst_39 {dimension_numbers = #tpu.dot_dimension_numbers<[1], [1], [0], [0], [0, 0, 1, 0], [], []>} : vector<1x128xf32>, vector<256x128xf32>, vector<1x256xf32> -> vector<1x256xf32>
    %c0_40 = arith.constant 0 : index
    %c0_41 = arith.constant 0 : index
    %56 = vector.load %arg16[%c0_40, %c0_41] : memref<1x1xf32, #tpu.memory_space<vmem>>, vector<1x1xf32>
    %57 = vector.broadcast %56 : vector<1x1xf32> to vector<1x256xf32>
    %58 = arith.addf %55, %57 : vector<1x256xf32>
    %59 = arith.negf %58 : vector<1x256xf32>
    %60 = math.exp %59 : vector<1x256xf32>
    %cst_42 = arith.constant 1.000000e+00 : f32
    %61 = vector.broadcast %cst_42 : f32 to vector<1x256xf32>
    %62 = arith.addf %61, %60 : vector<1x256xf32>
    %63 = arith.divf %61, %62 : vector<1x256xf32>
    %c0_43 = arith.constant 0 : index
    %c0_44 = arith.constant 0 : index
    %64 = vector.load %arg17[%c0_43, %c0_44] : memref<1x256xf32, #tpu.memory_space<vmem>>, vector<1x256xf32>
    tpu.vector_store %arg17[%c0_43, %c0_44], %63 {strides = array<i32>} : memref<1x256xf32, #tpu.memory_space<vmem>>, vector<1x256xf32>,
    return
  }
  func.func @transform_0(%arg0: i32) -> (i32, i32) {
    %c0_i32 = arith.constant 0 : i32
    %c0_i32_0 = arith.constant 0 : i32
    return %arg0, %c0_i32 : i32, i32
  }
  func.func @transform_1(%arg0: i32) -> (i32, i32) {
    %c0_i32 = arith.constant 0 : i32
    %c0_i32_0 = arith.constant 0 : i32
    return %arg0, %c0_i32 : i32, i32
  }
  func.func @transform_2(%arg0: i32) -> (i32, i32) {
    %c0_i32 = arith.constant 0 : i32
    %c0_i32_0 = arith.constant 0 : i32
    return %arg0, %c0_i32 : i32, i32
  }
  func.func @transform_3(%arg0: i32) -> (i32, i32) {
    %c0_i32 = arith.constant 0 : i32
    %c0_i32_0 = arith.constant 0 : i32
    %c0_i32_1 = arith.constant 0 : i32
    return %c0_i32, %c0_i32_0 : i32, i32
  }
  func.func @transform_4(%arg0: i32) -> (i32, i32) {
    %c0_i32 = arith.constant 0 : i32
    %c0_i32_0 = arith.constant 0 : i32
    %c0_i32_1 = arith.constant 0 : i32
    return %c0_i32, %c0_i32_0 : i32, i32
  }
  func.func @transform_5(%arg0: i32) -> (i32, i32) {
    %c0_i32 = arith.constant 0 : i32
    %c0_i32_0 = arith.constant 0 : i32
    %c0_i32_1 = arith.constant 0 : i32
    return %c0_i32, %c0_i32_0 : i32, i32
  }
  func.func @transform_6(%arg0: i32) -> (i32, i32) {
    %c0_i32 = arith.constant 0 : i32
    %c0_i32_0 = arith.constant 0 : i32
    %c0_i32_1 = arith.constant 0 : i32
    return %c0_i32, %c0_i32_0 : i32, i32
  }
  func.func @transform_7(%arg0: i32) -> (i32, i32) {
    %c0_i32 = arith.constant 0 : i32
    %c0_i32_0 = arith.constant 0 : i32
    %c0_i32_1 = arith.constant 0 : i32
    return %c0_i32, %c0_i32_0 : i32, i32
  }
  func.func @transform_8(%arg0: i32) -> (i32, i32) {
    %c0_i32 = arith.constant 0 : i32
    %c0_i32_0 = arith.constant 0 : i32
    %c0_i32_1 = arith.constant 0 : i32
    return %c0_i32, %c0_i32_0 : i32, i32
  }
  func.func @transform_9(%arg0: i32) -> (i32, i32) {
    %c0_i32 = arith.constant 0 : i32
    %c0_i32_0 = arith.constant 0 : i32
    %c0_i32_1 = arith.constant 0 : i32
    return %c0_i32, %c0_i32_0 : i32, i32
  }
  func.func @transform_10(%arg0: i32) -> (i32, i32) {
    %c0_i32 = arith.constant 0 : i32
    %c0_i32_0 = arith.constant 0 : i32
    %c0_i32_1 = arith.constant 0 : i32
    return %c0_i32, %c0_i32_0 : i32, i32
  }
  func.func @transform_11(%arg0: i32) -> (i32, i32) {
    %c0_i32 = arith.constant 0 : i32
    %c0_i32_0 = arith.constant 0 : i32
    %c0_i32_1 = arith.constant 0 : i32
    return %c0_i32, %c0_i32_0 : i32, i32
  }
  func.func @transform_12(%arg0: i32) -> (i32, i32) {
    %c0_i32 = arith.constant 0 : i32
    %c0_i32_0 = arith.constant 0 : i32
    %c0_i32_1 = arith.constant 0 : i32
    return %c0_i32, %c0_i32_0 : i32, i32
  }
  func.func @transform_13(%arg0: i32) -> (i32, i32) {
    %c0_i32 = arith.constant 0 : i32
    %c0_i32_0 = arith.constant 0 : i32
    %c0_i32_1 = arith.constant 0 : i32
    return %c0_i32, %c0_i32_0 : i32, i32
  }
  func.func @transform_14(%arg0: i32) -> (i32, i32) {
    %c0_i32 = arith.constant 0 : i32
    %c0_i32_0 = arith.constant 0 : i32
    %c0_i32_1 = arith.constant 0 : i32
    return %c0_i32, %c0_i32_0 : i32, i32
  }
  func.func @transform_15(%arg0: i32) -> (i32, i32) {
    %c0_i32 = arith.constant 0 : i32
    %c0_i32_0 = arith.constant 0 : i32
    %c0_i32_1 = arith.constant 0 : i32
    return %c0_i32, %c0_i32_0 : i32, i32
  }
  func.func @transform_16(%arg0: i32) -> (i32, i32) {
    %c0_i32 = arith.constant 0 : i32
    %c0_i32_0 = arith.constant 0 : i32
    return %c0_i32, %arg0 : i32, i32
  }
}

</mosaic_0001>

<llo_original>
// kernel: hscd_forward.20
$region0: #{hscd_forward.20}
  #allocation0 [shape = 'u32[]', space=smem, size = 0x4, offset = 0x4, fixed_abs, tag = 'smem constant byte address 0x4 - core index']
  #allocation1 [shape = 'u32[144,128]{1,0:T(1,128)}', space=vmem, size = 0x12000, scoped, tag = 'internal scratch']
  %s0 = inlined_call_operand.vmem [shape: f32[16,8], index: 0, kind: input, shape index: {}]
  %s1 = inlined_call_operand.vmem [shape: f32[8,128], index: 1, kind: input, shape index: {}]
  %s2 = inlined_call_operand.vmem [shape: f32[1,128], index: 2, kind: input, shape index: {}]
  %s3 = inlined_call_operand.vmem [shape: f32[16,128], index: 3, kind: output, shape index: {}]
  %s4 = sld [smem:[#allocation0]]
  $region22: #{hscd_forward.20} parent=0
    _
  %s6 = ssub.s32 1, %s4
  %s7 = scalar_select 0, %s6, %s4
  // Predicated region
  $region2: #{hscd_forward.20} parent=0 // pred_check
    _
  $region3: #{hscd_forward.20} parent=0 // pred_check_branch
    %9 = sbr.rel (0) target = $region5
  $region4: #{hscd_forward.20} parent=0 // pred_region
    _
  $region5: #{hscd_forward.20} parent=0 // pred_fallthru
    _
  // Predicated region
  $region6: #{hscd_forward.20} parent=0 // pred_check
    _
  $region7: #{hscd_forward.20} parent=0 // pred_check_branch
    %11 = sbr.rel (0) target = $region9
  $region8: #{hscd_forward.20} parent=0 // pred_region
    _
  $region9: #{hscd_forward.20} parent=0 // pred_fallthru
    _
  // Predicated region
  $region10: #{hscd_forward.20} parent=0 // pred_check
    _
  $region11: #{hscd_forward.20} parent=0 // pred_check_branch
    %13 = sbr.rel (0) target = $region13
  $region12: #{hscd_forward.20} parent=0 // pred_region
    _
  $region13: #{hscd_forward.20} parent=0 // pred_fallthru
    _
  %v14 = vld [vmem:[%s0] sm:$0xff]
  %v15 = vld [vmem:[%s0 + $0x8] sm:$0xff]
  %v16 = vld [vmem:[%s1] sm:$0xff]
  %v17 = vld [vmem:[%s2] sm:$0x1]
  %v19 = vlaneseq
  %v20 = vshrl.u32 %v19, 7
  %v21 = vsub.s32 0, %v20
  %v22 = vrot.slane %v17, %v21
  %vm24 = vcmask 64512
  %v26 = vsel %vm24, %v14, 0
  %v29 = vsel %vm24, %v15, 0
  %31 = vmatprep.subr.mxu0 0.0
  %32 = vmatpush1.msra.mxu0 %v16
  %33 = vmatprep.subr.mxu0 0.0
  %34 = vmatpush1.msra.mxu0 0.0
  %35 = vmatprep.subr.mxu0 0.0
  %36 = vmatpush1.msra.mxu0 0.0
  %37 = vmatprep.subr.mxu0 0.0
  %38 = vmatpush1.msra.mxu0 0.0
  %39 = vmatprep.subr.mxu0 0.0
  %40 = vmatpush1.msra.mxu0 0.0
  %41 = vmatprep.subr.mxu0 0.0
  %42 = vmatpush1.msra.mxu0 0.0
  %43 = vmatprep.subr.mxu0 0.0
  %44 = vmatpush1.msra.mxu0 0.0
  %45 = vmatprep.subr.mxu0 0.0
  %46 = vmatpush1.msra.mxu0 0.0
  %47 = vmatprep.subr.mxu0 0.0
  %48 = vmatpush1.msra.mxu0 0.0
  %49 = vmatprep.subr.mxu0 0.0
  %50 = vmatpush1.msra.mxu0 0.0
  %51 = vmatprep.subr.mxu0 0.0
  %52 = vmatpush1.msra.mxu0 0.0
  %53 = vmatprep.subr.mxu0 0.0
  %54 = vmatpush1.msra.mxu0 0.0
  %55 = vmatprep.subr.mxu0 0.0
  %56 = vmatpush1.msra.mxu0 0.0
  %57 = vmatprep.subr.mxu0 0.0
  %58 = vmatpush1.msra.mxu0 0.0
  %59 = vmatprep.subr.mxu0 0.0
  %60 = vmatpush1.msra.mxu0 0.0
  %61 = vmatprep.subr.mxu0 0.0
  %62 = vmatpush1.msra.mxu0 0.0
  %63 = vmatprep.subr.mxu0 0.0
  %64 = vmatpush1.msra.mxu0 0.0
  %65 = vmatprep.subr.mxu0 0.0
  %66 = vmatpush1.msra.mxu0 0.0
  %67 = vmatprep.subr.mxu0 0.0
  %68 = vmatpush1.msra.mxu0 0.0
  %69 = vmatprep.subr.mxu0 0.0
  %70 = vmatpush1.msra.mxu0 0.0
  %71 = vmatprep.subr.mxu0 0.0
  %72 = vmatpush1.msra.mxu0 0.0
  %73 = vmatprep.subr.mxu0 0.0
  %74 = vmatpush1.msra.mxu0 0.0
  %75 = vmatprep.subr.mxu0 0.0
  %76 = vmatpush1.msra.mxu0 0.0
  %77 = vmatprep.subr.mxu0 0.0
  %78 = vmatpush1.msra.mxu0 0.0
  %79 = vmatprep.subr.mxu0 0.0
  %80 = vmatpush1.msra.mxu0 0.0
  %81 = vmatprep.subr.mxu0 0.0
  %82 = vmatpush1.msra.mxu0 0.0
  %83 = vmatprep.subr.mxu0 0.0
  %84 = vmatpush1.msra.mxu0 0.0
  %85 = vmatprep.subr.mxu0 0.0
  %86 = vmatpush1.msra.mxu0 0.0
  %87 = vmatprep.subr.mxu0 0.0
  %88 = vmatpush1.msra.mxu0 0.0
  %89 = vmatprep.subr.mxu0 0.0
  %90 = vmatpush1.msra.mxu0 0.0
  %91 = vmatprep.subr.mxu0 0.0
  %92 = vmatpush1.msra.mxu0 0.0
  %93 = vmatprep.subr.mxu0 0.0
  %94 = vmatpush1.msra.mxu0 0.0
  %95 = vmatprep.mubr.f32.mxu0 0.0
  %96 = vmatmul.mubr.f32.gmra.mrb[0].mxu0 %v26
  %v97 = vpop.f32.mrb[0].mxu0
  %v98 = vadd.f32 %v22, %v97
  %v99 = vpop.f32.mrb[0].mxu0
  %100 = vmatprep.mubr.f32.mxu0 0.0
  %101 = vmatmul.mubr.f32.gmra.mrb[0].mxu0 %v29
  %v102 = vpop.f32.mrb[0].mxu0
  %v103 = vadd.f32 %v22, %v102
  %v104 = vpop.f32.mrb[0].mxu0
  %105 = vdwg.mxu0
  %vm106 = vcmp.ge.f32.partialorder %v98, 0.0
  %vm107 = vcmp.ge.f32.partialorder %v103, 0.0
  %v108 = vmul.f32 %v98, 0.8
  %v109 = vmul.f32 %v103, 0.8
  %v110 = vsel %vm106, %v98, %v108
  %v111 = vsel %vm107, %v103, %v109
  %112 = vst [vmem:[%s3] sm:$0xff] %v110
  %113 = vst [vmem:[%s3 + $0x8] sm:$0xff] %v111
  // Predicated region
  $region14: #{hscd_forward.20} parent=0 // pred_check
    _
  $region15: #{hscd_forward.20} parent=0 // pred_check_branch
    %115 = sbr.rel (0) target = $region17
  $region16: #{hscd_forward.20} parent=0 // pred_region
    _
  $region17: #{hscd_forward.20} parent=0 // pred_fallthru
    _
  // Predicated region
  $region18: #{hscd_forward.20} parent=0 // pred_check
    _
  $region19: #{hscd_forward.20} parent=0 // pred_check_branch
    %117 = sbr.rel (0) target = $region21
  $region20: #{hscd_forward.20} parent=0 // pred_region
    _
  $region21: #{hscd_forward.20} parent=0 // pred_fallthru
    _

// kernel: hscd_forward.17
$region0: #{hscd_forward.17}
  #allocation0 [shape = 'u32[]', space=smem, size = 0x4, offset = 0x4, fixed_abs, tag = 'smem constant byte address 0x4 - core index']
  #allocation1 [shape = 'u32[144,128]{1,0:T(1,128)}', space=vmem, size = 0x12000, scoped, tag = 'internal scratch']
  #allocation2 [shape = 'f32[128,8]{1,0:T(8,128)}', space=vmem, size = 0x10000, scoped, tag = 'scratch operand']
  %s0 = inlined_call_operand.vmem [shape: f32[128,128], index: 0, kind: input, shape index: {}]
  %s1 = inlined_call_operand.vmem [shape: f32[128,8], index: 1, kind: input, shape index: {}]
  %s2 = inlined_call_operand.vmem [shape: f32[128,8], index: 2, kind: output, shape index: {}]
  %s3 = sld [smem:[#allocation0]]
  $region26: #{hscd_forward.17} parent=0
    _
  %s5 = ssub.s32 1, %s3
  %s6 = scalar_select 0, %s5, %s3
  // Predicated region
  $region2: #{hscd_forward.17} parent=0 // pred_check
    _
  $region3: #{hscd_forward.17} parent=0 // pred_check_branch
    %8 = sbr.rel (0) target = $region5
  $region4: #{hscd_forward.17} parent=0 // pred_region
    _
  $region5: #{hscd_forward.17} parent=0 // pred_fallthru
    _
  // Predicated region
  $region6: #{hscd_forward.17} parent=0 // pred_check
    _
  $region7: #{hscd_forward.17} parent=0 // pred_check_branch
    %10 = sbr.rel (0) target = $region9
  $region8: #{hscd_forward.17} parent=0 // pred_region
    _
  $region9: #{hscd_forward.17} parent=0 // pred_fallthru
    _
  %p11 = scmp.eq.s32.totalorder 0, 0
  // Predicated region
  $region10: #{hscd_forward.17} parent=0 // pred_check
    %p12 = pneg %p11
  $region11: #{hscd_forward.17} parent=0 // pred_check_branch
    %14 = sbr.rel (%p12) target = $region13
  $region12: #{hscd_forward.17} parent=0 // pred_region
    %vm15 = vcmask 64512
    %16 = vst.msk [vmem:[#allocation2] sm:$0xff] %vm15, 0.0
    %17 = vst.msk [vmem:[#allocation2 + $0x8] sm:$0xff] %vm15, 0.0
    %18 = vst.msk [vmem:[#allocation2 + $0x10] sm:$0xff] %vm15, 0.0
    %19 = vst.msk [vmem:[#allocation2 + $0x18] sm:$0xff] %vm15, 0.0
    %20 = vst.msk [vmem:[#allocation2 + $0x20] sm:$0xff] %vm15, 0.0
    %21 = vst.msk [vmem:[#allocation2 + $0x28] sm:$0xff] %vm15, 0.0
    %22 = vst.msk [vmem:[#allocation2 + $0x30] sm:$0xff] %vm15, 0.0
    %23 = vst.msk [vmem:[#allocation2 + $0x38] sm:$0xff] %vm15, 0.0
    %24 = vst.msk [vmem:[#allocation2 + $0x40] sm:$0xff] %vm15, 0.0
    %25 = vst.msk [vmem:[#allocation2 + $0x48] sm:$0xff] %vm15, 0.0
    %26 = vst.msk [vmem:[#allocation2 + $0x50] sm:$0xff] %vm15, 0.0
    %27 = vst.msk [vmem:[#allocation2 + $0x58] sm:$0xff] %vm15, 0.0
    %28 = vst.msk [vmem:[#allocation2 + $0x60] sm:$0xff] %vm15, 0.0
    %29 = vst.msk [vmem:[#allocation2 + $0x68] sm:$0xff] %vm15, 0.0
    %30 = vst.msk [vmem:[#allocation2 + $0x70] sm:$0xff] %vm15, 0.0
    %31 = vst.msk [vmem:[#allocation2 + $0x78] sm:$0xff] %vm15, 0.0
  $region13: #{hscd_forward.17} parent=0 // pred_fallthru
    _
  %s32 = smul.u32 0, 128
  %s33 = scalar_lea.vmem %s1, %s32
  %v34 = vld [vmem:[%s33] sm:$0xff]
  %v35 = vld [vmem:[%s33 + $0x8] sm:$0xff]
  %v36 = vld [vmem:[%s33 + $0x10] sm:$0xff]
  %v37 = vld [vmem:[%s33 + $0x18] sm:$0xff]
  %v38 = vld [vmem:[%s33 + $0x20] sm:$0xff]
  %v39 = vld [vmem:[%s33 + $0x28] sm:$0xff]
  %v40 = vld [vmem:[%s33 + $0x30] sm:$0xff]
  %v41 = vld [vmem:[%s33 + $0x38] sm:$0xff]
  %v42 = vld [vmem:[%s33 + $0x40] sm:$0xff]
  %v43 = vld [vmem:[%s33 + $0x48] sm:$0xff]
  %v44 = vld [vmem:[%s33 + $0x50] sm:$0xff]
  %v45 = vld [vmem:[%s33 + $0x58] sm:$0xff]
  %v46 = vld [vmem:[%s33 + $0x60] sm:$0xff]
  %v47 = vld [vmem:[%s33 + $0x68] sm:$0xff]
  %v48 = vld [vmem:[%s33 + $0x70] sm:$0xff]
  %v49 = vld [vmem:[%s33 + $0x78] sm:$0xff]
  %v50 = vld [vmem:[#allocation2] sm:$0xff]
  %v51 = vld [vmem:[#allocation2 + $0x8] sm:$0xff]
  %v52 = vld [vmem:[#allocation2 + $0x10] sm:$0xff]
  %v53 = vld [vmem:[#allocation2 + $0x18] sm:$0xff]
  %v54 = vld [vmem:[#allocation2 + $0x20] sm:$0xff]
  %v55 = vld [vmem:[#allocation2 + $0x28] sm:$0xff]
  %v56 = vld [vmem:[#allocation2 + $0x30] sm:$0xff]
  %v57 = vld [vmem:[#allocation2 + $0x38] sm:$0xff]
  %v58 = vld [vmem:[#allocation2 + $0x40] sm:$0xff]
  %v59 = vld [vmem:[#allocation2 + $0x48] sm:$0xff]
  %v60 = vld [vmem:[#allocation2 + $0x50] sm:$0xff]
  %v61 = vld [vmem:[#allocation2 + $0x58] sm:$0xff]
  %v62 = vld [vmem:[#allocation2 + $0x60] sm:$0xff]
  %v63 = vld [vmem:[#allocation2 + $0x68] sm:$0xff]
  %v64 = vld [vmem:[#allocation2 + $0x70] sm:$0xff]
  %v65 = vld [vmem:[#allocation2 + $0x78] sm:$0xff]
  %v66 = vld [vmem:[%s0] sm:$0xff]
  %v67 = vld [vmem:[%s0 + $0x8] sm:$0xff]
  %v68 = vld [vmem:[%s0 + $0x10] sm:$0xff]
  %v69 = vld [vmem:[%s0 + $0x18] sm:$0xff]
  %v70 = vld [vmem:[%s0 + $0x20] sm:$0xff]
  %v71 = vld [vmem:[%s0 + $0x28] sm:$0xff]
  %v72 = vld [vmem:[%s0 + $0x30] sm:$0xff]
  %v73 = vld [vmem:[%s0 + $0x38] sm:$0xff]
  %v74 = vld [vmem:[%s0 + $0x40] sm:$0xff]
  %v75 = vld [vmem:[%s0 + $0x48] sm:$0xff]
  %v76 = vld [vmem:[%s0 + $0x50] sm:$0xff]
  %v77 = vld [vmem:[%s0 + $0x58] sm:$0xff]
  %v78 = vld [vmem:[%s0 + $0x60] sm:$0xff]
  %v79 = vld [vmem:[%s0 + $0x68] sm:$0xff]
  %v80 = vld [vmem:[%s0 + $0x70] sm:$0xff]
  %v81 = vld [vmem:[%s0 + $0x78] sm:$0xff]
  %82 = vmatprep.subr.mxu0 0.0
  %83 = vmatpush1.msra.mxu0 %v34
  %84 = vmatprep.subr.mxu0 0.0
  %85 = vmatpush1.msra.mxu0 %v35
  %86 = vmatprep.subr.mxu0 0.0
  %87 = vmatpush1.msra.mxu0 %v36
  %88 = vmatprep.subr.mxu0 0.0
  %89 = vmatpush1.msra.mxu0 %v37
  %90 = vmatprep.subr.mxu0 0.0
  %91 = vmatpush1.msra.mxu0 %v38
  %92 = vmatprep.subr.mxu0 0.0
  %93 = vmatpush1.msra.mxu0 %v39
  %94 = vmatprep.subr.mxu0 0.0
  %95 = vmatpush1.msra.mxu0 %v40
  %96 = vmatprep.subr.mxu0 0.0
  %97 = vmatpush1.msra.mxu0 %v41
  %98 = vmatprep.subr.mxu0 0.0
  %99 = vmatpush1.msra.mxu0 %v42
  %100 = vmatprep.subr.mxu0 0.0
  %101 = vmatpush1.msra.mxu0 %v43
  %102 = vmatprep.subr.mxu0 0.0
  %103 = vmatpush1.msra.mxu0 %v44
  %104 = vmatprep.subr.mxu0 0.0
  %105 = vmatpush1.msra.mxu0 %v45
  %106 = vmatprep.subr.mxu0 0.0
  %107 = vmatpush1.msra.mxu0 %v46
  %108 = vmatprep.subr.mxu0 0.0
  %109 = vmatpush1.msra.mxu0 %v47
  %110 = vmatprep.subr.mxu0 0.0
  %111 = vmatpush1.msra.mxu0 %v48
  %112 = vmatprep.subr.mxu0 0.0
  %113 = vmatpush1.msra.mxu0 %v49
  %114 = vmatprep.subr.mxu0 0.0
  %115 = vmatpush1.msra.mxu0 0.0
  %116 = vmatprep.subr.mxu0 0.0
  %117 = vmatpush1.msra.mxu0 0.0
  %118 = vmatprep.subr.mxu0 0.0
  %119 = vmatpush1.msra.mxu0 0.0
  %120 = vmatprep.subr.mxu0 0.0
  %121 = vmatpush1.msra.mxu0 0.0
  %122 = vmatprep.subr.mxu0 0.0
  %123 = vmatpush1.msra.mxu0 0.0
  %124 = vmatprep.subr.mxu0 0.0
  %125 = vmatpush1.msra.mxu0 0.0
  %126 = vmatprep.subr.mxu0 0.0
  %127 = vmatpush1.msra.mxu0 0.0
  %128 = vmatprep.subr.mxu0 0.0
  %129 = vmatpush1.msra.mxu0 0.0
  %130 = vmatprep.subr.mxu0 0.0
  %131 = vmatpush1.msra.mxu0 0.0
  %132 = vmatprep.subr.mxu0 0.0
  %133 = vmatpush1.msra.mxu0 0.0
  %134 = vmatprep.subr.mxu0 0.0
  %135 = vmatpush1.msra.mxu0 0.0
  %136 = vmatprep.subr.mxu0 0.0
  %137 = vmatpush1.msra.mxu0 0.0
  %138 = vmatprep.subr.mxu0 0.0
  %139 = vmatpush1.msra.mxu0 0.0
  %140 = vmatprep.subr.mxu0 0.0
  %141 = vmatpush1.msra.mxu0 0.0
  %142 = vmatprep.subr.mxu0 0.0
  %143 = vmatpush1.msra.mxu0 0.0
  %144 = vmatprep.subr.mxu0 0.0
  %145 = vmatpush1.msra.mxu0 0.0
  %146 = vmatprep.mubr.f32.mxu0 0.0
  %147 = vmatmul.mubr.f32.gmra.mrb[0].mxu0 %v66
  %v148 = vpop.f32.mrb[0].mxu0
  %v149 = vadd.f32 0.0, %v148
  %v150 = vpop.f32.mrb[0].mxu0
  %151 = vmatprep.mubr.f32.mxu0 0.0
  %152 = vmatmul.mubr.f32.gmra.mrb[0].mxu0 %v67
  %v153 = vpop.f32.mrb[0].mxu0
  %v154 = vadd.f32 0.0, %v153
  %v155 = vpop.f32.mrb[0].mxu0
  %156 = vmatprep.mubr.f32.mxu0 0.0
  %157 = vmatmul.mubr.f32.gmra.mrb[0].mxu0 %v68
  %v158 = vpop.f32.mrb[0].mxu0
  %v159 = vadd.f32 0.0, %v158
  %v160 = vpop.f32.mrb[0].mxu0
  %161 = vmatprep.mubr.f32.mxu0 0.0
  %162 = vmatmul.mubr.f32.gmra.mrb[0].mxu0 %v69
  %v163 = vpop.f32.mrb[0].mxu0
  %v164 = vadd.f32 0.0, %v163
  %v165 = vpop.f32.mrb[0].mxu0
  %166 = vmatprep.mubr.f32.mxu0 0.0
  %167 = vmatmul.mubr.f32.gmra.mrb[0].mxu0 %v70
  %v168 = vpop.f32.mrb[0].mxu0
  %v169 = vadd.f32 0.0, %v168
  %v170 = vpop.f32.mrb[0].mxu0
  %171 = vmatprep.mubr.f32.mxu0 0.0
  %172 = vmatmul.mubr.f32.gmra.mrb[0].mxu0 %v71
  %v173 = vpop.f32.mrb[0].mxu0
  %v174 = vadd.f32 0.0, %v173
  %v175 = vpop.f32.mrb[0].mxu0
  %176 = vmatprep.mubr.f32.mxu0 0.0
  %177 = vmatmul.mubr.f32.gmra.mrb[0].mxu0 %v72
  %v178 = vpop.f32.mrb[0].mxu0
  %v179 = vadd.f32 0.0, %v178
  %v180 = vpop.f32.mrb[0].mxu0
  %181 = vmatprep.mubr.f32.mxu0 0.0
  %182 = vmatmul.mubr.f32.gmra.mrb[0].mxu0 %v73
  %v183 = vpop.f32.mrb[0].mxu0
  %v184 = vadd.f32 0.0, %v183
  %v185 = vpop.f32.mrb[0].mxu0
  %186 = vmatprep.mubr.f32.mxu0 0.0
  %187 = vmatmul.mubr.f32.gmra.mrb[0].mxu0 %v74
  %v188 = vpop.f32.mrb[0].mxu0
  %v189 = vadd.f32 0.0, %v188
  %v190 = vpop.f32.mrb[0].mxu0
  %191 = vmatprep.mubr.f32.mxu0 0.0
  %192 = vmatmul.mubr.f32.gmra.mrb[0].mxu0 %v75
  %v193 = vpop.f32.mrb[0].mxu0
  %v194 = vadd.f32 0.0, %v193
  %v195 = vpop.f32.mrb[0].mxu0
  %196 = vmatprep.mubr.f32.mxu0 0.0
  %197 = vmatmul.mubr.f32.gmra.mrb[0].mxu0 %v76
  %v198 = vpop.f32.mrb[0].mxu0
  %v199 = vadd.f32 0.0, %v198
  %v200 = vpop.f32.mrb[0].mxu0
  %201 = vmatprep.mubr.f32.mxu0 0.0
  %202 = vmatmul.mubr.f32.gmra.mrb[0].mxu0 %v77
  %v203 = vpop.f32.mrb[0].mxu0
  %v204 = vadd.f32 0.0, %v203
  %v205 = vpop.f32.mrb[0].mxu0
  %206 = vmatprep.mubr.f32.mxu0 0.0
  %207 = vmatmul.mubr.f32.gmra.mrb[0].mxu0 %v78
  %v208 = vpop.f32.mrb[0].mxu0
  %v209 = vadd.f32 0.0, %v208
  %v210 = vpop.f32.mrb[0].mxu0
  %211 = vmatprep.mubr.f32.mxu0 0.0
  %212 = vmatmul.mubr.f32.gmra.mrb[0].mxu0 %v79
  %v213 = vpop.f32.mrb[0].mxu0
  %v214 = vadd.f32 0.0, %v213
  %v215 = vpop.f32.mrb[0].mxu0
  %216 = vmatprep.mubr.f32.mxu0 0.0
  %217 = vmatmul.mubr.f32.gmra.mrb[0].mxu0 %v80
  %v218 = vpop.f32.mrb[0].mxu0
  %v219 = vadd.f32 0.0, %v218
  %v220 = vpop.f32.mrb[0].mxu0
  %221 = vmatprep.mubr.f32.mxu0 0.0
  %222 = vmatmul.mubr.f32.gmra.mrb[0].mxu0 %v81
  %v223 = vpop.f32.mrb[0].mxu0
  %v224 = vadd.f32 0.0, %v223
  %v225 = vpop.f32.mrb[0].mxu0
  %226 = vdwg.mxu0
  %v227 = vadd.f32 %v50, %v149
  %v228 = vadd.f32 %v51, %v154
  %v229 = vadd.f32 %v52, %v159
  %v230 = vadd.f32 %v53, %v164
  %v231 = vadd.f32 %v54, %v169
  %v232 = vadd.f32 %v55, %v174
  %v233 = vadd.f32 %v56, %v179
  %v234 = vadd.f32 %v57, %v184
  %v235 = vadd.f32 %v58, %v189
  %v236 = vadd.f32 %v59, %v194
  %v237 = vadd.f32 %v60, %v199
  %v238 = vadd.f32 %v61, %v204
  %v239 = vadd.f32 %v62, %v209
  %v240 = vadd.f32 %v63, %v214
  %v241 = vadd.f32 %v64, %v219
  %v242 = vadd.f32 %v65, %v224
  %vm243 = vcmask 64512
  %244 = vst.msk [vmem:[#allocation2] sm:$0xff] %vm243, %v227
  %245 = vst.msk [vmem:[#allocation2 + $0x8] sm:$0xff] %vm243, %v228
  %246 = vst.msk [vmem:[#allocation2 + $0x10] sm:$0xff] %vm243, %v229
  %247 = vst.msk [vmem:[#allocation2 + $0x18] sm:$0xff] %vm243, %v230
  %248 = vst.msk [vmem:[#allocation2 + $0x20] sm:$0xff] %vm243, %v231
  %249 = vst.msk [vmem:[#allocation2 + $0x28] sm:$0xff] %vm243, %v232
  %250 = vst.msk [vmem:[#allocation2 + $0x30] sm:$0xff] %vm243, %v233
  %251 = vst.msk [vmem:[#allocation2 + $0x38] sm:$0xff] %vm243, %v234
  %252 = vst.msk [vmem:[#allocation2 + $0x40] sm:$0xff] %vm243, %v235
  %253 = vst.msk [vmem:[#allocation2 + $0x48] sm:$0xff] %vm243, %v236
  %254 = vst.msk [vmem:[#allocation2 + $0x50] sm:$0xff] %vm243, %v237
  %255 = vst.msk [vmem:[#allocation2 + $0x58] sm:$0xff] %vm243, %v238
  %256 = vst.msk [vmem:[#allocation2 + $0x60] sm:$0xff] %vm243, %v239
  %257 = vst.msk [vmem:[#allocation2 + $0x68] sm:$0xff] %vm243, %v240
  %258 = vst.msk [vmem:[#allocation2 + $0x70] sm:$0xff] %vm243, %v241
  %259 = vst.msk [vmem:[#allocation2 + $0x78] sm:$0xff] %vm243, %v242
  // Predicated region
  $region14: #{hscd_forward.17} parent=0 // pred_check
    %p260 = pneg %p11
  $region15: #{hscd_forward.17} parent=0 // pred_check_branch
    %262 = sbr.rel (%p260) target = $region17
  $region16: #{hscd_forward.17} parent=0 // pred_region
    %v263 = vld [vmem:[#allocation2] sm:$0xff]
    %v264 = vld [vmem:[#allocation2 + $0x8] sm:$0xff]
    %v265 = vld [vmem:[#allocation2 + $0x10] sm:$0xff]
    %v266 = vld [vmem:[#allocation2 + $0x18] sm:$0xff]
    %v267 = vld [vmem:[#allocation2 + $0x20] sm:$0xff]
    %v268 = vld [vmem:[#allocation2 + $0x28] sm:$0xff]
    %v269 = vld [vmem:[#allocation2 + $0x30] sm:$0xff]
    %v270 = vld [vmem:[#allocation2 + $0x38] sm:$0xff]
    %v271 = vld [vmem:[#allocation2 + $0x40] sm:$0xff]
    %v272 = vld [vmem:[#allocation2 + $0x48] sm:$0xff]
    %v273 = vld [vmem:[#allocation2 + $0x50] sm:$0xff]
    %v274 = vld [vmem:[#allocation2 + $0x58] sm:$0xff]
    %v275 = vld [vmem:[#allocation2 + $0x60] sm:$0xff]
    %v276 = vld [vmem:[#allocation2 + $0x68] sm:$0xff]
    %v277 = vld [vmem:[#allocation2 + $0x70] sm:$0xff]
    %v278 = vld [vmem:[#allocation2 + $0x78] sm:$0xff]
    %279 = vst.msk [vmem:[%s2] sm:$0xff] %vm243, %v263
    %280 = vst.msk [vmem:[%s2 + $0x8] sm:$0xff] %vm243, %v264
    %281 = vst.msk [vmem:[%s2 + $0x10] sm:$0xff] %vm243, %v265
    %282 = vst.msk [vmem:[%s2 + $0x18] sm:$0xff] %vm243, %v266
    %283 = vst.msk [vmem:[%s2 + $0x20] sm:$0xff] %vm243, %v267
    %284 = vst.msk [vmem:[%s2 + $0x28] sm:$0xff] %vm243, %v268
    %285 = vst.msk [vmem:[%s2 + $0x30] sm:$0xff] %vm243, %v269
    %286 = vst.msk [vmem:[%s2 + $0x38] sm:$0xff] %vm243, %v270
    %287 = vst.msk [vmem:[%s2 + $0x40] sm:$0xff] %vm243, %v271
    %288 = vst.msk [vmem:[%s2 + $0x48] sm:$0xff] %vm243, %v272
    %289 = vst.msk [vmem:[%s2 + $0x50] sm:$0xff] %vm243, %v273
    %290 = vst.msk [vmem:[%s2 + $0x58] sm:$0xff] %vm243, %v274
    %291 = vst.msk [vmem:[%s2 + $0x60] sm:$0xff] %vm243, %v275
    %292 = vst.msk [vmem:[%s2 + $0x68] sm:$0xff] %vm243, %v276
    %293 = vst.msk [vmem:[%s2 + $0x70] sm:$0xff] %vm243, %v277
    %294 = vst.msk [vmem:[%s2 + $0x78] sm:$0xff] %vm243, %v278
  $region17: #{hscd_forward.17} parent=0 // pred_fallthru
    _
  // Predicated region
  $region18: #{hscd_forward.17} parent=0 // pred_check
    _
  $region19: #{hscd_forward.17} parent=0 // pred_check_branch
    %296 = sbr.rel (0) target = $region21
  $region20: #{hscd_forward.17} parent=0 // pred_region
    _
  $region21: #{hscd_forward.17} parent=0 // pred_fallthru
    _
  // Predicated region
  $region22: #{hscd_forward.17} parent=0 // pred_check
    _
  $region23: #{hscd_forward.17} parent=0 // pred_check_branch
    %298 = sbr.rel (0) target = $region25
  $region24: #{hscd_forward.17} parent=0 // pred_region
    _
  $region25: #{hscd_forward.17} parent=0 // pred_fallthru
    _

// kernel: hscd_forward.21
$region0: #{hscd_forward.21}
  #allocation0 [shape = 'u32[]', space=smem, size = 0x4, offset = 0x4, fixed_abs, tag = 'smem constant byte address 0x4 - core index']
  #allocation1 [shape = 'u32[144,128]{1,0:T(1,128)}', space=vmem, size = 0x12000, scoped, tag = 'internal scratch']
  #allocation2 [shape = 'f32[1,1]{1,0:T(1,128)S(1)}', space=vmem, size = 0x200, scoped, tag = 'scoped memory for hscd_forward.21']
  %s0 = inlined_call_operand.vmem [shape: f32[256,8], index: 0, kind: input, shape index: {}]
  %s1 = inlined_call_operand.vmem [shape: f32[256,8], index: 1, kind: input, shape index: {}]
  %s2 = inlined_call_operand.vmem [shape: f32[256,16], index: 2, kind: input, shape index: {}]
  %s3 = inlined_call_operand.vmem [shape: f32[16,128], index: 3, kind: input, shape index: {}]
  %s4 = inlined_call_operand.vmem [shape: f32[8,128], index: 4, kind: input, shape index: {}]
  %s5 = inlined_call_operand.vmem [shape: f32[1,128], index: 5, kind: input, shape index: {}]
  %s6 = inlined_call_operand.vmem [shape: f32[8,256], index: 6, kind: input, shape index: {}]
  %s7 = inlined_call_operand.vmem [shape: f32[1,256], index: 7, kind: input, shape index: {}]
  %s8 = inlined_call_operand.vmem [shape: f32[16,512], index: 8, kind: input, shape index: {}]
  %s9 = inlined_call_operand.vmem [shape: f32[1,512], index: 9, kind: input, shape index: {}]
  %s10 = inlined_call_operand.vmem [shape: f32[512,256], index: 10, kind: input, shape index: {}]
  %s11 = inlined_call_operand.vmem [shape: f32[1,256], index: 11, kind: input, shape index: {}]
  %s12 = inlined_call_operand.vmem [shape: f32[256,128], index: 12, kind: input, shape index: {}]
  %s13 = inlined_call_operand.vmem [shape: f32[1,128], index: 13, kind: input, shape index: {}]
  %s14 = inlined_call_operand.vmem [shape: f32[1,128], index: 14, kind: input, shape index: {}]
  %s15 = inlined_call_operand.<no memory space> [shape: f32[1,1], index: 15, kind: input, shape index: {}]
  %s16 = inlined_call_operand.vmem [shape: f32[1,256], index: 16, kind: output, shape index: {}]
  %s17 = sld [smem:[#allocation0]]
  $region74: #{hscd_forward.21} parent=0
    _
  %s19 = ssub.s32 1, %s17
  %s20 = scalar_select 0, %s19, %s17
  %v21 = vstv %s15
  %22 = vst [vmem:[#allocation2] sm:$0x1] %v21
  // Predicated region
  $region2: #{hscd_forward.21} parent=0 // pred_check
    _
  $region3: #{hscd_forward.21} parent=0 // pred_check_branch
    %24 = sbr.rel (0) target = $region5
  $region4: #{hscd_forward.21} parent=0 // pred_region
    _
  $region5: #{hscd_forward.21} parent=0 // pred_fallthru
    _
  // Predicated region
  $region6: #{hscd_forward.21} parent=0 // pred_check
    _
  $region7: #{hscd_forward.21} parent=0 // pred_check_branch
    %26 = sbr.rel (0) target = $region9
  $region8: #{hscd_forward.21} parent=0 // pred_region
    _
  $region9: #{hscd_forward.21} parent=0 // pred_fallthru
    _
  // Predicated region
  $region10: #{hscd_forward.21} parent=0 // pred_check
    _
  $region11: #{hscd_forward.21} parent=0 // pred_check_branch
    %28 = sbr.rel (0) target = $region13
  $region12: #{hscd_forward.21} parent=0 // pred_region
    _
  $region13: #{hscd_forward.21} parent=0 // pred_fallthru
    _
  // Predicated region
  $region14: #{hscd_forward.21} parent=0 // pred_check
    _
  $region15: #{hscd_forward.21} parent=0 // pred_check_branch
    %30 = sbr.rel (0) target = $region17
  $region16: #{hscd_forward.21} parent=0 // pred_region
    _
  $region17: #{hscd_forward.21} parent=0 // pred_fallthru
    _
  // Predicated region
  $region18: #{hscd_forward.21} parent=0 // pred_check
    _
  $region19: #{hscd_forward.21} parent=0 // pred_check_branch
    %32 = sbr.rel (0) target = $region21
  $region20: #{hscd_forward.21} parent=0 // pred_region
    _
  $region21: #{hscd_forward.21} parent=0 // pred_fallthru
    _
  // Predicated region
  $region22: #{hscd_forward.21} parent=0 // pred_check
    _
  $region23: #{hscd_forward.21} parent=0 // pred_check_branch
    %34 = sbr.rel (0) target = $region25
  $region24: #{hscd_forward.21} parent=0 // pred_region
    _
  $region25: #{hscd_forward.21} parent=0 // pred_fallthru
    _
  // Predicated region
  $region26: #{hscd_forward.21} parent=0 // pred_check
    _
  $region27: #{hscd_forward.21} parent=0 // pred_check_branch
    %36 = sbr.rel (0) target = $region29
  $region28: #{hscd_forward.21} parent=0 // pred_region
    _
  $region29: #{hscd_forward.21} parent=0 // pred_fallthru
    _
  // Predicated region
  $region30: #{hscd_forward.21} parent=0 // pred_check
    _
  $region31: #{hscd_forward.21} parent=0 // pred_check_branch
    %38 = sbr.rel (0) target = $region33
  $region32: #{hscd_forward.21} parent=0 // pred_region
    _
  $region33: #{hscd_forward.21} parent=0 // pred_fallthru
    _
  // Predicated region
  $region34: #{hscd_forward.21} parent=0 // pred_check
    _
  $region35: #{hscd_forward.21} parent=0 // pred_check_branch
    %40 = sbr.rel (0) target = $region37
  $region36: #{hscd_forward.21} parent=0 // pred_region
    _
  $region37: #{hscd_forward.21} parent=0 // pred_fallthru
    _
  // Predicated region
  $region38: #{hscd_forward.21} parent=0 // pred_check
    _
  $region39: #{hscd_forward.21} parent=0 // pred_check_branch
    %42 = sbr.rel (0) target = $region41
  $region40: #{hscd_forward.21} parent=0 // pred_region
    _
  $region41: #{hscd_forward.21} parent=0 // pred_fallthru
    _
  // Predicated region
  $region42: #{hscd_forward.21} parent=0 // pred_check
    _
  $region43: #{hscd_forward.21} parent=0 // pred_check_branch
    %44 = sbr.rel (0) target = $region45
  $region44: #{hscd_forward.21} parent=0 // pred_region
    _
  $region45: #{hscd_forward.21} parent=0 // pred_fallthru
    _
  // Predicated region
  $region46: #{hscd_forward.21} parent=0 // pred_check
    _
  $region47: #{hscd_forward.21} parent=0 // pred_check_branch
    %46 = sbr.rel (0) target = $region49
  $region48: #{hscd_forward.21} parent=0 // pred_region
    _
  $region49: #{hscd_forward.21} parent=0 // pred_fallthru
    _
  // Predicated region
  $region50: #{hscd_forward.21} parent=0 // pred_check
    _
  $region51: #{hscd_forward.21} parent=0 // pred_check_branch
    %48 = sbr.rel (0) target = $region53
  $region52: #{hscd_forward.21} parent=0 // pred_region
    _
  $region53: #{hscd_forward.21} parent=0 // pred_fallthru
    _
  // Predicated region
  $region54: #{hscd_forward.21} parent=0 // pred_check
    _
  $region55: #{hscd_forward.21} parent=0 // pred_check_branch
    %50 = sbr.rel (0) target = $region57
  $region56: #{hscd_forward.21} parent=0 // pred_region
    _
  $region57: #{hscd_forward.21} parent=0 // pred_fallthru
    _
  // Predicated region
  $region58: #{hscd_forward.21} parent=0 // pred_check
    _
  $region59: #{hscd_forward.21} parent=0 // pred_check_branch
    %52 = sbr.rel (0) target = $region61
  $region60: #{hscd_forward.21} parent=0 // pred_region
    _
  $region61: #{hscd_forward.21} parent=0 // pred_fallthru
    _
  // Predicated region
  $region62: #{hscd_forward.21} parent=0 // pred_check
    _
  $region63: #{hscd_forward.21} parent=0 // pred_check_branch
    %54 = sbr.rel (0) target = $region65
  $region64: #{hscd_forward.21} parent=0 // pred_region
    _
  $region65: #{hscd_forward.21} parent=0 // pred_fallthru
    _
  %v55 = vld [vmem:[%s0] sm:$0xff]
  %v56 = vld [vmem:[%s0 + $0x8] sm:$0xff]
  %v57 = vld [vmem:[%s0 + $0x10] sm:$0xff]
  %v58 = vld [vmem:[%s0 + $0x18] sm:$0xff]
  %v59 = vld [vmem:[%s0 + $0x20] sm:$0xff]
  %v60 = vld [vmem:[%s0 + $0x28] sm:$0xff]
  %v61 = vld [vmem:[%s0 + $0x30] sm:$0xff]
  %v62 = vld [vmem:[%s0 + $0x38] sm:$0xff]
  %v63 = vld [vmem:[%s0 + $0x40] sm:$0xff]
  %v64 = vld [vmem:[%s0 + $0x48] sm:$0xff]
  %v65 = vld [vmem:[%s0 + $0x50] sm:$0xff]
  %v66 = vld [vmem:[%s0 + $0x58] sm:$0xff]
  %v67 = vld [vmem:[%s0 + $0x60] sm:$0xff]
  %v68 = vld [vmem:[%s0 + $0x68] sm:$0xff]
  %v69 = vld [vmem:[%s0 + $0x70] sm:$0xff]
  %v70 = vld [vmem:[%s0 + $0x78] sm:$0xff]
  %v71 = vld [vmem:[%s0 + $0x80] sm:$0xff]
  %v72 = vld [vmem:[%s0 + $0x88] sm:$0xff]
  %v73 = vld [vmem:[%s0 + $0x90] sm:$0xff]
  %v74 = vld [vmem:[%s0 + $0x98] sm:$0xff]
  %v75 = vld [vmem:[%s0 + $0xa0] sm:$0xff]
  %v76 = vld [vmem:[%s0 + $0xa8] sm:$0xff]
  %v77 = vld [vmem:[%s0 + $0xb0] sm:$0xff]
  %v78 = vld [vmem:[%s0 + $0xb8] sm:$0xff]
  %v79 = vld [vmem:[%s0 + $0xc0] sm:$0xff]
  %v80 = vld [vmem:[%s0 + $0xc8] sm:$0xff]
  %v81 = vld [vmem:[%s0 + $0xd0] sm:$0xff]
  %v82 = vld [vmem:[%s0 + $0xd8] sm:$0xff]
  %v83 = vld [vmem:[%s0 + $0xe0] sm:$0xff]
  %v84 = vld [vmem:[%s0 + $0xe8] sm:$0xff]
  %v85 = vld [vmem:[%s0 + $0xf0] sm:$0xff]
  %v86 = vld [vmem:[%s0 + $0xf8] sm:$0xff]
  %v87 = vld [vmem:[%s4] sm:$0xff]
  %v88 = vld [vmem:[%s5] sm:$0x1]
  %v90 = vlaneseq
  %v91 = vshrl.u32 %v90, 7
  %v92 = vsub.s32 0, %v91
  %v93 = vrot.slane %v88, %v92
  %vm95 = vcmask 64512
  %v97 = vsel %vm95, %v55, 0
  %v100 = vsel %vm95, %v56, 0
  %v103 = vsel %vm95, %v57, 0
  %v106 = vsel %vm95, %v58, 0
  %v109 = vsel %vm95, %v59, 0
  %v112 = vsel %vm95, %v60, 0
  %v115 = vsel %vm95, %v61, 0
  %v118 = vsel %vm95, %v62, 0
  %v121 = vsel %vm95, %v63, 0
  %v124 = vsel %vm95, %v64, 0
  %v127 = vsel %vm95, %v65, 0
  %v130 = vsel %vm95, %v66, 0
  %v133 = vsel %vm95, %v67, 0
  %v136 = vsel %vm95, %v68, 0
  %v139 = vsel %vm95, %v69, 0
  %v142 = vsel %vm95, %v70, 0
  %v145 = vsel %vm95, %v71, 0
  %v148 = vsel %vm95, %v72, 0
  %v151 = vsel %vm95, %v73, 0
  %v154 = vsel %vm95, %v74, 0
  %v157 = vsel %vm95, %v75, 0
  %v160 = vsel %vm95, %v76, 0
  %v163 = vsel %vm95, %v77, 0
  %v166 = vsel %vm95, %v78, 0
  %v169 = vsel %vm95, %v79, 0
  %v172 = vsel %vm95, %v80, 0
  %v175 = vsel %vm95, %v81, 0
  %v178 = vsel %vm95, %v82, 0
  %v181 = vsel %vm95, %v83, 0
  %v184 = vsel %vm95, %v84, 0
  %v187 = vsel %vm95, %v85, 0
  %v190 = vsel %vm95, %v86, 0
  %192 = vmatprep.subr.mxu0 0.0
  %193 = vmatpush1.msra.mxu0 %v87
  %194 = vmatprep.subr.mxu0 0.0
  %195 = vmatpush1.msra.mxu0 0.0
  %196 = vmatprep.subr.mxu0 0.0
  %197 = vmatpush1.msra.mxu0 0.0
  %198 = vmatprep.subr.mxu0 0.0
  %199 = vmatpush1.msra.mxu0 0.0
  %200 = vmatprep.subr.mxu0 0.0
  %201 = vmatpush1.msra.mxu0 0.0
  %202 = vmatprep.subr.mxu0 0.0
  %203 = vmatpush1.msra.mxu0 0.0
  %204 = vmatprep.subr.mxu0 0.0
  %205 = vmatpush1.msra.mxu0 0.0
  %206 = vmatprep.subr.mxu0 0.0
  %207 = vmatpush1.msra.mxu0 0.0
  %208 = vmatprep.subr.mxu0 0.0
  %209 = vmatpush1.msra.mxu0 0.0
  %210 = vmatprep.subr.mxu0 0.0
  %211 = vmatpush1.msra.mxu0 0.0
  %212 = vmatprep.subr.mxu0 0.0
  %213 = vmatpush1.msra.mxu0 0.0
  %214 = vmatprep.subr.mxu0 0.0
  %215 = vmatpush1.msra.mxu0 0.0
  %216 = vmatprep.subr.mxu0 0.0
  %217 = vmatpush1.msra.mxu0 0.0
  %218 = vmatprep.subr.mxu0 0.0
  %219 = vmatpush1.msra.mxu0 0.0
  %220 = vmatprep.subr.mxu0 0.0
  %221 = vmatpush1.msra.mxu0 0.0
  %222 = vmatprep.subr.mxu0 0.0
  %223 = vmatpush1.msra.mxu0 0.0
  %224 = vmatprep.subr.mxu0 0.0
  %225 = vmatpush1.msra.mxu0 0.0
  %226 = vmatprep.subr.mxu0 0.0
  %227 = vmatpush1.msra.mxu0 0.0
  %228 = vmatprep.subr.mxu0 0.0
  %229 = vmatpush1.msra.mxu0 0.0
  %230 = vmatprep.subr.mxu0 0.0
  %231 = vmatpush1.msra.mxu0 0.0
  %232 = vmatprep.subr.mxu0 0.0
  %233 = vmatpush1.msra.mxu0 0.0
  %234 = vmatprep.subr.mxu0 0.0
  %235 = vmatpush1.msra.mxu0 0.0
  %236 = vmatprep.subr.mxu0 0.0
  %237 = vmatpush1.msra.mxu0 0.0
  %238 = vmatprep.subr.mxu0 0.0
  %239 = vmatpush1.msra.mxu0 0.0
  %240 = vmatprep.subr.mxu0 0.0
  %241 = vmatpush1.msra.mxu0 0.0
  %242 = vmatprep.subr.mxu0 0.0
  %243 = vmatpush1.msra.mxu0 0.0
  %244 = vmatprep.subr.mxu0 0.0
  %245 = vmatpush1.msra.mxu0 0.0
  %246 = vmatprep.subr.mxu0 0.0
  %247 = vmatpush1.msra.mxu0 0.0
  %248 = vmatprep.subr.mxu0 0.0
  %249 = vmatpush1.msra.mxu0 0.0
  %250 = vmatprep.subr.mxu0 0.0
  %251 = vmatpush1.msra.mxu0 0.0
  %252 = vmatprep.subr.mxu0 0.0
  %253 = vmatpush1.msra.mxu0 0.0
  %254 = vmatprep.subr.mxu0 0.0
  %255 = vmatpush1.msra.mxu0 0.0
  %256 = vmatprep.mubr.f32.mxu0 0.0
  %257 = vmatmul.mubr.f32.gmra.mrb[0].mxu0 %v97
  %v258 = vpop.f32.mrb[0].mxu0
  %v259 = vadd.f32 %v93, %v258
  %v260 = vpop.f32.mrb[0].mxu0
  %261 = vmatprep.mubr.f32.mxu0 0.0
  %262 = vmatmul.mubr.f32.gmra.mrb[0].mxu0 %v100
  %v263 = vpop.f32.mrb[0].mxu0
  %v264 = vadd.f32 %v93, %v263
  %v265 = vpop.f32.mrb[0].mxu0
  %266 = vmatprep.mubr.f32.mxu0 0.0
  %267 = vmatmul.mubr.f32.gmra.mrb[0].mxu0 %v103
  %v268 = vpop.f32.mrb[0].mxu0
  %v269 = vadd.f32 %v93, %v268
  %v270 = vpop.f32.mrb[0].mxu0
  %271 = vmatprep.mubr.f32.mxu0 0.0
  %272 = vmatmul.mubr.f32.gmra.mrb[0].mxu0 %v106
  %v273 = vpop.f32.mrb[0].mxu0
  %v274 = vadd.f32 %v93, %v273
  %v275 = vpop.f32.mrb[0].mxu0
  %276 = vmatprep.mubr.f32.mxu0 0.0
  %277 = vmatmul.mubr.f32.gmra.mrb[0].mxu0 %v109
  %v278 = vpop.f32.mrb[0].mxu0
  %v279 = vadd.f32 %v93, %v278
  %v280 = vpop.f32.mrb[0].mxu0
  %281 = vmatprep.mubr.f32.mxu0 0.0
  %282 = vmatmul.mubr.f32.gmra.mrb[0].mxu0 %v112
  %v283 = vpop.f32.mrb[0].mxu0
  %v284 = vadd.f32 %v93, %v283
  %v285 = vpop.f32.mrb[0].mxu0
  %286 = vmatprep.mubr.f32.mxu0 0.0
  %287 = vmatmul.mubr.f32.gmra.mrb[0].mxu0 %v115
  %v288 = vpop.f32.mrb[0].mxu0
  %v289 = vadd.f32 %v93, %v288
  %v290 = vpop.f32.mrb[0].mxu0
  %291 = vmatprep.mubr.f32.mxu0 0.0
  %292 = vmatmul.mubr.f32.gmra.mrb[0].mxu0 %v118
  %v293 = vpop.f32.mrb[0].mxu0
  %v294 = vadd.f32 %v93, %v293
  %v295 = vpop.f32.mrb[0].mxu0
  %296 = vmatprep.mubr.f32.mxu0 0.0
  %297 = vmatmul.mubr.f32.gmra.mrb[0].mxu0 %v121
  %v298 = vpop.f32.mrb[0].mxu0
  %v299 = vadd.f32 %v93, %v298
  %v300 = vpop.f32.mrb[0].mxu0
  %301 = vmatprep.mubr.f32.mxu0 0.0
  %302 = vmatmul.mubr.f32.gmra.mrb[0].mxu0 %v124
  %v303 = vpop.f32.mrb[0].mxu0
  %v304 = vadd.f32 %v93, %v303
  %v305 = vpop.f32.mrb[0].mxu0
  %306 = vmatprep.mubr.f32.mxu0 0.0
  %307 = vmatmul.mubr.f32.gmra.mrb[0].mxu0 %v127
  %v308 = vpop.f32.mrb[0].mxu0
  %v309 = vadd.f32 %v93, %v308
  %v310 = vpop.f32.mrb[0].mxu0
  %311 = vmatprep.mubr.f32.mxu0 0.0
  %312 = vmatmul.mubr.f32.gmra.mrb[0].mxu0 %v130
  %v313 = vpop.f32.mrb[0].mxu0
  %v314 = vadd.f32 %v93, %v313
  %v315 = vpop.f32.mrb[0].mxu0
  %316 = vmatprep.mubr.f32.mxu0 0.0
  %317 = vmatmul.mubr.f32.gmra.mrb[0].mxu0 %v133
  %v318 = vpop.f32.mrb[0].mxu0
  %v319 = vadd.f32 %v93, %v318
  %v320 = vpop.f32.mrb[0].mxu0
  %321 = vmatprep.mubr.f32.mxu0 0.0
  %322 = vmatmul.mubr.f32.gmra.mrb[0].mxu0 %v136
  %v323 = vpop.f32.mrb[0].mxu0
  %v324 = vadd.f32 %v93, %v323
  %v325 = vpop.f32.mrb[0].mxu0
  %326 = vmatprep.mubr.f32.mxu0 0.0
  %327 = vmatmul.mubr.f32.gmra.mrb[0].mxu0 %v139
  %v328 = vpop.f32.mrb[0].mxu0
  %v329 = vadd.f32 %v93, %v328
  %v330 = vpop.f32.mrb[0].mxu0
  %331 = vmatprep.mubr.f32.mxu0 0.0
  %332 = vmatmul.mubr.f32.gmra.mrb[0].mxu0 %v142
  %v333 = vpop.f32.mrb[0].mxu0
  %v334 = vadd.f32 %v93, %v333
  %v335 = vpop.f32.mrb[0].mxu0
  %336 = vmatprep.mubr.f32.mxu0 0.0
  %337 = vmatmul.mubr.f32.gmra.mrb[0].mxu0 %v145
  %v338 = vpop.f32.mrb[0].mxu0
  %v339 = vadd.f32 %v93, %v338
  %v340 = vpop.f32.mrb[0].mxu0
  %341 = vmatprep.mubr.f32.mxu0 0.0
  %342 = vmatmul.mubr.f32.gmra.mrb[0].mxu0 %v148
  %v343 = vpop.f32.mrb[0].mxu0
  %v344 = vadd.f32 %v93, %v343
  %v345 = vpop.f32.mrb[0].mxu0
  %346 = vmatprep.mubr.f32.mxu0 0.0
  %347 = vmatmul.mubr.f32.gmra.mrb[0].mxu0 %v151
  %v348 = vpop.f32.mrb[0].mxu0
  %v349 = vadd.f32 %v93, %v348
  %v350 = vpop.f32.mrb[0].mxu0
  %351 = vmatprep.mubr.f32.mxu0 0.0
  %352 = vmatmul.mubr.f32.gmra.mrb[0].mxu0 %v154
  %v353 = vpop.f32.mrb[0].mxu0
  %v354 = vadd.f32 %v93, %v353
  %v355 = vpop.f32.mrb[0].mxu0
  %356 = vmatprep.mubr.f32.mxu0 0.0
  %357 = vmatmul.mubr.f32.gmra.mrb[0].mxu0 %v157
  %v358 = vpop.f32.mrb[0].mxu0
  %v359 = vadd.f32 %v93, %v358
  %v360 = vpop.f32.mrb[0].mxu0
  %361 = vmatprep.mubr.f32.mxu0 0.0
  %362 = vmatmul.mubr.f32.gmra.mrb[0].mxu0 %v160
  %v363 = vpop.f32.mrb[0].mxu0
  %v364 = vadd.f32 %v93, %v363
  %v365 = vpop.f32.mrb[0].mxu0
  %366 = vmatprep.mubr.f32.mxu0 0.0
  %367 = vmatmul.mubr.f32.gmra.mrb[0].mxu0 %v163
  %v368 = vpop.f32.mrb[0].mxu0
  %v369 = vadd.f32 %v93, %v368
  %v370 = vpop.f32.mrb[0].mxu0
  %371 = vmatprep.mubr.f32.mxu0 0.0
  %372 = vmatmul.mubr.f32.gmra.mrb[0].mxu0 %v166
  %v373 = vpop.f32.mrb[0].mxu0
  %v374 = vadd.f32 %v93, %v373
  %v375 = vpop.f32.mrb[0].mxu0
  %376 = vmatprep.mubr.f32.mxu0 0.0
  %377 = vmatmul.mubr.f32.gmra.mrb[0].mxu0 %v169
  %v378 = vpop.f32.mrb[0].mxu0
  %v379 = vadd.f32 %v93, %v378
  %v380 = vpop.f32.mrb[0].mxu0
  %381 = vmatprep.mubr.f32.mxu0 0.0
  %382 = vmatmul.mubr.f32.gmra.mrb[0].mxu0 %v172
  %v383 = vpop.f32.mrb[0].mxu0
  %v384 = vadd.f32 %v93, %v383
  %v385 = vpop.f32.mrb[0].mxu0
  %386 = vmatprep.mubr.f32.mxu0 0.0
  %387 = vmatmul.mubr.f32.gmra.mrb[0].mxu0 %v175
  %v388 = vpop.f32.mrb[0].mxu0
  %v389 = vadd.f32 %v93, %v388
  %v390 = vpop.f32.mrb[0].mxu0
  %391 = vmatprep.mubr.f32.mxu0 0.0
  %392 = vmatmul.mubr.f32.gmra.mrb[0].mxu0 %v178
  %v393 = vpop.f32.mrb[0].mxu0
  %v394 = vadd.f32 %v93, %v393
  %v395 = vpop.f32.mrb[0].mxu0
  %396 = vmatprep.mubr.f32.mxu0 0.0
  %397 = vmatmul.mubr.f32.gmra.mrb[0].mxu0 %v181
  %v398 = vpop.f32.mrb[0].mxu0
  %v399 = vadd.f32 %v93, %v398
  %v400 = vpop.f32.mrb[0].mxu0
  %401 = vmatprep.mubr.f32.mxu0 0.0
  %402 = vmatmul.mubr.f32.gmra.mrb[0].mxu0 %v184
  %v403 = vpop.f32.mrb[0].mxu0
  %v404 = vadd.f32 %v93, %v403
  %v405 = vpop.f32.mrb[0].mxu0
  %406 = vmatprep.mubr.f32.mxu0 0.0
  %407 = vmatmul.mubr.f32.gmra.mrb[0].mxu0 %v187
  %v408 = vpop.f32.mrb[0].mxu0
  %v409 = vadd.f32 %v93, %v408
  %v410 = vpop.f32.mrb[0].mxu0
  %411 = vmatprep.mubr.f32.mxu0 0.0
  %412 = vmatmul.mubr.f32.gmra.mrb[0].mxu0 %v190
  %v413 = vpop.f32.mrb[0].mxu0
  %v414 = vadd.f32 %v93, %v413
  %v415 = vpop.f32.mrb[0].mxu0
  %416 = vdwg.mxu0
  %vm417 = vcmp.ge.f32.partialorder %v259, 0.0
  %vm418 = vcmp.ge.f32.partialorder %v264, 0.0
  %vm419 = vcmp.ge.f32.partialorder %v269, 0.0
  %vm420 = vcmp.ge.f32.partialorder %v274, 0.0
  %vm421 = vcmp.ge.f32.partialorder %v279, 0.0
  %vm422 = vcmp.ge.f32.partialorder %v284, 0.0
  %vm423 = vcmp.ge.f32.partialorder %v289, 0.0
  %vm424 = vcmp.ge.f32.partialorder %v294, 0.0
  %vm425 = vcmp.ge.f32.partialorder %v299, 0.0
  %vm426 = vcmp.ge.f32.partialorder %v304, 0.0
  %vm427 = vcmp.ge.f32.partialorder %v309, 0.0
  %vm428 = vcmp.ge.f32.partialorder %v314, 0.0
  %vm429 = vcmp.ge.f32.partialorder %v319, 0.0
  %vm430 = vcmp.ge.f32.partialorder %v324, 0.0
  %vm431 = vcmp.ge.f32.partialorder %v329, 0.0
  %vm432 = vcmp.ge.f32.partialorder %v334, 0.0
  %vm433 = vcmp.ge.f32.partialorder %v339, 0.0
  %vm434 = vcmp.ge.f32.partialorder %v344, 0.0
  %vm435 = vcmp.ge.f32.partialorder %v349, 0.0
  %vm436 = vcmp.ge.f32.partialorder %v354, 0.0
  %vm437 = vcmp.ge.f32.partialorder %v359, 0.0
  %vm438 = vcmp.ge.f32.partialorder %v364, 0.0
  %vm439 = vcmp.ge.f32.partialorder %v369, 0.0
  %vm440 = vcmp.ge.f32.partialorder %v374, 0.0
  %vm441 = vcmp.ge.f32.partialorder %v379, 0.0
  %vm442 = vcmp.ge.f32.partialorder %v384, 0.0
  %vm443 = vcmp.ge.f32.partialorder %v389, 0.0
  %vm444 = vcmp.ge.f32.partialorder %v394, 0.0
  %vm445 = vcmp.ge.f32.partialorder %v399, 0.0
  %vm446 = vcmp.ge.f32.partialorder %v404, 0.0
  %vm447 = vcmp.ge.f32.partialorder %v409, 0.0
  %vm448 = vcmp.ge.f32.partialorder %v414, 0.0
  %v449 = vmul.f32 %v259, 0.8
  %v450 = vmul.f32 %v264, 0.8
  %v451 = vmul.f32 %v269, 0.8
  %v452 = vmul.f32 %v274, 0.8
  %v453 = vmul.f32 %v279, 0.8
  %v454 = vmul.f32 %v284, 0.8
  %v455 = vmul.f32 %v289, 0.8
  %v456 = vmul.f32 %v294, 0.8
  %v457 = vmul.f32 %v299, 0.8
  %v458 = vmul.f32 %v304, 0.8
  %v459 = vmul.f32 %v309, 0.8
  %v460 = vmul.f32 %v314, 0.8
  %v461 = vmul.f32 %v319, 0.8
  %v462 = vmul.f32 %v324, 0.8
  %v463 = vmul.f32 %v329, 0.8
  %v464 = vmul.f32 %v334, 0.8
  %v465 = vmul.f32 %v339, 0.8
  %v466 = vmul.f32 %v344, 0.8
  %v467 = vmul.f32 %v349, 0.8
  %v468 = vmul.f32 %v354, 0.8
  %v469 = vmul.f32 %v359, 0.8
  %v470 = vmul.f32 %v364, 0.8
  %v471 = vmul.f32 %v369, 0.8
  %v472 = vmul.f32 %v374, 0.8
  %v473 = vmul.f32 %v379, 0.8
  %v474 = vmul.f32 %v384, 0.8
  %v475 = vmul.f32 %v389, 0.8
  %v476 = vmul.f32 %v394, 0.8
  %v477 = vmul.f32 %v399, 0.8
  %v478 = vmul.f32 %v404, 0.8
  %v479 = vmul.f32 %v409, 0.8
  %v480 = vmul.f32 %v414, 0.8
  %v481 = vsel %vm417, %v259, %v449
  %v482 = vsel %vm418, %v264, %v450
  %v483 = vsel %vm419, %v269, %v451
  %v484 = vsel %vm420, %v274, %v452
  %v485 = vsel %vm421, %v279, %v453
  %v486 = vsel %vm422, %v284, %v454
  %v487 = vsel %vm423, %v289, %v455
  %v488 = vsel %vm424, %v294, %v456
  %v489 = vsel %vm425, %v299, %v457
  %v490 = vsel %vm426, %v304, %v458
  %v491 = vsel %vm427, %v309, %v459
  %v492 = vsel %vm428, %v314, %v460
  %v493 = vsel %vm429, %v319, %v461
  %v494 = vsel %vm430, %v324, %v462
  %v495 = vsel %vm431, %v329, %v463
  %v496 = vsel %vm432, %v334, %v464
  %v497 = vsel %vm433, %v339, %v465
  %v498 = vsel %vm434, %v344, %v466
  %v499 = vsel %vm435, %v349, %v467
  %v500 = vsel %vm436, %v354, %v468
  %v501 = vsel %vm437, %v359, %v469
  %v502 = vsel %vm438, %v364, %v470
  %v503 = vsel %vm439, %v369, %v471
  %v504 = vsel %vm440, %v374, %v472
  %v505 = vsel %vm441, %v379, %v473
  %v506 = vsel %vm442, %v384, %v474
  %v507 = vsel %vm443, %v389, %v475
  %v508 = vsel %vm444, %v394, %v476
  %v509 = vsel %vm445, %v399, %v477
  %v510 = vsel %vm446, %v404, %v478
  %v511 = vsel %vm447, %v409, %v479
  %v512 = vsel %vm448, %v414, %v480
  %v513 = vld [vmem:[%s1] sm:$0xff]
  %v514 = vld [vmem:[%s1 + $0x8] sm:$0xff]
  %v515 = vld [vmem:[%s1 + $0x10] sm:$0xff]
  %v516 = vld [vmem:[%s1 + $0x18] sm:$0xff]
  %v517 = vld [vmem:[%s1 + $0x20] sm:$0xff]
  %v518 = vld [vmem:[%s1 + $0x28] sm:$0xff]
  %v519 = vld [vmem:[%s1 + $0x30] sm:$0xff]
  %v520 = vld [vmem:[%s1 + $0x38] sm:$0xff]
  %v521 = vld [vmem:[%s1 + $0x40] sm:$0xff]
  %v522 = vld [vmem:[%s1 + $0x48] sm:$0xff]
  %v523 = vld [vmem:[%s1 + $0x50] sm:$0xff]
  %v524 = vld [vmem:[%s1 + $0x58] sm:$0xff]
  %v525 = vld [vmem:[%s1 + $0x60] sm:$0xff]
  %v526 = vld [vmem:[%s1 + $0x68] sm:$0xff]
  %v527 = vld [vmem:[%s1 + $0x70] sm:$0xff]
  %v528 = vld [vmem:[%s1 + $0x78] sm:$0xff]
  %v529 = vld [vmem:[%s1 + $0x80] sm:$0xff]
  %v530 = vld [vmem:[%s1 + $0x88] sm:$0xff]
  %v531 = vld [vmem:[%s1 + $0x90] sm:$0xff]
  %v532 = vld [vmem:[%s1 + $0x98] sm:$0xff]
  %v533 = vld [vmem:[%s1 + $0xa0] sm:$0xff]
  %v534 = vld [vmem:[%s1 + $0xa8] sm:$0xff]
  %v535 = vld [vmem:[%s1 + $0xb0] sm:$0xff]
  %v536 = vld [vmem:[%s1 + $0xb8] sm:$0xff]
  %v537 = vld [vmem:[%s1 + $0xc0] sm:$0xff]
  %v538 = vld [vmem:[%s1 + $0xc8] sm:$0xff]
  %v539 = vld [vmem:[%s1 + $0xd0] sm:$0xff]
  %v540 = vld [vmem:[%s1 + $0xd8] sm:$0xff]
  %v541 = vld [vmem:[%s1 + $0xe0] sm:$0xff]
  %v542 = vld [vmem:[%s1 + $0xe8] sm:$0xff]
  %v543 = vld [vmem:[%s1 + $0xf0] sm:$0xff]
  %v544 = vld [vmem:[%s1 + $0xf8] sm:$0xff]
  %v545 = vld [vmem:[%s6] sm:$0xff]
  %v546 = vld [vmem:[%s6 + $0x8] sm:$0xff]
  %v547 = vld [vmem:[%s7] sm:$0x3]
  %v549 = vlaneseq
  %v550 = vshrl.u32 %v549, 7
  %v551 = vsub.s32 0, %v550
  %v552 = vrot.slane %v547, %v551
  %v553 = vlaneseq
  %v554 = vshrl.u32 %v553, 7
  %v555 = vsub.s32 1, %v554
  %v556 = vrot.slane %v547, %v555
  %v560 = vsel %vm95, %v513, 0
  %v563 = vsel %vm95, %v514, 0
  %v566 = vsel %vm95, %v515, 0
  %v569 = vsel %vm95, %v516, 0
  %v572 = vsel %vm95, %v517, 0
  %v575 = vsel %vm95, %v518, 0
  %v578 = vsel %vm95, %v519, 0
  %v581 = vsel %vm95, %v520, 0
  %v584 = vsel %vm95, %v521, 0
  %v587 = vsel %vm95, %v522, 0
  %v590 = vsel %vm95, %v523, 0
  %v593 = vsel %vm95, %v524, 0
  %v596 = vsel %vm95, %v525, 0
  %v599 = vsel %vm95, %v526, 0
  %v602 = vsel %vm95, %v527, 0
  %v605 = vsel %vm95, %v528, 0
  %v608 = vsel %vm95, %v529, 0
  %v611 = vsel %vm95, %v530, 0
  %v614 = vsel %vm95, %v531, 0
  %v617 = vsel %vm95, %v532, 0
  %v620 = vsel %vm95, %v533, 0
  %v623 = vsel %vm95, %v534, 0
  %v626 = vsel %vm95, %v535, 0
  %v629 = vsel %vm95, %v536, 0
  %v632 = vsel %vm95, %v537, 0
  %v635 = vsel %vm95, %v538, 0
  %v638 = vsel %vm95, %v539, 0
  %v641 = vsel %vm95, %v540, 0
  %v644 = vsel %vm95, %v541, 0
  %v647 = vsel %vm95, %v542, 0
  %v650 = vsel %vm95, %v543, 0
  %v653 = vsel %vm95, %v544, 0
  %655 = vmatprep.subr.mxu0 %v546
  %656 = vmatpush1.msra.mxu0 %v545
  %657 = vmatprep.subr.mxu0 0.0
  %658 = vmatpush1.msra.mxu0 0.0
  %659 = vmatprep.subr.mxu0 0.0
  %660 = vmatpush1.msra.mxu0 0.0
  %661 = vmatprep.subr.mxu0 0.0
  %662 = vmatpush1.msra.mxu0 0.0
  %663 = vmatprep.subr.mxu0 0.0
  %664 = vmatpush1.msra.mxu0 0.0
  %665 = vmatprep.subr.mxu0 0.0
  %666 = vmatpush1.msra.mxu0 0.0
  %667 = vmatprep.subr.mxu0 0.0
  %668 = vmatpush1.msra.mxu0 0.0
  %669 = vmatprep.subr.mxu0 0.0
  %670 = vmatpush1.msra.mxu0 0.0
  %671 = vmatprep.subr.mxu0 0.0
  %672 = vmatpush1.msra.mxu0 0.0
  %673 = vmatprep.subr.mxu0 0.0
  %674 = vmatpush1.msra.mxu0 0.0
  %675 = vmatprep.subr.mxu0 0.0
  %676 = vmatpush1.msra.mxu0 0.0
  %677 = vmatprep.subr.mxu0 0.0
  %678 = vmatpush1.msra.mxu0 0.0
  %679 = vmatprep.subr.mxu0 0.0
  %680 = vmatpush1.msra.mxu0 0.0
  %681 = vmatprep.subr.mxu0 0.0
  %682 = vmatpush1.msra.mxu0 0.0
  %683 = vmatprep.subr.mxu0 0.0
  %684 = vmatpush1.msra.mxu0 0.0
  %685 = vmatprep.subr.mxu0 0.0
  %686 = vmatpush1.msra.mxu0 0.0
  %687 = vmatprep.subr.mxu0 0.0
  %688 = vmatpush1.msra.mxu0 0.0
  %689 = vmatprep.subr.mxu0 0.0
  %690 = vmatpush1.msra.mxu0 0.0
  %691 = vmatprep.subr.mxu0 0.0
  %692 = vmatpush1.msra.mxu0 0.0
  %693 = vmatprep.subr.mxu0 0.0
  %694 = vmatpush1.msra.mxu0 0.0
  %695 = vmatprep.subr.mxu0 0.0
  %696 = vmatpush1.msra.mxu0 0.0
  %697 = vmatprep.subr.mxu0 0.0
  %698 = vmatpush1.msra.mxu0 0.0
  %699 = vmatprep.subr.mxu0 0.0
  %700 = vmatpush1.msra.mxu0 0.0
  %701 = vmatprep.subr.mxu0 0.0
  %702 = vmatpush1.msra.mxu0 0.0
  %703 = vmatprep.subr.mxu0 0.0
  %704 = vmatpush1.msra.mxu0 0.0
  %705 = vmatprep.subr.mxu0 0.0
  %706 = vmatpush1.msra.mxu0 0.0
  %707 = vmatprep.subr.mxu0 0.0
  %708 = vmatpush1.msra.mxu0 0.0
  %709 = vmatprep.subr.mxu0 0.0
  %710 = vmatpush1.msra.mxu0 0.0
  %711 = vmatprep.subr.mxu0 0.0
  %712 = vmatpush1.msra.mxu0 0.0
  %713 = vmatprep.subr.mxu0 0.0
  %714 = vmatpush1.msra.mxu0 0.0
  %715 = vmatprep.subr.mxu0 0.0
  %716 = vmatpush1.msra.mxu0 0.0
  %717 = vmatprep.subr.mxu0 0.0
  %718 = vmatpush1.msra.mxu0 0.0
  %719 = vmatprep.mubr.f32.mxu0 0.0
  %720 = vmatmul.mubr.f32.gmra.mrb[0].mxu0 %v560
  %v721 = vpop.f32.mrb[0].mxu0
  %v722 = vadd.f32 %v552, %v721
  %v723 = vpop.f32.mrb[0].mxu0
  %v724 = vadd.f32 %v556, %v723
  %725 = vmatprep.mubr.f32.mxu0 0.0
  %726 = vmatmul.mubr.f32.gmra.mrb[0].mxu0 %v563
  %v727 = vpop.f32.mrb[0].mxu0
  %v728 = vadd.f32 %v552, %v727
  %v729 = vpop.f32.mrb[0].mxu0
  %v730 = vadd.f32 %v556, %v729
  %731 = vmatprep.mubr.f32.mxu0 0.0
  %732 = vmatmul.mubr.f32.gmra.mrb[0].mxu0 %v566
  %v733 = vpop.f32.mrb[0].mxu0
  %v734 = vadd.f32 %v552, %v733
  %v735 = vpop.f32.mrb[0].mxu0
  %v736 = vadd.f32 %v556, %v735
  %737 = vmatprep.mubr.f32.mxu0 0.0
  %738 = vmatmul.mubr.f32.gmra.mrb[0].mxu0 %v569
  %v739 = vpop.f32.mrb[0].mxu0
  %v740 = vadd.f32 %v552, %v739
  %v741 = vpop.f32.mrb[0].mxu0
  %v742 = vadd.f32 %v556, %v741
  %743 = vmatprep.mubr.f32.mxu0 0.0
  %744 = vmatmul.mubr.f32.gmra.mrb[0].mxu0 %v572
  %v745 = vpop.f32.mrb[0].mxu0
  %v746 = vadd.f32 %v552, %v745
  %v747 = vpop.f32.mrb[0].mxu0
  %v748 = vadd.f32 %v556, %v747
  %749 = vmatprep.mubr.f32.mxu0 0.0
  %750 = vmatmul.mubr.f32.gmra.mrb[0].mxu0 %v575
  %v751 = vpop.f32.mrb[0].mxu0
  %v752 = vadd.f32 %v552, %v751
  %v753 = vpop.f32.mrb[0].mxu0
  %v754 = vadd.f32 %v556, %v753
  %755 = vmatprep.mubr.f32.mxu0 0.0
  %756 = vmatmul.mubr.f32.gmra.mrb[0].mxu0 %v578
  %v757 = vpop.f32.mrb[0].mxu0
  %v758 = vadd.f32 %v552, %v757
  %v759 = vpop.f32.mrb[0].mxu0
  %v760 = vadd.f32 %v556, %v759
  %761 = vmatprep.mubr.f32.mxu0 0.0
  %762 = vmatmul.mubr.f32.gmra.mrb[0].mxu0 %v581
  %v763 = vpop.f32.mrb[0].mxu0
  %v764 = vadd.f32 %v552, %v763
  %v765 = vpop.f32.mrb[0].mxu0
  %v766 = vadd.f32 %v556, %v765
  %767 = vmatprep.mubr.f32.mxu0 0.0
  %768 = vmatmul.mubr.f32.gmra.mrb[0].mxu0 %v584
  %v769 = vpop.f32.mrb[0].mxu0
  %v770 = vadd.f32 %v552, %v769
  %v771 = vpop.f32.mrb[0].mxu0
  %v772 = vadd.f32 %v556, %v771
  %773 = vmatprep.mubr.f32.mxu0 0.0
  %774 = vmatmul.mubr.f32.gmra.mrb[0].mxu0 %v587
  %v775 = vpop.f32.mrb[0].mxu0
  %v776 = vadd.f32 %v552, %v775
  %v777 = vpop.f32.mrb[0].mxu0
  %v778 = vadd.f32 %v556, %v777
  %779 = vmatprep.mubr.f32.mxu0 0.0
  %780 = vmatmul.mubr.f32.gmra.mrb[0].mxu0 %v590
  %v781 = vpop.f32.mrb[0].mxu0
  %v782 = vadd.f32 %v552, %v781
  %v783 = vpop.f32.mrb[0].mxu0
  %v784 = vadd.f32 %v556, %v783
  %785 = vmatprep.mubr.f32.mxu0 0.0
  %786 = vmatmul.mubr.f32.gmra.mrb[0].mxu0 %v593
  %v787 = vpop.f32.mrb[0].mxu0
  %v788 = vadd.f32 %v552, %v787
  %v789 = vpop.f32.mrb[0].mxu0
  %v790 = vadd.f32 %v556, %v789
  %791 = vmatprep.mubr.f32.mxu0 0.0
  %792 = vmatmul.mubr.f32.gmra.mrb[0].mxu0 %v596
  %v793 = vpop.f32.mrb[0].mxu0
  %v794 = vadd.f32 %v552, %v793
  %v795 = vpop.f32.mrb[0].mxu0
  %v796 = vadd.f32 %v556, %v795
  %797 = vmatprep.mubr.f32.mxu0 0.0
  %798 = vmatmul.mubr.f32.gmra.mrb[0].mxu0 %v599
  %v799 = vpop.f32.mrb[0].mxu0
  %v800 = vadd.f32 %v552, %v799
  %v801 = vpop.f32.mrb[0].mxu0
  %v802 = vadd.f32 %v556, %v801
  %803 = vmatprep.mubr.f32.mxu0 0.0
  %804 = vmatmul.mubr.f32.gmra.mrb[0].mxu0 %v602
  %v805 = vpop.f32.mrb[0].mxu0
  %v806 = vadd.f32 %v552, %v805
  %v807 = vpop.f32.mrb[0].mxu0
  %v808 = vadd.f32 %v556, %v807
  %809 = vmatprep.mubr.f32.mxu0 0.0
  %810 = vmatmul.mubr.f32.gmra.mrb[0].mxu0 %v605
  %v811 = vpop.f32.mrb[0].mxu0
  %v812 = vadd.f32 %v552, %v811
  %v813 = vpop.f32.mrb[0].mxu0
  %v814 = vadd.f32 %v556, %v813
  %815 = vmatprep.mubr.f32.mxu0 0.0
  %816 = vmatmul.mubr.f32.gmra.mrb[0].mxu0 %v608
  %v817 = vpop.f32.mrb[0].mxu0
  %v818 = vadd.f32 %v552, %v817
  %v819 = vpop.f32.mrb[0].mxu0
  %v820 = vadd.f32 %v556, %v819
  %821 = vmatprep.mubr.f32.mxu0 0.0
  %822 = vmatmul.mubr.f32.gmra.mrb[0].mxu0 %v611
  %v823 = vpop.f32.mrb[0].mxu0
  %v824 = vadd.f32 %v552, %v823
  %v825 = vpop.f32.mrb[0].mxu0
  %v826 = vadd.f32 %v556, %v825
  %827 = vmatprep.mubr.f32.mxu0 0.0
  %828 = vmatmul.mubr.f32.gmra.mrb[0].mxu0 %v614
  %v829 = vpop.f32.mrb[0].mxu0
  %v830 = vadd.f32 %v552, %v829
  %v831 = vpop.f32.mrb[0].mxu0
  %v832 = vadd.f32 %v556, %v831
  %833 = vmatprep.mubr.f32.mxu0 0.0
  %834 = vmatmul.mubr.f32.gmra.mrb[0].mxu0 %v617
  %v835 = vpop.f32.mrb[0].mxu0
  %v836 = vadd.f32 %v552, %v835
  %v837 = vpop.f32.mrb[0].mxu0
  %v838 = vadd.f32 %v556, %v837
  %839 = vmatprep.mubr.f32.mxu0 0.0
  %840 = vmatmul.mubr.f32.gmra.mrb[0].mxu0 %v620
  %v841 = vpop.f32.mrb[0].mxu0
  %v842 = vadd.f32 %v552, %v841
  %v843 = vpop.f32.mrb[0].mxu0
  %v844 = vadd.f32 %v556, %v843
  %845 = vmatprep.mubr.f32.mxu0 0.0
  %846 = vmatmul.mubr.f32.gmra.mrb[0].mxu0 %v623
  %v847 = vpop.f32.mrb[0].mxu0
  %v848 = vadd.f32 %v552, %v847
  %v849 = vpop.f32.mrb[0].mxu0
  %v850 = vadd.f32 %v556, %v849
  %851 = vmatprep.mubr.f32.mxu0 0.0
  %852 = vmatmul.mubr.f32.gmra.mrb[0].mxu0 %v626
  %v853 = vpop.f32.mrb[0].mxu0
  %v854 = vadd.f32 %v552, %v853
  %v855 = vpop.f32.mrb[0].mxu0
  %v856 = vadd.f32 %v556, %v855
  %857 = vmatprep.mubr.f32.mxu0 0.0
  %858 = vmatmul.mubr.f32.gmra.mrb[0].mxu0 %v629
  %v859 = vpop.f32.mrb[0].mxu0
  %v860 = vadd.f32 %v552, %v859
  %v861 = vpop.f32.mrb[0].mxu0
  %v862 = vadd.f32 %v556, %v861
  %863 = vmatprep.mubr.f32.mxu0 0.0
  %864 = vmatmul.mubr.f32.gmra.mrb[0].mxu0 %v632
  %v865 = vpop.f32.mrb[0].mxu0
  %v866 = vadd.f32 %v552, %v865
  %v867 = vpop.f32.mrb[0].mxu0
  %v868 = vadd.f32 %v556, %v867
  %869 = vmatprep.mubr.f32.mxu0 0.0
  %870 = vmatmul.mubr.f32.gmra.mrb[0].mxu0 %v635
  %v871 = vpop.f32.mrb[0].mxu0
  %v872 = vadd.f32 %v552, %v871
  %v873 = vpop.f32.mrb[0].mxu0
  %v874 = vadd.f32 %v556, %v873
  %875 = vmatprep.mubr.f32.mxu0 0.0
  %876 = vmatmul.mubr.f32.gmra.mrb[0].mxu0 %v638
  %v877 = vpop.f32.mrb[0].mxu0
  %v878 = vadd.f32 %v552, %v877
  %v879 = vpop.f32.mrb[0].mxu0
  %v880 = vadd.f32 %v556, %v879
  %881 = vmatprep.mubr.f32.mxu0 0.0
  %882 = vmatmul.mubr.f32.gmra.mrb[0].mxu0 %v641
  %v883 = vpop.f32.mrb[0].mxu0
  %v884 = vadd.f32 %v552, %v883
  %v885 = vpop.f32.mrb[0].mxu0
  %v886 = vadd.f32 %v556, %v885
  %887 = vmatprep.mubr.f32.mxu0 0.0
  %888 = vmatmul.mubr.f32.gmra.mrb[0].mxu0 %v644
  %v889 = vpop.f32.mrb[0].mxu0
  %v890 = vadd.f32 %v552, %v889
  %v891 = vpop.f32.mrb[0].mxu0
  %v892 = vadd.f32 %v556, %v891
  %893 = vmatprep.mubr.f32.mxu0 0.0
  %894 = vmatmul.mubr.f32.gmra.mrb[0].mxu0 %v647
  %v895 = vpop.f32.mrb[0].mxu0
  %v896 = vadd.f32 %v552, %v895
  %v897 = vpop.f32.mrb[0].mxu0
  %v898 = vadd.f32 %v556, %v897
  %899 = vmatprep.mubr.f32.mxu0 0.0
  %900 = vmatmul.mubr.f32.gmra.mrb[0].mxu0 %v650
  %v901 = vpop.f32.mrb[0].mxu0
  %v902 = vadd.f32 %v552, %v901
  %v903 = vpop.f32.mrb[0].mxu0
  %v904 = vadd.f32 %v556, %v903
  %905 = vmatprep.mubr.f32.mxu0 0.0
  %906 = vmatmul.mubr.f32.gmra.mrb[0].mxu0 %v653
  %v907 = vpop.f32.mrb[0].mxu0
  %v908 = vadd.f32 %v552, %v907
  %v909 = vpop.f32.mrb[0].mxu0
  %v910 = vadd.f32 %v556, %v909
  %911 = vdwg.mxu0
  %vm912 = vcmp.ge.f32.partialorder %v722, 0.0
  %vm913 = vcmp.ge.f32.partialorder %v728, 0.0
  %vm914 = vcmp.ge.f32.partialorder %v734, 0.0
  %vm915 = vcmp.ge.f32.partialorder %v740, 0.0
  %vm916 = vcmp.ge.f32.partialorder %v746, 0.0
  %vm917 = vcmp.ge.f32.partialorder %v752, 0.0
  %vm918 = vcmp.ge.f32.partialorder %v758, 0.0
  %vm919 = vcmp.ge.f32.partialorder %v764, 0.0
  %vm920 = vcmp.ge.f32.partialorder %v770, 0.0
  %vm921 = vcmp.ge.f32.partialorder %v776, 0.0
  %vm922 = vcmp.ge.f32.partialorder %v782, 0.0
  %vm923 = vcmp.ge.f32.partialorder %v788, 0.0
  %vm924 = vcmp.ge.f32.partialorder %v794, 0.0
  %vm925 = vcmp.ge.f32.partialorder %v800, 0.0
  %vm926 = vcmp.ge.f32.partialorder %v806, 0.0
  %vm927 = vcmp.ge.f32.partialorder %v812, 0.0
  %vm928 = vcmp.ge.f32.partialorder %v818, 0.0
  %vm929 = vcmp.ge.f32.partialorder %v824, 0.0
  %vm930 = vcmp.ge.f32.partialorder %v830, 0.0
  %vm931 = vcmp.ge.f32.partialorder %v836, 0.0
  %vm932 = vcmp.ge.f32.partialorder %v842, 0.0
  %vm933 = vcmp.ge.f32.partialorder %v848, 0.0
  %vm934 = vcmp.ge.f32.partialorder %v854, 0.0
  %vm935 = vcmp.ge.f32.partialorder %v860, 0.0
  %vm936 = vcmp.ge.f32.partialorder %v866, 0.0
  %vm937 = vcmp.ge.f32.partialorder %v872, 0.0
  %vm938 = vcmp.ge.f32.partialorder %v878, 0.0
  %vm939 = vcmp.ge.f32.partialorder %v884, 0.0
  %vm940 = vcmp.ge.f32.partialorder %v890, 0.0
  %vm941 = vcmp.ge.f32.partialorder %v896, 0.0
  %vm942 = vcmp.ge.f32.partialorder %v902, 0.0
  %vm943 = vcmp.ge.f32.partialorder %v908, 0.0
  %v944 = vmul.f32 %v722, 0.8
  %v945 = vmul.f32 %v728, 0.8
  %v946 = vmul.f32 %v734, 0.8
  %v947 = vmul.f32 %v740, 0.8
  %v948 = vmul.f32 %v746, 0.8
  %v949 = vmul.f32 %v752, 0.8
  %v950 = vmul.f32 %v758, 0.8
  %v951 = vmul.f32 %v764, 0.8
  %v952 = vmul.f32 %v770, 0.8
  %v953 = vmul.f32 %v776, 0.8
  %v954 = vmul.f32 %v782, 0.8
  %v955 = vmul.f32 %v788, 0.8
  %v956 = vmul.f32 %v794, 0.8
  %v957 = vmul.f32 %v800, 0.8
  %v958 = vmul.f32 %v806, 0.8
  %v959 = vmul.f32 %v812, 0.8
  %v960 = vmul.f32 %v818, 0.8
  %v961 = vmul.f32 %v824, 0.8
  %v962 = vmul.f32 %v830, 0.8
  %v963 = vmul.f32 %v836, 0.8
  %v964 = vmul.f32 %v842, 0.8
  %v965 = vmul.f32 %v848, 0.8
  %v966 = vmul.f32 %v854, 0.8
  %v967 = vmul.f32 %v860, 0.8
  %v968 = vmul.f32 %v866, 0.8
  %v969 = vmul.f32 %v872, 0.8
  %v970 = vmul.f32 %v878, 0.8
  %v971 = vmul.f32 %v884, 0.8
  %v972 = vmul.f32 %v890, 0.8
  %v973 = vmul.f32 %v896, 0.8
  %v974 = vmul.f32 %v902, 0.8
  %v975 = vmul.f32 %v908, 0.8
  %v976 = vsel %vm912, %v722, %v944
  %v977 = vsel %vm913, %v728, %v945
  %v978 = vsel %vm914, %v734, %v946
  %v979 = vsel %vm915, %v740, %v947
  %v980 = vsel %vm916, %v746, %v948
  %v981 = vsel %vm917, %v752, %v949
  %v982 = vsel %vm918, %v758, %v950
  %v983 = vsel %vm919, %v764, %v951
  %v984 = vsel %vm920, %v770, %v952
  %v985 = vsel %vm921, %v776, %v953
  %v986 = vsel %vm922, %v782, %v954
  %v987 = vsel %vm923, %v788, %v955
  %v988 = vsel %vm924, %v794, %v956
  %v989 = vsel %vm925, %v800, %v957
  %v990 = vsel %vm926, %v806, %v958
  %v991 = vsel %vm927, %v812, %v959
  %v992 = vsel %vm928, %v818, %v960
  %v993 = vsel %vm929, %v824, %v961
  %v994 = vsel %vm930, %v830, %v962
  %v995 = vsel %vm931, %v836, %v963
  %v996 = vsel %vm932, %v842, %v964
  %v997 = vsel %vm933, %v848, %v965
  %v998 = vsel %vm934, %v854, %v966
  %v999 = vsel %vm935, %v860, %v967
  %v1000 = vsel %vm936, %v866, %v968
  %v1001 = vsel %vm937, %v872, %v969
  %v1002 = vsel %vm938, %v878, %v970
  %v1003 = vsel %vm939, %v884, %v971
  %v1004 = vsel %vm940, %v890, %v972
  %v1005 = vsel %vm941, %v896, %v973
  %v1006 = vsel %vm942, %v902, %v974
  %v1007 = vsel %vm943, %v908, %v975
  %v1008 = vxor.u32 %v724, 2147483648
  %v1009 = vxor.u32 %v730, 2147483648
  %v1010 = vxor.u32 %v736, 2147483648
  %v1011 = vxor.u32 %v742, 2147483648
  %v1012 = vxor.u32 %v748, 2147483648
  %v1013 = vxor.u32 %v754, 2147483648
  %v1014 = vxor.u32 %v760, 2147483648
  %v1015 = vxor.u32 %v766, 2147483648
  %v1016 = vxor.u32 %v772, 2147483648
  %v1017 = vxor.u32 %v778, 2147483648
  %v1018 = vxor.u32 %v784, 2147483648
  %v1019 = vxor.u32 %v790, 2147483648
  %v1020 = vxor.u32 %v796, 2147483648
  %v1021 = vxor.u32 %v802, 2147483648
  %v1022 = vxor.u32 %v808, 2147483648
  %v1023 = vxor.u32 %v814, 2147483648
  %v1024 = vxor.u32 %v820, 2147483648
  %v1025 = vxor.u32 %v826, 2147483648
  %v1026 = vxor.u32 %v832, 2147483648
  %v1027 = vxor.u32 %v838, 2147483648
  %v1028 = vxor.u32 %v844, 2147483648
  %v1029 = vxor.u32 %v850, 2147483648
  %v1030 = vxor.u32 %v856, 2147483648
  %v1031 = vxor.u32 %v862, 2147483648
  %v1032 = vxor.u32 %v868, 2147483648
  %v1033 = vxor.u32 %v874, 2147483648
  %v1034 = vxor.u32 %v880, 2147483648
  %v1035 = vxor.u32 %v886, 2147483648
  %v1036 = vxor.u32 %v892, 2147483648
  %v1037 = vxor.u32 %v898, 2147483648
  %v1038 = vxor.u32 %v904, 2147483648
  %v1039 = vxor.u32 %v910, 2147483648
  %v1040 = vmul.f32 %v1008, 1.442695
  %v1041 = vpow.pop %v1040
  %v1042 = vmul.f32 %v1009, 1.442695
  %v1043 = vpow.pop %v1042
  %v1044 = vmul.f32 %v1010, 1.442695
  %v1045 = vpow.pop %v1044
  %v1046 = vmul.f32 %v1011, 1.442695
  %v1047 = vpow.pop %v1046
  %v1048 = vmul.f32 %v1012, 1.442695
  %v1049 = vpow.pop %v1048
  %v1050 = vmul.f32 %v1013, 1.442695
  %v1051 = vpow.pop %v1050
  %v1052 = vmul.f32 %v1014, 1.442695
  %v1053 = vpow.pop %v1052
  %v1054 = vmul.f32 %v1015, 1.442695
  %v1055 = vpow.pop %v1054
  %v1056 = vmul.f32 %v1016, 1.442695
  %v1057 = vpow.pop %v1056
  %v1058 = vmul.f32 %v1017, 1.442695
  %v1059 = vpow.pop %v1058
  %v1060 = vmul.f32 %v1018, 1.442695
  %v1061 = vpow.pop %v1060
  %v1062 = vmul.f32 %v1019, 1.442695
  %v1063 = vpow.pop %v1062
  %v1064 = vmul.f32 %v1020, 1.442695
  %v1065 = vpow.pop %v1064
  %v1066 = vmul.f32 %v1021, 1.442695
  %v1067 = vpow.pop %v1066
  %v1068 = vmul.f32 %v1022, 1.442695
  %v1069 = vpow.pop %v1068
  %v1070 = vmul.f32 %v1023, 1.442695
  %v1071 = vpow.pop %v1070
  %v1072 = vmul.f32 %v1024, 1.442695
  %v1073 = vpow.pop %v1072
  %v1074 = vmul.f32 %v1025, 1.442695
  %v1075 = vpow.pop %v1074
  %v1076 = vmul.f32 %v1026, 1.442695
  %v1077 = vpow.pop %v1076
  %v1078 = vmul.f32 %v1027, 1.442695
  %v1079 = vpow.pop %v1078
  %v1080 = vmul.f32 %v1028, 1.442695
  %v1081 = vpow.pop %v1080
  %v1082 = vmul.f32 %v1029, 1.442695
  %v1083 = vpow.pop %v1082
  %v1084 = vmul.f32 %v1030, 1.442695
  %v1085 = vpow.pop %v1084
  %v1086 = vmul.f32 %v1031, 1.442695
  %v1087 = vpow.pop %v1086
  %v1088 = vmul.f32 %v1032, 1.442695
  %v1089 = vpow.pop %v1088
  %v1090 = vmul.f32 %v1033, 1.442695
  %v1091 = vpow.pop %v1090
  %v1092 = vmul.f32 %v1034, 1.442695
  %v1093 = vpow.pop %v1092
  %v1094 = vmul.f32 %v1035, 1.442695
  %v1095 = vpow.pop %v1094
  %v1096 = vmul.f32 %v1036, 1.442695
  %v1097 = vpow.pop %v1096
  %v1098 = vmul.f32 %v1037, 1.442695
  %v1099 = vpow.pop %v1098
  %v1100 = vmul.f32 %v1038, 1.442695
  %v1101 = vpow.pop %v1100
  %v1102 = vmul.f32 %v1039, 1.442695
  %v1103 = vpow.pop %v1102
  %v1104 = vadd.f32 %v1041, 1.0
  %v1105 = vadd.f32 %v1043, 1.0
  %v1106 = vadd.f32 %v1045, 1.0
  %v1107 = vadd.f32 %v1047, 1.0
  %v1108 = vadd.f32 %v1049, 1.0
  %v1109 = vadd.f32 %v1051, 1.0
  %v1110 = vadd.f32 %v1053, 1.0
  %v1111 = vadd.f32 %v1055, 1.0
  %v1112 = vadd.f32 %v1057, 1.0
  %v1113 = vadd.f32 %v1059, 1.0
  %v1114 = vadd.f32 %v1061, 1.0
  %v1115 = vadd.f32 %v1063, 1.0
  %v1116 = vadd.f32 %v1065, 1.0
  %v1117 = vadd.f32 %v1067, 1.0
  %v1118 = vadd.f32 %v1069, 1.0
  %v1119 = vadd.f32 %v1071, 1.0
  %v1120 = vadd.f32 %v1073, 1.0
  %v1121 = vadd.f32 %v1075, 1.0
  %v1122 = vadd.f32 %v1077, 1.0
  %v1123 = vadd.f32 %v1079, 1.0
  %v1124 = vadd.f32 %v1081, 1.0
  %v1125 = vadd.f32 %v1083, 1.0
  %v1126 = vadd.f32 %v1085, 1.0
  %v1127 = vadd.f32 %v1087, 1.0
  %v1128 = vadd.f32 %v1089, 1.0
  %v1129 = vadd.f32 %v1091, 1.0
  %v1130 = vadd.f32 %v1093, 1.0
  %v1131 = vadd.f32 %v1095, 1.0
  %v1132 = vadd.f32 %v1097, 1.0
  %v1133 = vadd.f32 %v1099, 1.0
  %v1134 = vadd.f32 %v1101, 1.0
  %v1135 = vadd.f32 %v1103, 1.0
  %v1136 = vrcp.pop %v1104
  %v1137 = vmul.f32 1.0, %v1136
  %v1138 = vrcp.pop %v1105
  %v1139 = vmul.f32 1.0, %v1138
  %v1140 = vrcp.pop %v1106
  %v1141 = vmul.f32 1.0, %v1140
  %v1142 = vrcp.pop %v1107
  %v1143 = vmul.f32 1.0, %v1142
  %v1144 = vrcp.pop %v1108
  %v1145 = vmul.f32 1.0, %v1144
  %v1146 = vrcp.pop %v1109
  %v1147 = vmul.f32 1.0, %v1146
  %v1148 = vrcp.pop %v1110
  %v1149 = vmul.f32 1.0, %v1148
  %v1150 = vrcp.pop %v1111
  %v1151 = vmul.f32 1.0, %v1150
  %v1152 = vrcp.pop %v1112
  %v1153 = vmul.f32 1.0, %v1152
  %v1154 = vrcp.pop %v1113
  %v1155 = vmul.f32 1.0, %v1154
  %v1156 = vrcp.pop %v1114
  %v1157 = vmul.f32 1.0, %v1156
  %v1158 = vrcp.pop %v1115
  %v1159 = vmul.f32 1.0, %v1158
  %v1160 = vrcp.pop %v1116
  %v1161 = vmul.f32 1.0, %v1160
  %v1162 = vrcp.pop %v1117
  %v1163 = vmul.f32 1.0, %v1162
  %v1164 = vrcp.pop %v1118
  %v1165 = vmul.f32 1.0, %v1164
  %v1166 = vrcp.pop %v1119
  %v1167 = vmul.f32 1.0, %v1166
  %v1168 = vrcp.pop %v1120
  %v1169 = vmul.f32 1.0, %v1168
  %v1170 = vrcp.pop %v1121
  %v1171 = vmul.f32 1.0, %v1170
  %v1172 = vrcp.pop %v1122
  %v1173 = vmul.f32 1.0, %v1172
  %v1174 = vrcp.pop %v1123
  %v1175 = vmul.f32 1.0, %v1174
  %v1176 = vrcp.pop %v1124
  %v1177 = vmul.f32 1.0, %v1176
  %v1178 = vrcp.pop %v1125
  %v1179 = vmul.f32 1.0, %v1178
  %v1180 = vrcp.pop %v1126
  %v1181 = vmul.f32 1.0, %v1180
  %v1182 = vrcp.pop %v1127
  %v1183 = vmul.f32 1.0, %v1182
  %v1184 = vrcp.pop %v1128
  %v1185 = vmul.f32 1.0, %v1184
  %v1186 = vrcp.pop %v1129
  %v1187 = vmul.f32 1.0, %v1186
  %v1188 = vrcp.pop %v1130
  %v1189 = vmul.f32 1.0, %v1188
  %v1190 = vrcp.pop %v1131
  %v1191 = vmul.f32 1.0, %v1190
  %v1192 = vrcp.pop %v1132
  %v1193 = vmul.f32 1.0, %v1192
  %v1194 = vrcp.pop %v1133
  %v1195 = vmul.f32 1.0, %v1194
  %v1196 = vrcp.pop %v1134
  %v1197 = vmul.f32 1.0, %v1196
  %v1198 = vrcp.pop %v1135
  %v1199 = vmul.f32 1.0, %v1198
  %v1200 = vsub.f32 %v481, %v976
  %v1201 = vsub.f32 %v482, %v977
  %v1202 = vsub.f32 %v483, %v978
  %v1203 = vsub.f32 %v484, %v979
  %v1204 = vsub.f32 %v485, %v980
  %v1205 = vsub.f32 %v486, %v981
  %v1206 = vsub.f32 %v487, %v982
  %v1207 = vsub.f32 %v488, %v983
  %v1208 = vsub.f32 %v489, %v984
  %v1209 = vsub.f32 %v490, %v985
  %v1210 = vsub.f32 %v491, %v986
  %v1211 = vsub.f32 %v492, %v987
  %v1212 = vsub.f32 %v493, %v988
  %v1213 = vsub.f32 %v494, %v989
  %v1214 = vsub.f32 %v495, %v990
  %v1215 = vsub.f32 %v496, %v991
  %v1216 = vsub.f32 %v497, %v992
  %v1217 = vsub.f32 %v498, %v993
  %v1218 = vsub.f32 %v499, %v994
  %v1219 = vsub.f32 %v500, %v995
  %v1220 = vsub.f32 %v501, %v996
  %v1221 = vsub.f32 %v502, %v997
  %v1222 = vsub.f32 %v503, %v998
  %v1223 = vsub.f32 %v504, %v999
  %v1224 = vsub.f32 %v505, %v1000
  %v1225 = vsub.f32 %v506, %v1001
  %v1226 = vsub.f32 %v507, %v1002
  %v1227 = vsub.f32 %v508, %v1003
  %v1228 = vsub.f32 %v509, %v1004
  %v1229 = vsub.f32 %v510, %v1005
  %v1230 = vsub.f32 %v511, %v1006
  %v1231 = vsub.f32 %v512, %v1007
  %v1232 = vld [vmem:[%s3] sm:$0xff]
  %v1233 = vld [vmem:[%s3 + $0x8] sm:$0xff]
  %1234 = vmatprep.subr.mxu0 0.0
  %1235 = vmatpush1.xpose.msra.mxu0 %v1232
  %1236 = vmatprep.subr.mxu0 0.0
  %1237 = vmatpush1.xpose.msra.mxu0 %v1233
  %1238 = vmatprep.subr.mxu0 0.0
  %1239 = vmatpush1.xpose.msra.mxu0 0.0
  %1240 = vmatprep.subr.mxu0 0.0
  %1241 = vmatpush1.xpose.msra.mxu0 0.0
  %1242 = vmatprep.subr.mxu0 0.0
  %1243 = vmatpush1.xpose.msra.mxu0 0.0
  %1244 = vmatprep.subr.mxu0 0.0
  %1245 = vmatpush1.xpose.msra.mxu0 0.0
  %1246 = vmatprep.subr.mxu0 0.0
  %1247 = vmatpush1.xpose.msra.mxu0 0.0
  %1248 = vmatprep.subr.mxu0 0.0
  %1249 = vmatpush1.xpose.msra.mxu0 0.0
  %1250 = vmatprep.subr.mxu0 0.0
  %1251 = vmatpush1.xpose.msra.mxu0 0.0
  %1252 = vmatprep.subr.mxu0 0.0
  %1253 = vmatpush1.xpose.msra.mxu0 0.0
  %1254 = vmatprep.subr.mxu0 0.0
  %1255 = vmatpush1.xpose.msra.mxu0 0.0
  %1256 = vmatprep.subr.mxu0 0.0
  %1257 = vmatpush1.xpose.msra.mxu0 0.0
  %1258 = vmatprep.subr.mxu0 0.0
  %1259 = vmatpush1.xpose.msra.mxu0 0.0
  %1260 = vmatprep.subr.mxu0 0.0
  %1261 = vmatpush1.xpose.msra.mxu0 0.0
  %1262 = vmatprep.subr.mxu0 0.0
  %1263 = vmatpush1.xpose.msra.mxu0 0.0
  %1264 = vmatprep.subr.mxu0 0.0
  %1265 = vmatpush1.xpose.msra.mxu0 0.0
  %1266 = vmatprep.subr.mxu0 0.0
  %1267 = vmatpush1.xpose.msra.mxu0 0.0
  %1268 = vmatprep.subr.mxu0 0.0
  %1269 = vmatpush1.xpose.msra.mxu0 0.0
  %1270 = vmatprep.subr.mxu0 0.0
  %1271 = vmatpush1.xpose.msra.mxu0 0.0
  %1272 = vmatprep.subr.mxu0 0.0
  %1273 = vmatpush1.xpose.msra.mxu0 0.0
  %1274 = vmatprep.subr.mxu0 0.0
  %1275 = vmatpush1.xpose.msra.mxu0 0.0
  %1276 = vmatprep.subr.mxu0 0.0
  %1277 = vmatpush1.xpose.msra.mxu0 0.0
  %1278 = vmatprep.subr.mxu0 0.0
  %1279 = vmatpush1.xpose.msra.mxu0 0.0
  %1280 = vmatprep.subr.mxu0 0.0
  %1281 = vmatpush1.xpose.msra.mxu0 0.0
  %1282 = vmatprep.subr.mxu0 0.0
  %1283 = vmatpush1.xpose.msra.mxu0 0.0
  %1284 = vmatprep.subr.mxu0 0.0
  %1285 = vmatpush1.xpose.msra.mxu0 0.0
  %1286 = vmatprep.subr.mxu0 0.0
  %1287 = vmatpush1.xpose.msra.mxu0 0.0
  %1288 = vmatprep.subr.mxu0 0.0
  %1289 = vmatpush1.xpose.msra.mxu0 0.0
  %1290 = vmatprep.subr.mxu0 0.0
  %1291 = vmatpush1.xpose.msra.mxu0 0.0
  %1292 = vmatprep.subr.mxu0 0.0
  %1293 = vmatpush1.xpose.msra.mxu0 0.0
  %1294 = vmatprep.subr.mxu0 0.0
  %1295 = vmatpush1.xpose.msra.mxu0 0.0
  %1296 = vmatprep.subr.mxu0 0.0
  %1297 = vmatpush1.xpose.msra.mxu0 0.0
  %1298 = vmatprep.mubr.f32.mxu0 0.0
  %1299 = vmatmul.mubr.f32.gmra.mrb[0].mxu0 %v1200
  %v1300 = vpop.f32.mrb[0].mxu0
  %v1301 = vadd.f32 0.0, %v1300
  %v1302 = vpop.f32.mrb[0].mxu0
  %1303 = vmatprep.mubr.f32.mxu0 0.0
  %1304 = vmatmul.mubr.f32.gmra.mrb[0].mxu0 %v1201
  %v1305 = vpop.f32.mrb[0].mxu0
  %v1306 = vadd.f32 0.0, %v1305
  %v1307 = vpop.f32.mrb[0].mxu0
  %1308 = vmatprep.mubr.f32.mxu0 0.0
  %1309 = vmatmul.mubr.f32.gmra.mrb[0].mxu0 %v1202
  %v1310 = vpop.f32.mrb[0].mxu0
  %v1311 = vadd.f32 0.0, %v1310
  %v1312 = vpop.f32.mrb[0].mxu0
  %1313 = vmatprep.mubr.f32.mxu0 0.0
  %1314 = vmatmul.mubr.f32.gmra.mrb[0].mxu0 %v1203
  %v1315 = vpop.f32.mrb[0].mxu0
  %v1316 = vadd.f32 0.0, %v1315
  %v1317 = vpop.f32.mrb[0].mxu0
  %1318 = vmatprep.mubr.f32.mxu0 0.0
  %1319 = vmatmul.mubr.f32.gmra.mrb[0].mxu0 %v1204
  %v1320 = vpop.f32.mrb[0].mxu0
  %v1321 = vadd.f32 0.0, %v1320
  %v1322 = vpop.f32.mrb[0].mxu0
  %1323 = vmatprep.mubr.f32.mxu0 0.0
  %1324 = vmatmul.mubr.f32.gmra.mrb[0].mxu0 %v1205
  %v1325 = vpop.f32.mrb[0].mxu0
  %v1326 = vadd.f32 0.0, %v1325
  %v1327 = vpop.f32.mrb[0].mxu0
  %1328 = vmatprep.mubr.f32.mxu0 0.0
  %1329 = vmatmul.mubr.f32.gmra.mrb[0].mxu0 %v1206
  %v1330 = vpop.f32.mrb[0].mxu0
  %v1331 = vadd.f32 0.0, %v1330
  %v1332 = vpop.f32.mrb[0].mxu0
  %1333 = vmatprep.mubr.f32.mxu0 0.0
  %1334 = vmatmul.mubr.f32.gmra.mrb[0].mxu0 %v1207
  %v1335 = vpop.f32.mrb[0].mxu0
  %v1336 = vadd.f32 0.0, %v1335
  %v1337 = vpop.f32.mrb[0].mxu0
  %1338 = vmatprep.mubr.f32.mxu0 0.0
  %1339 = vmatmul.mubr.f32.gmra.mrb[0].mxu0 %v1208
  %v1340 = vpop.f32.mrb[0].mxu0
  %v1341 = vadd.f32 0.0, %v1340
  %v1342 = vpop.f32.mrb[0].mxu0
  %1343 = vmatprep.mubr.f32.mxu0 0.0
  %1344 = vmatmul.mubr.f32.gmra.mrb[0].mxu0 %v1209
  %v1345 = vpop.f32.mrb[0].mxu0
  %v1346 = vadd.f32 0.0, %v1345
  %v1347 = vpop.f32.mrb[0].mxu0
  %1348 = vmatprep.mubr.f32.mxu0 0.0
  %1349 = vmatmul.mubr.f32.gmra.mrb[0].mxu0 %v1210
  %v1350 = vpop.f32.mrb[0].mxu0
  %v1351 = vadd.f32 0.0, %v1350
  %v1352 = vpop.f32.mrb[0].mxu0
  %1353 = vmatprep.mubr.f32.mxu0 0.0
  %1354 = vmatmul.mubr.f32.gmra.mrb[0].mxu0 %v1211
  %v1355 = vpop.f32.mrb[0].mxu0
  %v1356 = vadd.f32 0.0, %v1355
  %v1357 = vpop.f32.mrb[0].mxu0
  %1358 = vmatprep.mubr.f32.mxu0 0.0
  %1359 = vmatmul.mubr.f32.gmra.mrb[0].mxu0 %v1212
  %v1360 = vpop.f32.mrb[0].mxu0
  %v1361 = vadd.f32 0.0, %v1360
  %v1362 = vpop.f32.mrb[0].mxu0
  %1363 = vmatprep.mubr.f32.mxu0 0.0
  %1364 = vmatmul.mubr.f32.gmra.mrb[0].mxu0 %v1213
  %v1365 = vpop.f32.mrb[0].mxu0
  %v1366 = vadd.f32 0.0, %v1365
  %v1367 = vpop.f32.mrb[0].mxu0
  %1368 = vmatprep.mubr.f32.mxu0 0.0
  %1369 = vmatmul.mubr.f32.gmra.mrb[0].mxu0 %v1214
  %v1370 = vpop.f32.mrb[0].mxu0
  %v1371 = vadd.f32 0.0, %v1370
  %v1372 = vpop.f32.mrb[0].mxu0
  %1373 = vmatprep.mubr.f32.mxu0 0.0
  %1374 = vmatmul.mubr.f32.gmra.mrb[0].mxu0 %v1215
  %v1375 = vpop.f32.mrb[0].mxu0
  %v1376 = vadd.f32 0.0, %v1375
  %v1377 = vpop.f32.mrb[0].mxu0
  %1378 = vmatprep.mubr.f32.mxu0 0.0
  %1379 = vmatmul.mubr.f32.gmra.mrb[0].mxu0 %v1216
  %v1380 = vpop.f32.mrb[0].mxu0
  %v1381 = vadd.f32 0.0, %v1380
  %v1382 = vpop.f32.mrb[0].mxu0
  %1383 = vmatprep.mubr.f32.mxu0 0.0
  %1384 = vmatmul.mubr.f32.gmra.mrb[0].mxu0 %v1217
  %v1385 = vpop.f32.mrb[0].mxu0
  %v1386 = vadd.f32 0.0, %v1385
  %v1387 = vpop.f32.mrb[0].mxu0
  %1388 = vmatprep.mubr.f32.mxu0 0.0
  %1389 = vmatmul.mubr.f32.gmra.mrb[0].mxu0 %v1218
  %v1390 = vpop.f32.mrb[0].mxu0
  %v1391 = vadd.f32 0.0, %v1390
  %v1392 = vpop.f32.mrb[0].mxu0
  %1393 = vmatprep.mubr.f32.mxu0 0.0
  %1394 = vmatmul.mubr.f32.gmra.mrb[0].mxu0 %v1219
  %v1395 = vpop.f32.mrb[0].mxu0
  %v1396 = vadd.f32 0.0, %v1395
  %v1397 = vpop.f32.mrb[0].mxu0
  %1398 = vmatprep.mubr.f32.mxu0 0.0
  %1399 = vmatmul.mubr.f32.gmra.mrb[0].mxu0 %v1220
  %v1400 = vpop.f32.mrb[0].mxu0
  %v1401 = vadd.f32 0.0, %v1400
  %v1402 = vpop.f32.mrb[0].mxu0
  %1403 = vmatprep.mubr.f32.mxu0 0.0
  %1404 = vmatmul.mubr.f32.gmra.mrb[0].mxu0 %v1221
  %v1405 = vpop.f32.mrb[0].mxu0
  %v1406 = vadd.f32 0.0, %v1405
  %v1407 = vpop.f32.mrb[0].mxu0
  %1408 = vmatprep.mubr.f32.mxu0 0.0
  %1409 = vmatmul.mubr.f32.gmra.mrb[0].mxu0 %v1222
  %v1410 = vpop.f32.mrb[0].mxu0
  %v1411 = vadd.f32 0.0, %v1410
  %v1412 = vpop.f32.mrb[0].mxu0
  %1413 = vmatprep.mubr.f32.mxu0 0.0
  %1414 = vmatmul.mubr.f32.gmra.mrb[0].mxu0 %v1223
  %v1415 = vpop.f32.mrb[0].mxu0
  %v1416 = vadd.f32 0.0, %v1415
  %v1417 = vpop.f32.mrb[0].mxu0
  %1418 = vmatprep.mubr.f32.mxu0 0.0
  %1419 = vmatmul.mubr.f32.gmra.mrb[0].mxu0 %v1224
  %v1420 = vpop.f32.mrb[0].mxu0
  %v1421 = vadd.f32 0.0, %v1420
  %v1422 = vpop.f32.mrb[0].mxu0
  %1423 = vmatprep.mubr.f32.mxu0 0.0
  %1424 = vmatmul.mubr.f32.gmra.mrb[0].mxu0 %v1225
  %v1425 = vpop.f32.mrb[0].mxu0
  %v1426 = vadd.f32 0.0, %v1425
  %v1427 = vpop.f32.mrb[0].mxu0
  %1428 = vmatprep.mubr.f32.mxu0 0.0
  %1429 = vmatmul.mubr.f32.gmra.mrb[0].mxu0 %v1226
  %v1430 = vpop.f32.mrb[0].mxu0
  %v1431 = vadd.f32 0.0, %v1430
  %v1432 = vpop.f32.mrb[0].mxu0
  %1433 = vmatprep.mubr.f32.mxu0 0.0
  %1434 = vmatmul.mubr.f32.gmra.mrb[0].mxu0 %v1227
  %v1435 = vpop.f32.mrb[0].mxu0
  %v1436 = vadd.f32 0.0, %v1435
  %v1437 = vpop.f32.mrb[0].mxu0
  %1438 = vmatprep.mubr.f32.mxu0 0.0
  %1439 = vmatmul.mubr.f32.gmra.mrb[0].mxu0 %v1228
  %v1440 = vpop.f32.mrb[0].mxu0
  %v1441 = vadd.f32 0.0, %v1440
  %v1442 = vpop.f32.mrb[0].mxu0
  %1443 = vmatprep.mubr.f32.mxu0 0.0
  %1444 = vmatmul.mubr.f32.gmra.mrb[0].mxu0 %v1229
  %v1445 = vpop.f32.mrb[0].mxu0
  %v1446 = vadd.f32 0.0, %v1445
  %v1447 = vpop.f32.mrb[0].mxu0
  %1448 = vmatprep.mubr.f32.mxu0 0.0
  %1449 = vmatmul.mubr.f32.gmra.mrb[0].mxu0 %v1230
  %v1450 = vpop.f32.mrb[0].mxu0
  %v1451 = vadd.f32 0.0, %v1450
  %v1452 = vpop.f32.mrb[0].mxu0
  %1453 = vmatprep.mubr.f32.mxu0 0.0
  %1454 = vmatmul.mubr.f32.gmra.mrb[0].mxu0 %v1231
  %v1455 = vpop.f32.mrb[0].mxu0
  %v1456 = vadd.f32 0.0, %v1455
  %v1457 = vpop.f32.mrb[0].mxu0
  %1458 = vdwg.mxu0
  %1460 = vset.pattern.permute.xlu0 0
  %1461 = vperm.xlu0 %1460, %v1137
  %v1462 = vpop.permute.xlu0 %1461
  %1465 = vset.pattern.permute.xlu0 0
  %1466 = vperm.xlu0 %1465, %v1139
  %v1467 = vpop.permute.xlu0 %1466
  %1470 = vset.pattern.permute.xlu0 0
  %1471 = vperm.xlu0 %1470, %v1141
  %v1472 = vpop.permute.xlu0 %1471
  %1475 = vset.pattern.permute.xlu0 0
  %1476 = vperm.xlu0 %1475, %v1143
  %v1477 = vpop.permute.xlu0 %1476
  %1480 = vset.pattern.permute.xlu0 0
  %1481 = vperm.xlu0 %1480, %v1145
  %v1482 = vpop.permute.xlu0 %1481
  %1485 = vset.pattern.permute.xlu0 0
  %1486 = vperm.xlu0 %1485, %v1147
  %v1487 = vpop.permute.xlu0 %1486
  %1490 = vset.pattern.permute.xlu0 0
  %1491 = vperm.xlu0 %1490, %v1149
  %v1492 = vpop.permute.xlu0 %1491
  %1495 = vset.pattern.permute.xlu0 0
  %1496 = vperm.xlu0 %1495, %v1151
  %v1497 = vpop.permute.xlu0 %1496
  %1500 = vset.pattern.permute.xlu0 0
  %1501 = vperm.xlu0 %1500, %v1153
  %v1502 = vpop.permute.xlu0 %1501
  %1505 = vset.pattern.permute.xlu0 0
  %1506 = vperm.xlu0 %1505, %v1155
  %v1507 = vpop.permute.xlu0 %1506
  %1510 = vset.pattern.permute.xlu0 0
  %1511 = vperm.xlu0 %1510, %v1157
  %v1512 = vpop.permute.xlu0 %1511
  %1515 = vset.pattern.permute.xlu0 0
  %1516 = vperm.xlu0 %1515, %v1159
  %v1517 = vpop.permute.xlu0 %1516
  %1520 = vset.pattern.permute.xlu0 0
  %1521 = vperm.xlu0 %1520, %v1161
  %v1522 = vpop.permute.xlu0 %1521
  %1525 = vset.pattern.permute.xlu0 0
  %1526 = vperm.xlu0 %1525, %v1163
  %v1527 = vpop.permute.xlu0 %1526
  %1530 = vset.pattern.permute.xlu0 0
  %1531 = vperm.xlu0 %1530, %v1165
  %v1532 = vpop.permute.xlu0 %1531
  %1535 = vset.pattern.permute.xlu0 0
  %1536 = vperm.xlu0 %1535, %v1167
  %v1537 = vpop.permute.xlu0 %1536
  %1540 = vset.pattern.permute.xlu0 0
  %1541 = vperm.xlu0 %1540, %v1169
  %v1542 = vpop.permute.xlu0 %1541
  %1545 = vset.pattern.permute.xlu0 0
  %1546 = vperm.xlu0 %1545, %v1171
  %v1547 = vpop.permute.xlu0 %1546
  %1550 = vset.pattern.permute.xlu0 0
  %1551 = vperm.xlu0 %1550, %v1173
  %v1552 = vpop.permute.xlu0 %1551
  %1555 = vset.pattern.permute.xlu0 0
  %1556 = vperm.xlu0 %1555, %v1175
  %v1557 = vpop.permute.xlu0 %1556
  %1560 = vset.pattern.permute.xlu0 0
  %1561 = vperm.xlu0 %1560, %v1177
  %v1562 = vpop.permute.xlu0 %1561
  %1565 = vset.pattern.permute.xlu0 0
  %1566 = vperm.xlu0 %1565, %v1179
  %v1567 = vpop.permute.xlu0 %1566
  %1570 = vset.pattern.permute.xlu0 0
  %1571 = vperm.xlu0 %1570, %v1181
  %v1572 = vpop.permute.xlu0 %1571
  %1575 = vset.pattern.permute.xlu0 0
  %1576 = vperm.xlu0 %1575, %v1183
  %v1577 = vpop.permute.xlu0 %1576
  %1580 = vset.pattern.permute.xlu0 0
  %1581 = vperm.xlu0 %1580, %v1185
  %v1582 = vpop.permute.xlu0 %1581
  %1585 = vset.pattern.permute.xlu0 0
  %1586 = vperm.xlu0 %1585, %v1187
  %v1587 = vpop.permute.xlu0 %1586
  %1590 = vset.pattern.permute.xlu0 0
  %1591 = vperm.xlu0 %1590, %v1189
  %v1592 = vpop.permute.xlu0 %1591
  %1595 = vset.pattern.permute.xlu0 0
  %1596 = vperm.xlu0 %1595, %v1191
  %v1597 = vpop.permute.xlu0 %1596
  %1600 = vset.pattern.permute.xlu0 0
  %1601 = vperm.xlu0 %1600, %v1193
  %v1602 = vpop.permute.xlu0 %1601
  %1605 = vset.pattern.permute.xlu0 0
  %1606 = vperm.xlu0 %1605, %v1195
  %v1607 = vpop.permute.xlu0 %1606
  %1610 = vset.pattern.permute.xlu0 0
  %1611 = vperm.xlu0 %1610, %v1197
  %v1612 = vpop.permute.xlu0 %1611
  %1615 = vset.pattern.permute.xlu0 0
  %1616 = vperm.xlu0 %1615, %v1199
  %v1617 = vpop.permute.xlu0 %1616
  %v1619 = vmul.f32 %v1462, %v1301
  %v1620 = vmul.f32 %v1467, %v1306
  %v1621 = vmul.f32 %v1472, %v1311
  %v1622 = vmul.f32 %v1477, %v1316
  %v1623 = vmul.f32 %v1482, %v1321
  %v1624 = vmul.f32 %v1487, %v1326
  %v1625 = vmul.f32 %v1492, %v1331
  %v1626 = vmul.f32 %v1497, %v1336
  %v1627 = vmul.f32 %v1502, %v1341
  %v1628 = vmul.f32 %v1507, %v1346
  %v1629 = vmul.f32 %v1512, %v1351
  %v1630 = vmul.f32 %v1517, %v1356
  %v1631 = vmul.f32 %v1522, %v1361
  %v1632 = vmul.f32 %v1527, %v1366
  %v1633 = vmul.f32 %v1532, %v1371
  %v1634 = vmul.f32 %v1537, %v1376
  %v1635 = vmul.f32 %v1542, %v1381
  %v1636 = vmul.f32 %v1547, %v1386
  %v1637 = vmul.f32 %v1552, %v1391
  %v1638 = vmul.f32 %v1557, %v1396
  %v1639 = vmul.f32 %v1562, %v1401
  %v1640 = vmul.f32 %v1567, %v1406
  %v1641 = vmul.f32 %v1572, %v1411
  %v1642 = vmul.f32 %v1577, %v1416
  %v1643 = vmul.f32 %v1582, %v1421
  %v1644 = vmul.f32 %v1587, %v1426
  %v1645 = vmul.f32 %v1592, %v1431
  %v1646 = vmul.f32 %v1597, %v1436
  %v1647 = vmul.f32 %v1602, %v1441
  %v1648 = vmul.f32 %v1607, %v1446
  %v1649 = vmul.f32 %v1612, %v1451
  %v1650 = vmul.f32 %v1617, %v1456
  %v1651 = vld [vmem:[%s2] sm:$0xff]
  %v1652 = vld [vmem:[%s2 + $0x8] sm:$0xff]
  %v1653 = vld [vmem:[%s2 + $0x10] sm:$0xff]
  %v1654 = vld [vmem:[%s2 + $0x18] sm:$0xff]
  %v1655 = vld [vmem:[%s2 + $0x20] sm:$0xff]
  %v1656 = vld [vmem:[%s2 + $0x28] sm:$0xff]
  %v1657 = vld [vmem:[%s2 + $0x30] sm:$0xff]
  %v1658 = vld [vmem:[%s2 + $0x38] sm:$0xff]
  %v1659 = vld [vmem:[%s2 + $0x40] sm:$0xff]
  %v1660 = vld [vmem:[%s2 + $0x48] sm:$0xff]
  %v1661 = vld [vmem:[%s2 + $0x50] sm:$0xff]
  %v1662 = vld [vmem:[%s2 + $0x58] sm:$0xff]
  %v1663 = vld [vmem:[%s2 + $0x60] sm:$0xff]
  %v1664 = vld [vmem:[%s2 + $0x68] sm:$0xff]
  %v1665 = vld [vmem:[%s2 + $0x70] sm:$0xff]
  %v1666 = vld [vmem:[%s2 + $0x78] sm:$0xff]
  %v1667 = vld [vmem:[%s2 + $0x80] sm:$0xff]
  %v1668 = vld [vmem:[%s2 + $0x88] sm:$0xff]
  %v1669 = vld [vmem:[%s2 + $0x90] sm:$0xff]
  %v1670 = vld [vmem:[%s2 + $0x98] sm:$0xff]
  %v1671 = vld [vmem:[%s2 + $0xa0] sm:$0xff]
  %v1672 = vld [vmem:[%s2 + $0xa8] sm:$0xff]
  %v1673 = vld [vmem:[%s2 + $0xb0] sm:$0xff]
  %v1674 = vld [vmem:[%s2 + $0xb8] sm:$0xff]
  %v1675 = vld [vmem:[%s2 + $0xc0] sm:$0xff]
  %v1676 = vld [vmem:[%s2 + $0xc8] sm:$0xff]
  %v1677 = vld [vmem:[%s2 + $0xd0] sm:$0xff]
  %v1678 = vld [vmem:[%s2 + $0xd8] sm:$0xff]
  %v1679 = vld [vmem:[%s2 + $0xe0] sm:$0xff]
  %v1680 = vld [vmem:[%s2 + $0xe8] sm:$0xff]
  %v1681 = vld [vmem:[%s2 + $0xf0] sm:$0xff]
  %v1682 = vld [vmem:[%s2 + $0xf8] sm:$0xff]
  %v1683 = vmul.f32 %v1619, %v1651
  %v1684 = vmul.f32 %v1620, %v1652
  %v1685 = vmul.f32 %v1621, %v1653
  %v1686 = vmul.f32 %v1622, %v1654
  %v1687 = vmul.f32 %v1623, %v1655
  %v1688 = vmul.f32 %v1624, %v1656
  %v1689 = vmul.f32 %v1625, %v1657
  %v1690 = vmul.f32 %v1626, %v1658
  %v1691 = vmul.f32 %v1627, %v1659
  %v1692 = vmul.f32 %v1628, %v1660
  %v1693 = vmul.f32 %v1629, %v1661
  %v1694 = vmul.f32 %v1630, %v1662
  %v1695 = vmul.f32 %v1631, %v1663
  %v1696 = vmul.f32 %v1632, %v1664
  %v1697 = vmul.f32 %v1633, %v1665
  %v1698 = vmul.f32 %v1634, %v1666
  %v1699 = vmul.f32 %v1635, %v1667
  %v1700 = vmul.f32 %v1636, %v1668
  %v1701 = vmul.f32 %v1637, %v1669
  %v1702 = vmul.f32 %v1638, %v1670
  %v1703 = vmul.f32 %v1639, %v1671
  %v1704 = vmul.f32 %v1640, %v1672
  %v1705 = vmul.f32 %v1641, %v1673
  %v1706 = vmul.f32 %v1642, %v1674
  %v1707 = vmul.f32 %v1643, %v1675
  %v1708 = vmul.f32 %v1644, %v1676
  %v1709 = vmul.f32 %v1645, %v1677
  %v1710 = vmul.f32 %v1646, %v1678
  %v1711 = vmul.f32 %v1647, %v1679
  %v1712 = vmul.f32 %v1648, %v1680
  %v1713 = vmul.f32 %v1649, %v1681
  %v1714 = vmul.f32 %v1650, %v1682
  %v1715 = vld [vmem:[%s8] sm:$0xff]
  %v1716 = vld [vmem:[%s8 + $0x8] sm:$0xff]
  %v1717 = vld [vmem:[%s8 + $0x10] sm:$0xff]
  %v1718 = vld [vmem:[%s8 + $0x18] sm:$0xff]
  %v1719 = vld [vmem:[%s8 + $0x20] sm:$0xff]
  %v1720 = vld [vmem:[%s8 + $0x28] sm:$0xff]
  %v1721 = vld [vmem:[%s8 + $0x30] sm:$0xff]
  %v1722 = vld [vmem:[%s8 + $0x38] sm:$0xff]
  %v1723 = vld [vmem:[%s9] sm:$0xf]
  %v1725 = vlaneseq
  %v1726 = vshrl.u32 %v1725, 7
  %v1727 = vsub.s32 0, %v1726
  %v1728 = vrot.slane %v1723, %v1727
  %v1729 = vlaneseq
  %v1730 = vshrl.u32 %v1729, 7
  %v1731 = vsub.s32 1, %v1730
  %v1732 = vrot.slane %v1723, %v1731
  %v1733 = vlaneseq
  %v1734 = vshrl.u32 %v1733, 7
  %v1735 = vsub.s32 2, %v1734
  %v1736 = vrot.slane %v1723, %v1735
  %v1737 = vlaneseq
  %v1738 = vshrl.u32 %v1737, 7
  %v1739 = vsub.s32 3, %v1738
  %v1740 = vrot.slane %v1723, %v1739
  %vm1745 = vcmask 130048
  %v1747 = vsel %vm1745, %v1683, 0
  %v1750 = vsel %vm1745, %v1684, 0
  %v1753 = vsel %vm1745, %v1685, 0
  %v1756 = vsel %vm1745, %v1686, 0
  %v1759 = vsel %vm1745, %v1687, 0
  %v1762 = vsel %vm1745, %v1688, 0
  %v1765 = vsel %vm1745, %v1689, 0
  %v1768 = vsel %vm1745, %v1690, 0
  %v1771 = vsel %vm1745, %v1691, 0
  %v1774 = vsel %vm1745, %v1692, 0
  %v1777 = vsel %vm1745, %v1693, 0
  %v1780 = vsel %vm1745, %v1694, 0
  %v1783 = vsel %vm1745, %v1695, 0
  %v1786 = vsel %vm1745, %v1696, 0
  %v1789 = vsel %vm1745, %v1697, 0
  %v1792 = vsel %vm1745, %v1698, 0
  %v1795 = vsel %vm1745, %v1699, 0
  %v1798 = vsel %vm1745, %v1700, 0
  %v1801 = vsel %vm1745, %v1701, 0
  %v1804 = vsel %vm1745, %v1702, 0
  %v1807 = vsel %vm1745, %v1703, 0
  %v1810 = vsel %vm1745, %v1704, 0
  %v1813 = vsel %vm1745, %v1705, 0
  %v1816 = vsel %vm1745, %v1706, 0
  %v1819 = vsel %vm1745, %v1707, 0
  %v1822 = vsel %vm1745, %v1708, 0
  %v1825 = vsel %vm1745, %v1709, 0
  %v1828 = vsel %vm1745, %v1710, 0
  %v1831 = vsel %vm1745, %v1711, 0
  %v1834 = vsel %vm1745, %v1712, 0
  %v1837 = vsel %vm1745, %v1713, 0
  %v1840 = vsel %vm1745, %v1714, 0
  %1842 = vmatprep.subr.mxu0 %v1716
  %1843 = vmatpush1.msra.mxu0 %v1715
  %1844 = vmatprep.subr.mxu0 %v1720
  %1845 = vmatpush1.msra.mxu0 %v1719
  %1846 = vmatprep.subr.mxu0 0.0
  %1847 = vmatpush1.msra.mxu0 0.0
  %1848 = vmatprep.subr.mxu0 0.0
  %1849 = vmatpush1.msra.mxu0 0.0
  %1850 = vmatprep.subr.mxu0 0.0
  %1851 = vmatpush1.msra.mxu0 0.0
  %1852 = vmatprep.subr.mxu0 0.0
  %1853 = vmatpush1.msra.mxu0 0.0
  %1854 = vmatprep.subr.mxu0 0.0
  %1855 = vmatpush1.msra.mxu0 0.0
  %1856 = vmatprep.subr.mxu0 0.0
  %1857 = vmatpush1.msra.mxu0 0.0
  %1858 = vmatprep.subr.mxu0 0.0
  %1859 = vmatpush1.msra.mxu0 0.0
  %1860 = vmatprep.subr.mxu0 0.0
  %1861 = vmatpush1.msra.mxu0 0.0
  %1862 = vmatprep.subr.mxu0 0.0
  %1863 = vmatpush1.msra.mxu0 0.0
  %1864 = vmatprep.subr.mxu0 0.0
  %1865 = vmatpush1.msra.mxu0 0.0
  %1866 = vmatprep.subr.mxu0 0.0
  %1867 = vmatpush1.msra.mxu0 0.0
  %1868 = vmatprep.subr.mxu0 0.0
  %1869 = vmatpush1.msra.mxu0 0.0
  %1870 = vmatprep.subr.mxu0 0.0
  %1871 = vmatpush1.msra.mxu0 0.0
  %1872 = vmatprep.subr.mxu0 0.0
  %1873 = vmatpush1.msra.mxu0 0.0
  %1874 = vmatprep.subr.mxu0 0.0
  %1875 = vmatpush1.msra.mxu0 0.0
  %1876 = vmatprep.subr.mxu0 0.0
  %1877 = vmatpush1.msra.mxu0 0.0
  %1878 = vmatprep.subr.mxu0 0.0
  %1879 = vmatpush1.msra.mxu0 0.0
  %1880 = vmatprep.subr.mxu0 0.0
  %1881 = vmatpush1.msra.mxu0 0.0
  %1882 = vmatprep.subr.mxu0 0.0
  %1883 = vmatpush1.msra.mxu0 0.0
  %1884 = vmatprep.subr.mxu0 0.0
  %1885 = vmatpush1.msra.mxu0 0.0
  %1886 = vmatprep.subr.mxu0 0.0
  %1887 = vmatpush1.msra.mxu0 0.0
  %1888 = vmatprep.subr.mxu0 0.0
  %1889 = vmatpush1.msra.mxu0 0.0
  %1890 = vmatprep.subr.mxu0 0.0
  %1891 = vmatpush1.msra.mxu0 0.0
  %1892 = vmatprep.subr.mxu0 0.0
  %1893 = vmatpush1.msra.mxu0 0.0
  %1894 = vmatprep.subr.mxu0 0.0
  %1895 = vmatpush1.msra.mxu0 0.0
  %1896 = vmatprep.subr.mxu0 0.0
  %1897 = vmatpush1.msra.mxu0 0.0
  %1898 = vmatprep.subr.mxu0 0.0
  %1899 = vmatpush1.msra.mxu0 0.0
  %1900 = vmatprep.subr.mxu0 0.0
  %1901 = vmatpush1.msra.mxu0 0.0
  %1902 = vmatprep.subr.mxu0 0.0
  %1903 = vmatpush1.msra.mxu0 0.0
  %1904 = vmatprep.subr.mxu0 0.0
  %1905 = vmatpush1.msra.mxu0 0.0
  %1906 = vmatprep.mubr.f32.mxu0 0.0
  %1907 = vmatmul.mubr.f32.gmra.mrb[0].mxu0 %v1747
  %v1908 = vpop.f32.mrb[0].mxu0
  %v1909 = vadd.f32 %v1728, %v1908
  %v1910 = vpop.f32.mrb[0].mxu0
  %v1911 = vadd.f32 %v1732, %v1910
  %1912 = vmatprep.mubr.f32.mxu0 0.0
  %1913 = vmatmul.mubr.f32.gmra.mrb[0].mxu0 %v1750
  %v1914 = vpop.f32.mrb[0].mxu0
  %v1915 = vadd.f32 %v1728, %v1914
  %v1916 = vpop.f32.mrb[0].mxu0
  %v1917 = vadd.f32 %v1732, %v1916
  %1918 = vmatprep.mubr.f32.mxu0 0.0
  %1919 = vmatmul.mubr.f32.gmra.mrb[0].mxu0 %v1753
  %v1920 = vpop.f32.mrb[0].mxu0
  %v1921 = vadd.f32 %v1728, %v1920
  %v1922 = vpop.f32.mrb[0].mxu0
  %v1923 = vadd.f32 %v1732, %v1922
  %1924 = vmatprep.mubr.f32.mxu0 0.0
  %1925 = vmatmul.mubr.f32.gmra.mrb[0].mxu0 %v1756
  %v1926 = vpop.f32.mrb[0].mxu0
  %v1927 = vadd.f32 %v1728, %v1926
  %v1928 = vpop.f32.mrb[0].mxu0
  %v1929 = vadd.f32 %v1732, %v1928
  %1930 = vmatprep.mubr.f32.mxu0 0.0
  %1931 = vmatmul.mubr.f32.gmra.mrb[0].mxu0 %v1759
  %v1932 = vpop.f32.mrb[0].mxu0
  %v1933 = vadd.f32 %v1728, %v1932
  %v1934 = vpop.f32.mrb[0].mxu0
  %v1935 = vadd.f32 %v1732, %v1934
  %1936 = vmatprep.mubr.f32.mxu0 0.0
  %1937 = vmatmul.mubr.f32.gmra.mrb[0].mxu0 %v1762
  %v1938 = vpop.f32.mrb[0].mxu0
  %v1939 = vadd.f32 %v1728, %v1938
  %v1940 = vpop.f32.mrb[0].mxu0
  %v1941 = vadd.f32 %v1732, %v1940
  %1942 = vmatprep.mubr.f32.mxu0 0.0
  %1943 = vmatmul.mubr.f32.gmra.mrb[0].mxu0 %v1765
  %v1944 = vpop.f32.mrb[0].mxu0
  %v1945 = vadd.f32 %v1728, %v1944
  %v1946 = vpop.f32.mrb[0].mxu0
  %v1947 = vadd.f32 %v1732, %v1946
  %1948 = vmatprep.mubr.f32.mxu0 0.0
  %1949 = vmatmul.mubr.f32.gmra.mrb[0].mxu0 %v1768
  %v1950 = vpop.f32.mrb[0].mxu0
  %v1951 = vadd.f32 %v1728, %v1950
  %v1952 = vpop.f32.mrb[0].mxu0
  %v1953 = vadd.f32 %v1732, %v1952
  %1954 = vmatprep.mubr.f32.mxu0 0.0
  %1955 = vmatmul.mubr.f32.gmra.mrb[0].mxu0 %v1771
  %v1956 = vpop.f32.mrb[0].mxu0
  %v1957 = vadd.f32 %v1728, %v1956
  %v1958 = vpop.f32.mrb[0].mxu0
  %v1959 = vadd.f32 %v1732, %v1958
  %1960 = vmatprep.mubr.f32.mxu0 0.0
  %1961 = vmatmul.mubr.f32.gmra.mrb[0].mxu0 %v1774
  %v1962 = vpop.f32.mrb[0].mxu0
  %v1963 = vadd.f32 %v1728, %v1962
  %v1964 = vpop.f32.mrb[0].mxu0
  %v1965 = vadd.f32 %v1732, %v1964
  %1966 = vmatprep.mubr.f32.mxu0 0.0
  %1967 = vmatmul.mubr.f32.gmra.mrb[0].mxu0 %v1777
  %v1968 = vpop.f32.mrb[0].mxu0
  %v1969 = vadd.f32 %v1728, %v1968
  %v1970 = vpop.f32.mrb[0].mxu0
  %v1971 = vadd.f32 %v1732, %v1970
  %1972 = vmatprep.mubr.f32.mxu0 0.0
  %1973 = vmatmul.mubr.f32.gmra.mrb[0].mxu0 %v1780
  %v1974 = vpop.f32.mrb[0].mxu0
  %v1975 = vadd.f32 %v1728, %v1974
  %v1976 = vpop.f32.mrb[0].mxu0
  %v1977 = vadd.f32 %v1732, %v1976
  %1978 = vmatprep.mubr.f32.mxu0 0.0
  %1979 = vmatmul.mubr.f32.gmra.mrb[0].mxu0 %v1783
  %v1980 = vpop.f32.mrb[0].mxu0
  %v1981 = vadd.f32 %v1728, %v1980
  %v1982 = vpop.f32.mrb[0].mxu0
  %v1983 = vadd.f32 %v1732, %v1982
  %1984 = vmatprep.mubr.f32.mxu0 0.0
  %1985 = vmatmul.mubr.f32.gmra.mrb[0].mxu0 %v1786
  %v1986 = vpop.f32.mrb[0].mxu0
  %v1987 = vadd.f32 %v1728, %v1986
  %v1988 = vpop.f32.mrb[0].mxu0
  %v1989 = vadd.f32 %v1732, %v1988
  %1990 = vmatprep.mubr.f32.mxu0 0.0
  %1991 = vmatmul.mubr.f32.gmra.mrb[0].mxu0 %v1789
  %v1992 = vpop.f32.mrb[0].mxu0
  %v1993 = vadd.f32 %v1728, %v1992
  %v1994 = vpop.f32.mrb[0].mxu0
  %v1995 = vadd.f32 %v1732, %v1994
  %1996 = vmatprep.mubr.f32.mxu0 0.0
  %1997 = vmatmul.mubr.f32.gmra.mrb[0].mxu0 %v1792
  %v1998 = vpop.f32.mrb[0].mxu0
  %v1999 = vadd.f32 %v1728, %v1998
  %v2000 = vpop.f32.mrb[0].mxu0
  %v2001 = vadd.f32 %v1732, %v2000
  %2002 = vmatprep.mubr.f32.mxu0 0.0
  %2003 = vmatmul.mubr.f32.gmra.mrb[0].mxu0 %v1795
  %v2004 = vpop.f32.mrb[0].mxu0
  %v2005 = vadd.f32 %v1728, %v2004
  %v2006 = vpop.f32.mrb[0].mxu0
  %v2007 = vadd.f32 %v1732, %v2006
  %2008 = vmatprep.mubr.f32.mxu0 0.0
  %2009 = vmatmul.mubr.f32.gmra.mrb[0].mxu0 %v1798
  %v2010 = vpop.f32.mrb[0].mxu0
  %v2011 = vadd.f32 %v1728, %v2010
  %v2012 = vpop.f32.mrb[0].mxu0
  %v2013 = vadd.f32 %v1732, %v2012
  %2014 = vmatprep.mubr.f32.mxu0 0.0
  %2015 = vmatmul.mubr.f32.gmra.mrb[0].mxu0 %v1801
  %v2016 = vpop.f32.mrb[0].mxu0
  %v2017 = vadd.f32 %v1728, %v2016
  %v2018 = vpop.f32.mrb[0].mxu0
  %v2019 = vadd.f32 %v1732, %v2018
  %2020 = vmatprep.mubr.f32.mxu0 0.0
  %2021 = vmatmul.mubr.f32.gmra.mrb[0].mxu0 %v1804
  %v2022 = vpop.f32.mrb[0].mxu0
  %v2023 = vadd.f32 %v1728, %v2022
  %v2024 = vpop.f32.mrb[0].mxu0
  %v2025 = vadd.f32 %v1732, %v2024
  %2026 = vmatprep.mubr.f32.mxu0 0.0
  %2027 = vmatmul.mubr.f32.gmra.mrb[0].mxu0 %v1807
  %v2028 = vpop.f32.mrb[0].mxu0
  %v2029 = vadd.f32 %v1728, %v2028
  %v2030 = vpop.f32.mrb[0].mxu0
  %v2031 = vadd.f32 %v1732, %v2030
  %2032 = vmatprep.mubr.f32.mxu0 0.0
  %2033 = vmatmul.mubr.f32.gmra.mrb[0].mxu0 %v1810
  %v2034 = vpop.f32.mrb[0].mxu0
  %v2035 = vadd.f32 %v1728, %v2034
  %v2036 = vpop.f32.mrb[0].mxu0
  %v2037 = vadd.f32 %v1732, %v2036
  %2038 = vmatprep.mubr.f32.mxu0 0.0
  %2039 = vmatmul.mubr.f32.gmra.mrb[0].mxu0 %v1813
  %v2040 = vpop.f32.mrb[0].mxu0
  %v2041 = vadd.f32 %v1728, %v2040
  %v2042 = vpop.f32.mrb[0].mxu0
  %v2043 = vadd.f32 %v1732, %v2042
  %2044 = vmatprep.mubr.f32.mxu0 0.0
  %2045 = vmatmul.mubr.f32.gmra.mrb[0].mxu0 %v1816
  %v2046 = vpop.f32.mrb[0].mxu0
  %v2047 = vadd.f32 %v1728, %v2046
  %v2048 = vpop.f32.mrb[0].mxu0
  %v2049 = vadd.f32 %v1732, %v2048
  %2050 = vmatprep.mubr.f32.mxu0 0.0
  %2051 = vmatmul.mubr.f32.gmra.mrb[0].mxu0 %v1819
  %v2052 = vpop.f32.mrb[0].mxu0
  %v2053 = vadd.f32 %v1728, %v2052
  %v2054 = vpop.f32.mrb[0].mxu0
  %v2055 = vadd.f32 %v1732, %v2054
  %2056 = vmatprep.mubr.f32.mxu0 0.0
  %2057 = vmatmul.mubr.f32.gmra.mrb[0].mxu0 %v1822
  %v2058 = vpop.f32.mrb[0].mxu0
  %v2059 = vadd.f32 %v1728, %v2058
  %v2060 = vpop.f32.mrb[0].mxu0
  %v2061 = vadd.f32 %v1732, %v2060
  %2062 = vmatprep.mubr.f32.mxu0 0.0
  %2063 = vmatmul.mubr.f32.gmra.mrb[0].mxu0 %v1825
  %v2064 = vpop.f32.mrb[0].mxu0
  %v2065 = vadd.f32 %v1728, %v2064
  %v2066 = vpop.f32.mrb[0].mxu0
  %v2067 = vadd.f32 %v1732, %v2066
  %2068 = vmatprep.mubr.f32.mxu0 0.0
  %2069 = vmatmul.mubr.f32.gmra.mrb[0].mxu0 %v1828
  %v2070 = vpop.f32.mrb[0].mxu0
  %v2071 = vadd.f32 %v1728, %v2070
  %v2072 = vpop.f32.mrb[0].mxu0
  %v2073 = vadd.f32 %v1732, %v2072
  %2074 = vmatprep.mubr.f32.mxu0 0.0
  %2075 = vmatmul.mubr.f32.gmra.mrb[0].mxu0 %v1831
  %v2076 = vpop.f32.mrb[0].mxu0
  %v2077 = vadd.f32 %v1728, %v2076
  %v2078 = vpop.f32.mrb[0].mxu0
  %v2079 = vadd.f32 %v1732, %v2078
  %2080 = vmatprep.mubr.f32.mxu0 0.0
  %2081 = vmatmul.mubr.f32.gmra.mrb[0].mxu0 %v1834
  %v2082 = vpop.f32.mrb[0].mxu0
  %v2083 = vadd.f32 %v1728, %v2082
  %v2084 = vpop.f32.mrb[0].mxu0
  %v2085 = vadd.f32 %v1732, %v2084
  %2086 = vmatprep.mubr.f32.mxu0 0.0
  %2087 = vmatmul.mubr.f32.gmra.mrb[0].mxu0 %v1837
  %v2088 = vpop.f32.mrb[0].mxu0
  %v2089 = vadd.f32 %v1728, %v2088
  %v2090 = vpop.f32.mrb[0].mxu0
  %v2091 = vadd.f32 %v1732, %v2090
  %2092 = vmatprep.mubr.f32.mxu0 0.0
  %2093 = vmatmul.mubr.f32.gmra.mrb[0].mxu0 %v1840
  %v2094 = vpop.f32.mrb[0].mxu0
  %v2095 = vadd.f32 %v1728, %v2094
  %v2096 = vpop.f32.mrb[0].mxu0
  %v2097 = vadd.f32 %v1732, %v2096
  %2098 = vdwg.mxu0
  %2099 = vmatprep.subr.mxu0 %v1718
  %2100 = vmatpush1.msra.mxu0 %v1717
  %2101 = vmatprep.subr.mxu0 %v1722
  %2102 = vmatpush1.msra.mxu0 %v1721
  %2103 = vmatprep.subr.mxu0 0.0
  %2104 = vmatpush1.msra.mxu0 0.0
  %2105 = vmatprep.subr.mxu0 0.0
  %2106 = vmatpush1.msra.mxu0 0.0
  %2107 = vmatprep.subr.mxu0 0.0
  %2108 = vmatpush1.msra.mxu0 0.0
  %2109 = vmatprep.subr.mxu0 0.0
  %2110 = vmatpush1.msra.mxu0 0.0
  %2111 = vmatprep.subr.mxu0 0.0
  %2112 = vmatpush1.msra.mxu0 0.0
  %2113 = vmatprep.subr.mxu0 0.0
  %2114 = vmatpush1.msra.mxu0 0.0
  %2115 = vmatprep.subr.mxu0 0.0
  %2116 = vmatpush1.msra.mxu0 0.0
  %2117 = vmatprep.subr.mxu0 0.0
  %2118 = vmatpush1.msra.mxu0 0.0
  %2119 = vmatprep.subr.mxu0 0.0
  %2120 = vmatpush1.msra.mxu0 0.0
  %2121 = vmatprep.subr.mxu0 0.0
  %2122 = vmatpush1.msra.mxu0 0.0
  %2123 = vmatprep.subr.mxu0 0.0
  %2124 = vmatpush1.msra.mxu0 0.0
  %2125 = vmatprep.subr.mxu0 0.0
  %2126 = vmatpush1.msra.mxu0 0.0
  %2127 = vmatprep.subr.mxu0 0.0
  %2128 = vmatpush1.msra.mxu0 0.0
  %2129 = vmatprep.subr.mxu0 0.0
  %2130 = vmatpush1.msra.mxu0 0.0
  %2131 = vmatprep.subr.mxu0 0.0
  %2132 = vmatpush1.msra.mxu0 0.0
  %2133 = vmatprep.subr.mxu0 0.0
  %2134 = vmatpush1.msra.mxu0 0.0
  %2135 = vmatprep.subr.mxu0 0.0
  %2136 = vmatpush1.msra.mxu0 0.0
  %2137 = vmatprep.subr.mxu0 0.0
  %2138 = vmatpush1.msra.mxu0 0.0
  %2139 = vmatprep.subr.mxu0 0.0
  %2140 = vmatpush1.msra.mxu0 0.0
  %2141 = vmatprep.subr.mxu0 0.0
  %2142 = vmatpush1.msra.mxu0 0.0
  %2143 = vmatprep.subr.mxu0 0.0
  %2144 = vmatpush1.msra.mxu0 0.0
  %2145 = vmatprep.subr.mxu0 0.0
  %2146 = vmatpush1.msra.mxu0 0.0
  %2147 = vmatprep.subr.mxu0 0.0
  %2148 = vmatpush1.msra.mxu0 0.0
  %2149 = vmatprep.subr.mxu0 0.0
  %2150 = vmatpush1.msra.mxu0 0.0
  %2151 = vmatprep.subr.mxu0 0.0
  %2152 = vmatpush1.msra.mxu0 0.0
  %2153 = vmatprep.subr.mxu0 0.0
  %2154 = vmatpush1.msra.mxu0 0.0
  %2155 = vmatprep.subr.mxu0 0.0
  %2156 = vmatpush1.msra.mxu0 0.0
  %2157 = vmatprep.subr.mxu0 0.0
  %2158 = vmatpush1.msra.mxu0 0.0
  %2159 = vmatprep.subr.mxu0 0.0
  %2160 = vmatpush1.msra.mxu0 0.0
  %2161 = vmatprep.subr.mxu0 0.0
  %2162 = vmatpush1.msra.mxu0 0.0
  %2163 = vmatprep.mubr.f32.mxu0 0.0
  %2164 = vmatmul.mubr.f32.gmra.mrb[0].mxu0 %v1747
  %v2165 = vpop.f32.mrb[0].mxu0
  %v2166 = vadd.f32 %v1736, %v2165
  %v2167 = vpop.f32.mrb[0].mxu0
  %v2168 = vadd.f32 %v1740, %v2167
  %2169 = vmatprep.mubr.f32.mxu0 0.0
  %2170 = vmatmul.mubr.f32.gmra.mrb[0].mxu0 %v1750
  %v2171 = vpop.f32.mrb[0].mxu0
  %v2172 = vadd.f32 %v1736, %v2171
  %v2173 = vpop.f32.mrb[0].mxu0
  %v2174 = vadd.f32 %v1740, %v2173
  %2175 = vmatprep.mubr.f32.mxu0 0.0
  %2176 = vmatmul.mubr.f32.gmra.mrb[0].mxu0 %v1753
  %v2177 = vpop.f32.mrb[0].mxu0
  %v2178 = vadd.f32 %v1736, %v2177
  %v2179 = vpop.f32.mrb[0].mxu0
  %v2180 = vadd.f32 %v1740, %v2179
  %2181 = vmatprep.mubr.f32.mxu0 0.0
  %2182 = vmatmul.mubr.f32.gmra.mrb[0].mxu0 %v1756
  %v2183 = vpop.f32.mrb[0].mxu0
  %v2184 = vadd.f32 %v1736, %v2183
  %v2185 = vpop.f32.mrb[0].mxu0
  %v2186 = vadd.f32 %v1740, %v2185
  %2187 = vmatprep.mubr.f32.mxu0 0.0
  %2188 = vmatmul.mubr.f32.gmra.mrb[0].mxu0 %v1759
  %v2189 = vpop.f32.mrb[0].mxu0
  %v2190 = vadd.f32 %v1736, %v2189
  %v2191 = vpop.f32.mrb[0].mxu0
  %v2192 = vadd.f32 %v1740, %v2191
  %2193 = vmatprep.mubr.f32.mxu0 0.0
  %2194 = vmatmul.mubr.f32.gmra.mrb[0].mxu0 %v1762
  %v2195 = vpop.f32.mrb[0].mxu0
  %v2196 = vadd.f32 %v1736, %v2195
  %v2197 = vpop.f32.mrb[0].mxu0
  %v2198 = vadd.f32 %v1740, %v2197
  %2199 = vmatprep.mubr.f32.mxu0 0.0
  %2200 = vmatmul.mubr.f32.gmra.mrb[0].mxu0 %v1765
  %v2201 = vpop.f32.mrb[0].mxu0
  %v2202 = vadd.f32 %v1736, %v2201
  %v2203 = vpop.f32.mrb[0].mxu0
  %v2204 = vadd.f32 %v1740, %v2203
  %2205 = vmatprep.mubr.f32.mxu0 0.0
  %2206 = vmatmul.mubr.f32.gmra.mrb[0].mxu0 %v1768
  %v2207 = vpop.f32.mrb[0].mxu0
  %v2208 = vadd.f32 %v1736, %v2207
  %v2209 = vpop.f32.mrb[0].mxu0
  %v2210 = vadd.f32 %v1740, %v2209
  %2211 = vmatprep.mubr.f32.mxu0 0.0
  %2212 = vmatmul.mubr.f32.gmra.mrb[0].mxu0 %v1771
  %v2213 = vpop.f32.mrb[0].mxu0
  %v2214 = vadd.f32 %v1736, %v2213
  %v2215 = vpop.f32.mrb[0].mxu0
  %v2216 = vadd.f32 %v1740, %v2215
  %2217 = vmatprep.mubr.f32.mxu0 0.0
  %2218 = vmatmul.mubr.f32.gmra.mrb[0].mxu0 %v1774
  %v2219 = vpop.f32.mrb[0].mxu0
  %v2220 = vadd.f32 %v1736, %v2219
  %v2221 = vpop.f32.mrb[0].mxu0
  %v2222 = vadd.f32 %v1740, %v2221
  %2223 = vmatprep.mubr.f32.mxu0 0.0
  %2224 = vmatmul.mubr.f32.gmra.mrb[0].mxu0 %v1777
  %v2225 = vpop.f32.mrb[0].mxu0
  %v2226 = vadd.f32 %v1736, %v2225
  %v2227 = vpop.f32.mrb[0].mxu0
  %v2228 = vadd.f32 %v1740, %v2227
  %2229 = vmatprep.mubr.f32.mxu0 0.0
  %2230 = vmatmul.mubr.f32.gmra.mrb[0].mxu0 %v1780
  %v2231 = vpop.f32.mrb[0].mxu0
  %v2232 = vadd.f32 %v1736, %v2231
  %v2233 = vpop.f32.mrb[0].mxu0
  %v2234 = vadd.f32 %v1740, %v2233
  %2235 = vmatprep.mubr.f32.mxu0 0.0
  %2236 = vmatmul.mubr.f32.gmra.mrb[0].mxu0 %v1783
  %v2237 = vpop.f32.mrb[0].mxu0
  %v2238 = vadd.f32 %v1736, %v2237
  %v2239 = vpop.f32.mrb[0].mxu0
  %v2240 = vadd.f32 %v1740, %v2239
  %2241 = vmatprep.mubr.f32.mxu0 0.0
  %2242 = vmatmul.mubr.f32.gmra.mrb[0].mxu0 %v1786
  %v2243 = vpop.f32.mrb[0].mxu0
  %v2244 = vadd.f32 %v1736, %v2243
  %v2245 = vpop.f32.mrb[0].mxu0
  %v2246 = vadd.f32 %v1740, %v2245
  %2247 = vmatprep.mubr.f32.mxu0 0.0
  %2248 = vmatmul.mubr.f32.gmra.mrb[0].mxu0 %v1789
  %v2249 = vpop.f32.mrb[0].mxu0
  %v2250 = vadd.f32 %v1736, %v2249
  %v2251 = vpop.f32.mrb[0].mxu0
  %v2252 = vadd.f32 %v1740, %v2251
  %2253 = vmatprep.mubr.f32.mxu0 0.0
  %2254 = vmatmul.mubr.f32.gmra.mrb[0].mxu0 %v1792
  %v2255 = vpop.f32.mrb[0].mxu0
  %v2256 = vadd.f32 %v1736, %v2255
  %v2257 = vpop.f32.mrb[0].mxu0
  %v2258 = vadd.f32 %v1740, %v2257
  %2259 = vmatprep.mubr.f32.mxu0 0.0
  %2260 = vmatmul.mubr.f32.gmra.mrb[0].mxu0 %v1795
  %v2261 = vpop.f32.mrb[0].mxu0
  %v2262 = vadd.f32 %v1736, %v2261
  %v2263 = vpop.f32.mrb[0].mxu0
  %v2264 = vadd.f32 %v1740, %v2263
  %2265 = vmatprep.mubr.f32.mxu0 0.0
  %2266 = vmatmul.mubr.f32.gmra.mrb[0].mxu0 %v1798
  %v2267 = vpop.f32.mrb[0].mxu0
  %v2268 = vadd.f32 %v1736, %v2267
  %v2269 = vpop.f32.mrb[0].mxu0
  %v2270 = vadd.f32 %v1740, %v2269
  %2271 = vmatprep.mubr.f32.mxu0 0.0
  %2272 = vmatmul.mubr.f32.gmra.mrb[0].mxu0 %v1801
  %v2273 = vpop.f32.mrb[0].mxu0
  %v2274 = vadd.f32 %v1736, %v2273
  %v2275 = vpop.f32.mrb[0].mxu0
  %v2276 = vadd.f32 %v1740, %v2275
  %2277 = vmatprep.mubr.f32.mxu0 0.0
  %2278 = vmatmul.mubr.f32.gmra.mrb[0].mxu0 %v1804
  %v2279 = vpop.f32.mrb[0].mxu0
  %v2280 = vadd.f32 %v1736, %v2279
  %v2281 = vpop.f32.mrb[0].mxu0
  %v2282 = vadd.f32 %v1740, %v2281
  %2283 = vmatprep.mubr.f32.mxu0 0.0
  %2284 = vmatmul.mubr.f32.gmra.mrb[0].mxu0 %v1807
  %v2285 = vpop.f32.mrb[0].mxu0
  %v2286 = vadd.f32 %v1736, %v2285
  %v2287 = vpop.f32.mrb[0].mxu0
  %v2288 = vadd.f32 %v1740, %v2287
  %2289 = vmatprep.mubr.f32.mxu0 0.0
  %2290 = vmatmul.mubr.f32.gmra.mrb[0].mxu0 %v1810
  %v2291 = vpop.f32.mrb[0].mxu0
  %v2292 = vadd.f32 %v1736, %v2291
  %v2293 = vpop.f32.mrb[0].mxu0
  %v2294 = vadd.f32 %v1740, %v2293
  %2295 = vmatprep.mubr.f32.mxu0 0.0
  %2296 = vmatmul.mubr.f32.gmra.mrb[0].mxu0 %v1813
  %v2297 = vpop.f32.mrb[0].mxu0
  %v2298 = vadd.f32 %v1736, %v2297
  %v2299 = vpop.f32.mrb[0].mxu0
  %v2300 = vadd.f32 %v1740, %v2299
  %2301 = vmatprep.mubr.f32.mxu0 0.0
  %2302 = vmatmul.mubr.f32.gmra.mrb[0].mxu0 %v1816
  %v2303 = vpop.f32.mrb[0].mxu0
  %v2304 = vadd.f32 %v1736, %v2303
  %v2305 = vpop.f32.mrb[0].mxu0
  %v2306 = vadd.f32 %v1740, %v2305
  %2307 = vmatprep.mubr.f32.mxu0 0.0
  %2308 = vmatmul.mubr.f32.gmra.mrb[0].mxu0 %v1819
  %v2309 = vpop.f32.mrb[0].mxu0
  %v2310 = vadd.f32 %v1736, %v2309
  %v2311 = vpop.f32.mrb[0].mxu0
  %v2312 = vadd.f32 %v1740, %v2311
  %2313 = vmatprep.mubr.f32.mxu0 0.0
  %2314 = vmatmul.mubr.f32.gmra.mrb[0].mxu0 %v1822
  %v2315 = vpop.f32.mrb[0].mxu0
  %v2316 = vadd.f32 %v1736, %v2315
  %v2317 = vpop.f32.mrb[0].mxu0
  %v2318 = vadd.f32 %v1740, %v2317
  %2319 = vmatprep.mubr.f32.mxu0 0.0
  %2320 = vmatmul.mubr.f32.gmra.mrb[0].mxu0 %v1825
  %v2321 = vpop.f32.mrb[0].mxu0
  %v2322 = vadd.f32 %v1736, %v2321
  %v2323 = vpop.f32.mrb[0].mxu0
  %v2324 = vadd.f32 %v1740, %v2323
  %2325 = vmatprep.mubr.f32.mxu0 0.0
  %2326 = vmatmul.mubr.f32.gmra.mrb[0].mxu0 %v1828
  %v2327 = vpop.f32.mrb[0].mxu0
  %v2328 = vadd.f32 %v1736, %v2327
  %v2329 = vpop.f32.mrb[0].mxu0
  %v2330 = vadd.f32 %v1740, %v2329
  %2331 = vmatprep.mubr.f32.mxu0 0.0
  %2332 = vmatmul.mubr.f32.gmra.mrb[0].mxu0 %v1831
  %v2333 = vpop.f32.mrb[0].mxu0
  %v2334 = vadd.f32 %v1736, %v2333
  %v2335 = vpop.f32.mrb[0].mxu0
  %v2336 = vadd.f32 %v1740, %v2335
  %2337 = vmatprep.mubr.f32.mxu0 0.0
  %2338 = vmatmul.mubr.f32.gmra.mrb[0].mxu0 %v1834
  %v2339 = vpop.f32.mrb[0].mxu0
  %v2340 = vadd.f32 %v1736, %v2339
  %v2341 = vpop.f32.mrb[0].mxu0
  %v2342 = vadd.f32 %v1740, %v2341
  %2343 = vmatprep.mubr.f32.mxu0 0.0
  %2344 = vmatmul.mubr.f32.gmra.mrb[0].mxu0 %v1837
  %v2345 = vpop.f32.mrb[0].mxu0
  %v2346 = vadd.f32 %v1736, %v2345
  %v2347 = vpop.f32.mrb[0].mxu0
  %v2348 = vadd.f32 %v1740, %v2347
  %2349 = vmatprep.mubr.f32.mxu0 0.0
  %2350 = vmatmul.mubr.f32.gmra.mrb[0].mxu0 %v1840
  %v2351 = vpop.f32.mrb[0].mxu0
  %v2352 = vadd.f32 %v1736, %v2351
  %v2353 = vpop.f32.mrb[0].mxu0
  %v2354 = vadd.f32 %v1740, %v2353
  %2355 = vdwg.mxu0
  %v2356 = vtanh.pop %v1909
  %v2357 = vtanh.pop %v1911
  %v2358 = vtanh.pop %v2166
  %v2359 = vtanh.pop %v2168
  %v2360 = vtanh.pop %v1915
  %v2361 = vtanh.pop %v1917
  %v2362 = vtanh.pop %v2172
  %v2363 = vtanh.pop %v2174
  %v2364 = vtanh.pop %v1921
  %v2365 = vtanh.pop %v1923
  %v2366 = vtanh.pop %v2178
  %v2367 = vtanh.pop %v2180
  %v2368 = vtanh.pop %v1927
  %v2369 = vtanh.pop %v1929
  %v2370 = vtanh.pop %v2184
  %v2371 = vtanh.pop %v2186
  %v2372 = vtanh.pop %v1933
  %v2373 = vtanh.pop %v1935
  %v2374 = vtanh.pop %v2190
  %v2375 = vtanh.pop %v2192
  %v2376 = vtanh.pop %v1939
  %v2377 = vtanh.pop %v1941
  %v2378 = vtanh.pop %v2196
  %v2379 = vtanh.pop %v2198
  %v2380 = vtanh.pop %v1945
  %v2381 = vtanh.pop %v1947
  %v2382 = vtanh.pop %v2202
  %v2383 = vtanh.pop %v2204
  %v2384 = vtanh.pop %v1951
  %v2385 = vtanh.pop %v1953
  %v2386 = vtanh.pop %v2208
  %v2387 = vtanh.pop %v2210
  %v2388 = vtanh.pop %v1957
  %v2389 = vtanh.pop %v1959
  %v2390 = vtanh.pop %v2214
  %v2391 = vtanh.pop %v2216
  %v2392 = vtanh.pop %v1963
  %v2393 = vtanh.pop %v1965
  %v2394 = vtanh.pop %v2220
  %v2395 = vtanh.pop %v2222
  %v2396 = vtanh.pop %v1969
  %v2397 = vtanh.pop %v1971
  %v2398 = vtanh.pop %v2226
  %v2399 = vtanh.pop %v2228
  %v2400 = vtanh.pop %v1975
  %v2401 = vtanh.pop %v1977
  %v2402 = vtanh.pop %v2232
  %v2403 = vtanh.pop %v2234
  %v2404 = vtanh.pop %v1981
  %v2405 = vtanh.pop %v1983
  %v2406 = vtanh.pop %v2238
  %v2407 = vtanh.pop %v2240
  %v2408 = vtanh.pop %v1987
  %v2409 = vtanh.pop %v1989
  %v2410 = vtanh.pop %v2244
  %v2411 = vtanh.pop %v2246
  %v2412 = vtanh.pop %v1993
  %v2413 = vtanh.pop %v1995
  %v2414 = vtanh.pop %v2250
  %v2415 = vtanh.pop %v2252
  %v2416 = vtanh.pop %v1999
  %v2417 = vtanh.pop %v2001
  %v2418 = vtanh.pop %v2256
  %v2419 = vtanh.pop %v2258
  %v2420 = vtanh.pop %v2005
  %v2421 = vtanh.pop %v2007
  %v2422 = vtanh.pop %v2262
  %v2423 = vtanh.pop %v2264
  %v2424 = vtanh.pop %v2011
  %v2425 = vtanh.pop %v2013
  %v2426 = vtanh.pop %v2268
  %v2427 = vtanh.pop %v2270
  %v2428 = vtanh.pop %v2017
  %v2429 = vtanh.pop %v2019
  %v2430 = vtanh.pop %v2274
  %v2431 = vtanh.pop %v2276
  %v2432 = vtanh.pop %v2023
  %v2433 = vtanh.pop %v2025
  %v2434 = vtanh.pop %v2280
  %v2435 = vtanh.pop %v2282
  %v2436 = vtanh.pop %v2029
  %v2437 = vtanh.pop %v2031
  %v2438 = vtanh.pop %v2286
  %v2439 = vtanh.pop %v2288
  %v2440 = vtanh.pop %v2035
  %v2441 = vtanh.pop %v2037
  %v2442 = vtanh.pop %v2292
  %v2443 = vtanh.pop %v2294
  %v2444 = vtanh.pop %v2041
  %v2445 = vtanh.pop %v2043
  %v2446 = vtanh.pop %v2298
  %v2447 = vtanh.pop %v2300
  %v2448 = vtanh.pop %v2047
  %v2449 = vtanh.pop %v2049
  %v2450 = vtanh.pop %v2304
  %v2451 = vtanh.pop %v2306
  %v2452 = vtanh.pop %v2053
  %v2453 = vtanh.pop %v2055
  %v2454 = vtanh.pop %v2310
  %v2455 = vtanh.pop %v2312
  %v2456 = vtanh.pop %v2059
  %v2457 = vtanh.pop %v2061
  %v2458 = vtanh.pop %v2316
  %v2459 = vtanh.pop %v2318
  %v2460 = vtanh.pop %v2065
  %v2461 = vtanh.pop %v2067
  %v2462 = vtanh.pop %v2322
  %v2463 = vtanh.pop %v2324
  %v2464 = vtanh.pop %v2071
  %v2465 = vtanh.pop %v2073
  %v2466 = vtanh.pop %v2328
  %v2467 = vtanh.pop %v2330
  %v2468 = vtanh.pop %v2077
  %v2469 = vtanh.pop %v2079
  %v2470 = vtanh.pop %v2334
  %v2471 = vtanh.pop %v2336
  %v2472 = vtanh.pop %v2083
  %v2473 = vtanh.pop %v2085
  %v2474 = vtanh.pop %v2340
  %v2475 = vtanh.pop %v2342
  %v2476 = vtanh.pop %v2089
  %v2477 = vtanh.pop %v2091
  %v2478 = vtanh.pop %v2346
  %v2479 = vtanh.pop %v2348
  %v2480 = vtanh.pop %v2095
  %v2481 = vtanh.pop %v2097
  %v2482 = vtanh.pop %v2352
  %v2483 = vtanh.pop %v2354
  %v2484 = vld [vmem:[%s10] sm:$0xff]
  %v2485 = vld [vmem:[%s10 + $0x8] sm:$0xff]
  %v2486 = vld [vmem:[%s10 + $0x10] sm:$0xff]
  %v2487 = vld [vmem:[%s10 + $0x18] sm:$0xff]
  %v2488 = vld [vmem:[%s10 + $0x20] sm:$0xff]
  %v2489 = vld [vmem:[%s10 + $0x28] sm:$0xff]
  %v2490 = vld [vmem:[%s10 + $0x30] sm:$0xff]
  %v2491 = vld [vmem:[%s10 + $0x38] sm:$0xff]
  %v2492 = vld [vmem:[%s10 + $0x40] sm:$0xff]
  %v2493 = vld [vmem:[%s10 + $0x48] sm:$0xff]
  %v2494 = vld [vmem:[%s10 + $0x50] sm:$0xff]
  %v2495 = vld [vmem:[%s10 + $0x58] sm:$0xff]
  %v2496 = vld [vmem:[%s10 + $0x60] sm:$0xff]
  %v2497 = vld [vmem:[%s10 + $0x68] sm:$0xff]
  %v2498 = vld [vmem:[%s10 + $0x70] sm:$0xff]
  %v2499 = vld [vmem:[%s10 + $0x78] sm:$0xff]
  %v2500 = vld [vmem:[%s10 + $0x80] sm:$0xff]
  %v2501 = vld [vmem:[%s10 + $0x88] sm:$0xff]
  %v2502 = vld [vmem:[%s10 + $0x90] sm:$0xff]
  %v2503 = vld [vmem:[%s10 + $0x98] sm:$0xff]
  %v2504 = vld [vmem:[%s10 + $0xa0] sm:$0xff]
  %v2505 = vld [vmem:[%s10 + $0xa8] sm:$0xff]
  %v2506 = vld [vmem:[%s10 + $0xb0] sm:$0xff]
  %v2507 = vld [vmem:[%s10 + $0xb8] sm:$0xff]
  %v2508 = vld [vmem:[%s10 + $0xc0] sm:$0xff]
  %v2509 = vld [vmem:[%s10 + $0xc8] sm:$0xff]
  %v2510 = vld [vmem:[%s10 + $0xd0] sm:$0xff]
  %v2511 = vld [vmem:[%s10 + $0xd8] sm:$0xff]
  %v2512 = vld [vmem:[%s10 + $0xe0] sm:$0xff]
  %v2513 = vld [vmem:[%s10 + $0xe8] sm:$0xff]
  %v2514 = vld [vmem:[%s10 + $0xf0] sm:$0xff]
  %v2515 = vld [vmem:[%s10 + $0xf8] sm:$0xff]
  %v2516 = vld [vmem:[%s10 + $0x100] sm:$0xff]
  %v2517 = vld [vmem:[%s10 + $0x108] sm:$0xff]
  %v2518 = vld [vmem:[%s10 + $0x110] sm:$0xff]
  %v2519 = vld [vmem:[%s10 + $0x118] sm:$0xff]
  %v2520 = vld [vmem:[%s10 + $0x120] sm:$0xff]
  %v2521 = vld [vmem:[%s10 + $0x128] sm:$0xff]
  %v2522 = vld [vmem:[%s10 + $0x130] sm:$0xff]
  %v2523 = vld [vmem:[%s10 + $0x138] sm:$0xff]
  %v2524 = vld [vmem:[%s10 + $0x140] sm:$0xff]
  %v2525 = vld [vmem:[%s10 + $0x148] sm:$0xff]
  %v2526 = vld [vmem:[%s10 + $0x150] sm:$0xff]
  %v2527 = vld [vmem:[%s10 + $0x158] sm:$0xff]
  %v2528 = vld [vmem:[%s10 + $0x160] sm:$0xff]
  %v2529 = vld [vmem:[%s10 + $0x168] sm:$0xff]
  %v2530 = vld [vmem:[%s10 + $0x170] sm:$0xff]
  %v2531 = vld [vmem:[%s10 + $0x178] sm:$0xff]
  %v2532 = vld [vmem:[%s10 + $0x180] sm:$0xff]
  %v2533 = vld [vmem:[%s10 + $0x188] sm:$0xff]
  %v2534 = vld [vmem:[%s10 + $0x190] sm:$0xff]
  %v2535 = vld [vmem:[%s10 + $0x198] sm:$0xff]
  %v2536 = vld [vmem:[%s10 + $0x1a0] sm:$0xff]
  %v2537 = vld [vmem:[%s10 + $0x1a8] sm:$0xff]
  %v2538 = vld [vmem:[%s10 + $0x1b0] sm:$0xff]
  %v2539 = vld [vmem:[%s10 + $0x1b8] sm:$0xff]
  %v2540 = vld [vmem:[%s10 + $0x1c0] sm:$0xff]
  %v2541 = vld [vmem:[%s10 + $0x1c8] sm:$0xff]
  %v2542 = vld [vmem:[%s10 + $0x1d0] sm:$0xff]
  %v2543 = vld [vmem:[%s10 + $0x1d8] sm:$0xff]
  %v2544 = vld [vmem:[%s10 + $0x1e0] sm:$0xff]
  %v2545 = vld [vmem:[%s10 + $0x1e8] sm:$0xff]
  %v2546 = vld [vmem:[%s10 + $0x1f0] sm:$0xff]
  %v2547 = vld [vmem:[%s10 + $0x1f8] sm:$0xff]
  %v2548 = vld [vmem:[%s10 + $0x200] sm:$0xff]
  %v2549 = vld [vmem:[%s10 + $0x208] sm:$0xff]
  %v2550 = vld [vmem:[%s10 + $0x210] sm:$0xff]
  %v2551 = vld [vmem:[%s10 + $0x218] sm:$0xff]
  %v2552 = vld [vmem:[%s10 + $0x220] sm:$0xff]
  %v2553 = vld [vmem:[%s10 + $0x228] sm:$0xff]
  %v2554 = vld [vmem:[%s10 + $0x230] sm:$0xff]
  %v2555 = vld [vmem:[%s10 + $0x238] sm:$0xff]
  %v2556 = vld [vmem:[%s10 + $0x240] sm:$0xff]
  %v2557 = vld [vmem:[%s10 + $0x248] sm:$0xff]
  %v2558 = vld [vmem:[%s10 + $0x250] sm:$0xff]
  %v2559 = vld [vmem:[%s10 + $0x258] sm:$0xff]
  %v2560 = vld [vmem:[%s10 + $0x260] sm:$0xff]
  %v2561 = vld [vmem:[%s10 + $0x268] sm:$0xff]
  %v2562 = vld [vmem:[%s10 + $0x270] sm:$0xff]
  %v2563 = vld [vmem:[%s10 + $0x278] sm:$0xff]
  %v2564 = vld [vmem:[%s10 + $0x280] sm:$0xff]
  %v2565 = vld [vmem:[%s10 + $0x288] sm:$0xff]
  %v2566 = vld [vmem:[%s10 + $0x290] sm:$0xff]
  %v2567 = vld [vmem:[%s10 + $0x298] sm:$0xff]
  %v2568 = vld [vmem:[%s10 + $0x2a0] sm:$0xff]
  %v2569 = vld [vmem:[%s10 + $0x2a8] sm:$0xff]
  %v2570 = vld [vmem:[%s10 + $0x2b0] sm:$0xff]
  %v2571 = vld [vmem:[%s10 + $0x2b8] sm:$0xff]
  %v2572 = vld [vmem:[%s10 + $0x2c0] sm:$0xff]
  %v2573 = vld [vmem:[%s10 + $0x2c8] sm:$0xff]
  %v2574 = vld [vmem:[%s10 + $0x2d0] sm:$0xff]
  %v2575 = vld [vmem:[%s10 + $0x2d8] sm:$0xff]
  %v2576 = vld [vmem:[%s10 + $0x2e0] sm:$0xff]
  %v2577 = vld [vmem:[%s10 + $0x2e8] sm:$0xff]
  %v2578 = vld [vmem:[%s10 + $0x2f0] sm:$0xff]
  %v2579 = vld [vmem:[%s10 + $0x2f8] sm:$0xff]
  %v2580 = vld [vmem:[%s10 + $0x300] sm:$0xff]
  %v2581 = vld [vmem:[%s10 + $0x308] sm:$0xff]
  %v2582 = vld [vmem:[%s10 + $0x310] sm:$0xff]
  %v2583 = vld [vmem:[%s10 + $0x318] sm:$0xff]
  %v2584 = vld [vmem:[%s10 + $0x320] sm:$0xff]
  %v2585 = vld [vmem:[%s10 + $0x328] sm:$0xff]
  %v2586 = vld [vmem:[%s10 + $0x330] sm:$0xff]
  %v2587 = vld [vmem:[%s10 + $0x338] sm:$0xff]
  %v2588 = vld [vmem:[%s10 + $0x340] sm:$0xff]
  %v2589 = vld [vmem:[%s10 + $0x348] sm:$0xff]
  %v2590 = vld [vmem:[%s10 + $0x350] sm:$0xff]
  %v2591 = vld [vmem:[%s10 + $0x358] sm:$0xff]
  %v2592 = vld [vmem:[%s10 + $0x360] sm:$0xff]
  %v2593 = vld [vmem:[%s10 + $0x368] sm:$0xff]
  %v2594 = vld [vmem:[%s10 + $0x370] sm:$0xff]
  %v2595 = vld [vmem:[%s10 + $0x378] sm:$0xff]
  %v2596 = vld [vmem:[%s10 + $0x380] sm:$0xff]
  %v2597 = vld [vmem:[%s10 + $0x388] sm:$0xff]
  %v2598 = vld [vmem:[%s10 + $0x390] sm:$0xff]
  %v2599 = vld [vmem:[%s10 + $0x398] sm:$0xff]
  %v2600 = vld [vmem:[%s10 + $0x3a0] sm:$0xff]
  %v2601 = vld [vmem:[%s10 + $0x3a8] sm:$0xff]
  %v2602 = vld [vmem:[%s10 + $0x3b0] sm:$0xff]
  %v2603 = vld [vmem:[%s10 + $0x3b8] sm:$0xff]
  %v2604 = vld [vmem:[%s10 + $0x3c0] sm:$0xff]
  %v2605 = vld [vmem:[%s10 + $0x3c8] sm:$0xff]
  %v2606 = vld [vmem:[%s10 + $0x3d0] sm:$0xff]
  %v2607 = vld [vmem:[%s10 + $0x3d8] sm:$0xff]
  %v2608 = vld [vmem:[%s10 + $0x3e0] sm:$0xff]
  %v2609 = vld [vmem:[%s10 + $0x3e8] sm:$0xff]
  %v2610 = vld [vmem:[%s10 + $0x3f0] sm:$0xff]
  %v2611 = vld [vmem:[%s10 + $0x3f8] sm:$0xff]
  %v2612 = vld [vmem:[%s11] sm:$0x3]
  %v2614 = vlaneseq
  %v2615 = vshrl.u32 %v2614, 7
  %v2616 = vsub.s32 0, %v2615
  %v2617 = vrot.slane %v2612, %v2616
  %v2618 = vlaneseq
  %v2619 = vshrl.u32 %v2618, 7
  %v2620 = vsub.s32 1, %v2619
  %v2621 = vrot.slane %v2612, %v2620
  %2624 = vmatprep.subr.mxu0 %v2485
  %2625 = vmatpush1.msra.mxu0 %v2484
  %2626 = vmatprep.subr.mxu0 %v2487
  %2627 = vmatpush1.msra.mxu0 %v2486
  %2628 = vmatprep.subr.mxu0 %v2489
  %2629 = vmatpush1.msra.mxu0 %v2488
  %2630 = vmatprep.subr.mxu0 %v2491
  %2631 = vmatpush1.msra.mxu0 %v2490
  %2632 = vmatprep.subr.mxu0 %v2493
  %2633 = vmatpush1.msra.mxu0 %v2492
  %2634 = vmatprep.subr.mxu0 %v2495
  %2635 = vmatpush1.msra.mxu0 %v2494
  %2636 = vmatprep.subr.mxu0 %v2497
  %2637 = vmatpush1.msra.mxu0 %v2496
  %2638 = vmatprep.subr.mxu0 %v2499
  %2639 = vmatpush1.msra.mxu0 %v2498
  %2640 = vmatprep.subr.mxu0 %v2501
  %2641 = vmatpush1.msra.mxu0 %v2500
  %2642 = vmatprep.subr.mxu0 %v2503
  %2643 = vmatpush1.msra.mxu0 %v2502
  %2644 = vmatprep.subr.mxu0 %v2505
  %2645 = vmatpush1.msra.mxu0 %v2504
  %2646 = vmatprep.subr.mxu0 %v2507
  %2647 = vmatpush1.msra.mxu0 %v2506
  %2648 = vmatprep.subr.mxu0 %v2509
  %2649 = vmatpush1.msra.mxu0 %v2508
  %2650 = vmatprep.subr.mxu0 %v2511
  %2651 = vmatpush1.msra.mxu0 %v2510
  %2652 = vmatprep.subr.mxu0 %v2513
  %2653 = vmatpush1.msra.mxu0 %v2512
  %2654 = vmatprep.subr.mxu0 %v2515
  %2655 = vmatpush1.msra.mxu0 %v2514
  %2656 = vmatprep.subr.mxu0 %v2517
  %2657 = vmatpush1.msra.mxu0 %v2516
  %2658 = vmatprep.subr.mxu0 %v2519
  %2659 = vmatpush1.msra.mxu0 %v2518
  %2660 = vmatprep.subr.mxu0 %v2521
  %2661 = vmatpush1.msra.mxu0 %v2520
  %2662 = vmatprep.subr.mxu0 %v2523
  %2663 = vmatpush1.msra.mxu0 %v2522
  %2664 = vmatprep.subr.mxu0 %v2525
  %2665 = vmatpush1.msra.mxu0 %v2524
  %2666 = vmatprep.subr.mxu0 %v2527
  %2667 = vmatpush1.msra.mxu0 %v2526
  %2668 = vmatprep.subr.mxu0 %v2529
  %2669 = vmatpush1.msra.mxu0 %v2528
  %2670 = vmatprep.subr.mxu0 %v2531
  %2671 = vmatpush1.msra.mxu0 %v2530
  %2672 = vmatprep.subr.mxu0 %v2533
  %2673 = vmatpush1.msra.mxu0 %v2532
  %2674 = vmatprep.subr.mxu0 %v2535
  %2675 = vmatpush1.msra.mxu0 %v2534
  %2676 = vmatprep.subr.mxu0 %v2537
  %2677 = vmatpush1.msra.mxu0 %v2536
  %2678 = vmatprep.subr.mxu0 %v2539
  %2679 = vmatpush1.msra.mxu0 %v2538
  %2680 = vmatprep.subr.mxu0 %v2541
  %2681 = vmatpush1.msra.mxu0 %v2540
  %2682 = vmatprep.subr.mxu0 %v2543
  %2683 = vmatpush1.msra.mxu0 %v2542
  %2684 = vmatprep.subr.mxu0 %v2545
  %2685 = vmatpush1.msra.mxu0 %v2544
  %2686 = vmatprep.subr.mxu0 %v2547
  %2687 = vmatpush1.msra.mxu0 %v2546
  %2688 = vmatprep.mubr.f32.mxu0 %v2357
  %2689 = vmatmul.mubr.f32.gmra.mrb[0].mxu0 %v2356
  %v2690 = vpop.f32.mrb[0].mxu0
  %v2691 = vadd.f32 %v2617, %v2690
  %v2692 = vpop.f32.mrb[0].mxu0
  %v2693 = vadd.f32 %v2621, %v2692
  %2694 = vmatprep.mubr.f32.mxu0 %v2361
  %2695 = vmatmul.mubr.f32.gmra.mrb[0].mxu0 %v2360
  %v2696 = vpop.f32.mrb[0].mxu0
  %v2697 = vadd.f32 %v2617, %v2696
  %v2698 = vpop.f32.mrb[0].mxu0
  %v2699 = vadd.f32 %v2621, %v2698
  %2700 = vmatprep.mubr.f32.mxu0 %v2365
  %2701 = vmatmul.mubr.f32.gmra.mrb[0].mxu0 %v2364
  %v2702 = vpop.f32.mrb[0].mxu0
  %v2703 = vadd.f32 %v2617, %v2702
  %v2704 = vpop.f32.mrb[0].mxu0
  %v2705 = vadd.f32 %v2621, %v2704
  %2706 = vmatprep.mubr.f32.mxu0 %v2369
  %2707 = vmatmul.mubr.f32.gmra.mrb[0].mxu0 %v2368
  %v2708 = vpop.f32.mrb[0].mxu0
  %v2709 = vadd.f32 %v2617, %v2708
  %v2710 = vpop.f32.mrb[0].mxu0
  %v2711 = vadd.f32 %v2621, %v2710
  %2712 = vmatprep.mubr.f32.mxu0 %v2373
  %2713 = vmatmul.mubr.f32.gmra.mrb[0].mxu0 %v2372
  %v2714 = vpop.f32.mrb[0].mxu0
  %v2715 = vadd.f32 %v2617, %v2714
  %v2716 = vpop.f32.mrb[0].mxu0
  %v2717 = vadd.f32 %v2621, %v2716
  %2718 = vmatprep.mubr.f32.mxu0 %v2377
  %2719 = vmatmul.mubr.f32.gmra.mrb[0].mxu0 %v2376
  %v2720 = vpop.f32.mrb[0].mxu0
  %v2721 = vadd.f32 %v2617, %v2720
  %v2722 = vpop.f32.mrb[0].mxu0
  %v2723 = vadd.f32 %v2621, %v2722
  %2724 = vmatprep.mubr.f32.mxu0 %v2381
  %2725 = vmatmul.mubr.f32.gmra.mrb[0].mxu0 %v2380
  %v2726 = vpop.f32.mrb[0].mxu0
  %v2727 = vadd.f32 %v2617, %v2726
  %v2728 = vpop.f32.mrb[0].mxu0
  %v2729 = vadd.f32 %v2621, %v2728
  %2730 = vmatprep.mubr.f32.mxu0 %v2385
  %2731 = vmatmul.mubr.f32.gmra.mrb[0].mxu0 %v2384
  %v2732 = vpop.f32.mrb[0].mxu0
  %v2733 = vadd.f32 %v2617, %v2732
  %v2734 = vpop.f32.mrb[0].mxu0
  %v2735 = vadd.f32 %v2621, %v2734
  %2736 = vmatprep.mubr.f32.mxu0 %v2389
  %2737 = vmatmul.mubr.f32.gmra.mrb[0].mxu0 %v2388
  %v2738 = vpop.f32.mrb[0].mxu0
  %v2739 = vadd.f32 %v2617, %v2738
  %v2740 = vpop.f32.mrb[0].mxu0
  %v2741 = vadd.f32 %v2621, %v2740
  %2742 = vmatprep.mubr.f32.mxu0 %v2393
  %2743 = vmatmul.mubr.f32.gmra.mrb[0].mxu0 %v2392
  %v2744 = vpop.f32.mrb[0].mxu0
  %v2745 = vadd.f32 %v2617, %v2744
  %v2746 = vpop.f32.mrb[0].mxu0
  %v2747 = vadd.f32 %v2621, %v2746
  %2748 = vmatprep.mubr.f32.mxu0 %v2397
  %2749 = vmatmul.mubr.f32.gmra.mrb[0].mxu0 %v2396
  %v2750 = vpop.f32.mrb[0].mxu0
  %v2751 = vadd.f32 %v2617, %v2750
  %v2752 = vpop.f32.mrb[0].mxu0
  %v2753 = vadd.f32 %v2621, %v2752
  %2754 = vmatprep.mubr.f32.mxu0 %v2401
  %2755 = vmatmul.mubr.f32.gmra.mrb[0].mxu0 %v2400
  %v2756 = vpop.f32.mrb[0].mxu0
  %v2757 = vadd.f32 %v2617, %v2756
  %v2758 = vpop.f32.mrb[0].mxu0
  %v2759 = vadd.f32 %v2621, %v2758
  %2760 = vmatprep.mubr.f32.mxu0 %v2405
  %2761 = vmatmul.mubr.f32.gmra.mrb[0].mxu0 %v2404
  %v2762 = vpop.f32.mrb[0].mxu0
  %v2763 = vadd.f32 %v2617, %v2762
  %v2764 = vpop.f32.mrb[0].mxu0
  %v2765 = vadd.f32 %v2621, %v2764
  %2766 = vmatprep.mubr.f32.mxu0 %v2409
  %2767 = vmatmul.mubr.f32.gmra.mrb[0].mxu0 %v2408
  %v2768 = vpop.f32.mrb[0].mxu0
  %v2769 = vadd.f32 %v2617, %v2768
  %v2770 = vpop.f32.mrb[0].mxu0
  %v2771 = vadd.f32 %v2621, %v2770
  %2772 = vmatprep.mubr.f32.mxu0 %v2413
  %2773 = vmatmul.mubr.f32.gmra.mrb[0].mxu0 %v2412
  %v2774 = vpop.f32.mrb[0].mxu0
  %v2775 = vadd.f32 %v2617, %v2774
  %v2776 = vpop.f32.mrb[0].mxu0
  %v2777 = vadd.f32 %v2621, %v2776
  %2778 = vmatprep.mubr.f32.mxu0 %v2417
  %2779 = vmatmul.mubr.f32.gmra.mrb[0].mxu0 %v2416
  %v2780 = vpop.f32.mrb[0].mxu0
  %v2781 = vadd.f32 %v2617, %v2780
  %v2782 = vpop.f32.mrb[0].mxu0
  %v2783 = vadd.f32 %v2621, %v2782
  %2784 = vmatprep.mubr.f32.mxu0 %v2421
  %2785 = vmatmul.mubr.f32.gmra.mrb[0].mxu0 %v2420
  %v2786 = vpop.f32.mrb[0].mxu0
  %v2787 = vadd.f32 %v2617, %v2786
  %v2788 = vpop.f32.mrb[0].mxu0
  %v2789 = vadd.f32 %v2621, %v2788
  %2790 = vmatprep.mubr.f32.mxu0 %v2425
  %2791 = vmatmul.mubr.f32.gmra.mrb[0].mxu0 %v2424
  %v2792 = vpop.f32.mrb[0].mxu0
  %v2793 = vadd.f32 %v2617, %v2792
  %v2794 = vpop.f32.mrb[0].mxu0
  %v2795 = vadd.f32 %v2621, %v2794
  %2796 = vmatprep.mubr.f32.mxu0 %v2429
  %2797 = vmatmul.mubr.f32.gmra.mrb[0].mxu0 %v2428
  %v2798 = vpop.f32.mrb[0].mxu0
  %v2799 = vadd.f32 %v2617, %v2798
  %v2800 = vpop.f32.mrb[0].mxu0
  %v2801 = vadd.f32 %v2621, %v2800
  %2802 = vmatprep.mubr.f32.mxu0 %v2433
  %2803 = vmatmul.mubr.f32.gmra.mrb[0].mxu0 %v2432
  %v2804 = vpop.f32.mrb[0].mxu0
  %v2805 = vadd.f32 %v2617, %v2804
  %v2806 = vpop.f32.mrb[0].mxu0
  %v2807 = vadd.f32 %v2621, %v2806
  %2808 = vmatprep.mubr.f32.mxu0 %v2437
  %2809 = vmatmul.mubr.f32.gmra.mrb[0].mxu0 %v2436
  %v2810 = vpop.f32.mrb[0].mxu0
  %v2811 = vadd.f32 %v2617, %v2810
  %v2812 = vpop.f32.mrb[0].mxu0
  %v2813 = vadd.f32 %v2621, %v2812
  %2814 = vmatprep.mubr.f32.mxu0 %v2441
  %2815 = vmatmul.mubr.f32.gmra.mrb[0].mxu0 %v2440
  %v2816 = vpop.f32.mrb[0].mxu0
  %v2817 = vadd.f32 %v2617, %v2816
  %v2818 = vpop.f32.mrb[0].mxu0
  %v2819 = vadd.f32 %v2621, %v2818
  %2820 = vmatprep.mubr.f32.mxu0 %v2445
  %2821 = vmatmul.mubr.f32.gmra.mrb[0].mxu0 %v2444
  %v2822 = vpop.f32.mrb[0].mxu0
  %v2823 = vadd.f32 %v2617, %v2822
  %v2824 = vpop.f32.mrb[0].mxu0
  %v2825 = vadd.f32 %v2621, %v2824
  %2826 = vmatprep.mubr.f32.mxu0 %v2449
  %2827 = vmatmul.mubr.f32.gmra.mrb[0].mxu0 %v2448
  %v2828 = vpop.f32.mrb[0].mxu0
  %v2829 = vadd.f32 %v2617, %v2828
  %v2830 = vpop.f32.mrb[0].mxu0
  %v2831 = vadd.f32 %v2621, %v2830
  %2832 = vmatprep.mubr.f32.mxu0 %v2453
  %2833 = vmatmul.mubr.f32.gmra.mrb[0].mxu0 %v2452
  %v2834 = vpop.f32.mrb[0].mxu0
  %v2835 = vadd.f32 %v2617, %v2834
  %v2836 = vpop.f32.mrb[0].mxu0
  %v2837 = vadd.f32 %v2621, %v2836
  %2838 = vmatprep.mubr.f32.mxu0 %v2457
  %2839 = vmatmul.mubr.f32.gmra.mrb[0].mxu0 %v2456
  %v2840 = vpop.f32.mrb[0].mxu0
  %v2841 = vadd.f32 %v2617, %v2840
  %v2842 = vpop.f32.mrb[0].mxu0
  %v2843 = vadd.f32 %v2621, %v2842
  %2844 = vmatprep.mubr.f32.mxu0 %v2461
  %2845 = vmatmul.mubr.f32.gmra.mrb[0].mxu0 %v2460
  %v2846 = vpop.f32.mrb[0].mxu0
  %v2847 = vadd.f32 %v2617, %v2846
  %v2848 = vpop.f32.mrb[0].mxu0
  %v2849 = vadd.f32 %v2621, %v2848
  %2850 = vmatprep.mubr.f32.mxu0 %v2465
  %2851 = vmatmul.mubr.f32.gmra.mrb[0].mxu0 %v2464
  %v2852 = vpop.f32.mrb[0].mxu0
  %v2853 = vadd.f32 %v2617, %v2852
  %v2854 = vpop.f32.mrb[0].mxu0
  %v2855 = vadd.f32 %v2621, %v2854
  %2856 = vmatprep.mubr.f32.mxu0 %v2469
  %2857 = vmatmul.mubr.f32.gmra.mrb[0].mxu0 %v2468
  %v2858 = vpop.f32.mrb[0].mxu0
  %v2859 = vadd.f32 %v2617, %v2858
  %v2860 = vpop.f32.mrb[0].mxu0
  %v2861 = vadd.f32 %v2621, %v2860
  %2862 = vmatprep.mubr.f32.mxu0 %v2473
  %2863 = vmatmul.mubr.f32.gmra.mrb[0].mxu0 %v2472
  %v2864 = vpop.f32.mrb[0].mxu0
  %v2865 = vadd.f32 %v2617, %v2864
  %v2866 = vpop.f32.mrb[0].mxu0
  %v2867 = vadd.f32 %v2621, %v2866
  %2868 = vmatprep.mubr.f32.mxu0 %v2477
  %2869 = vmatmul.mubr.f32.gmra.mrb[0].mxu0 %v2476
  %v2870 = vpop.f32.mrb[0].mxu0
  %v2871 = vadd.f32 %v2617, %v2870
  %v2872 = vpop.f32.mrb[0].mxu0
  %v2873 = vadd.f32 %v2621, %v2872
  %2874 = vmatprep.mubr.f32.mxu0 %v2481
  %2875 = vmatmul.mubr.f32.gmra.mrb[0].mxu0 %v2480
  %v2876 = vpop.f32.mrb[0].mxu0
  %v2877 = vadd.f32 %v2617, %v2876
  %v2878 = vpop.f32.mrb[0].mxu0
  %v2879 = vadd.f32 %v2621, %v2878
  %2880 = vdwg.mxu0
  %2881 = vmatprep.subr.mxu0 %v2549
  %2882 = vmatpush1.msra.mxu0 %v2548
  %2883 = vmatprep.subr.mxu0 %v2551
  %2884 = vmatpush1.msra.mxu0 %v2550
  %2885 = vmatprep.subr.mxu0 %v2553
  %2886 = vmatpush1.msra.mxu0 %v2552
  %2887 = vmatprep.subr.mxu0 %v2555
  %2888 = vmatpush1.msra.mxu0 %v2554
  %2889 = vmatprep.subr.mxu0 %v2557
  %2890 = vmatpush1.msra.mxu0 %v2556
  %2891 = vmatprep.subr.mxu0 %v2559
  %2892 = vmatpush1.msra.mxu0 %v2558
  %2893 = vmatprep.subr.mxu0 %v2561
  %2894 = vmatpush1.msra.mxu0 %v2560
  %2895 = vmatprep.subr.mxu0 %v2563
  %2896 = vmatpush1.msra.mxu0 %v2562
  %2897 = vmatprep.subr.mxu0 %v2565
  %2898 = vmatpush1.msra.mxu0 %v2564
  %2899 = vmatprep.subr.mxu0 %v2567
  %2900 = vmatpush1.msra.mxu0 %v2566
  %2901 = vmatprep.subr.mxu0 %v2569
  %2902 = vmatpush1.msra.mxu0 %v2568
  %2903 = vmatprep.subr.mxu0 %v2571
  %2904 = vmatpush1.msra.mxu0 %v2570
  %2905 = vmatprep.subr.mxu0 %v2573
  %2906 = vmatpush1.msra.mxu0 %v2572
  %2907 = vmatprep.subr.mxu0 %v2575
  %2908 = vmatpush1.msra.mxu0 %v2574
  %2909 = vmatprep.subr.mxu0 %v2577
  %2910 = vmatpush1.msra.mxu0 %v2576
  %2911 = vmatprep.subr.mxu0 %v2579
  %2912 = vmatpush1.msra.mxu0 %v2578
  %2913 = vmatprep.subr.mxu0 %v2581
  %2914 = vmatpush1.msra.mxu0 %v2580
  %2915 = vmatprep.subr.mxu0 %v2583
  %2916 = vmatpush1.msra.mxu0 %v2582
  %2917 = vmatprep.subr.mxu0 %v2585
  %2918 = vmatpush1.msra.mxu0 %v2584
  %2919 = vmatprep.subr.mxu0 %v2587
  %2920 = vmatpush1.msra.mxu0 %v2586
  %2921 = vmatprep.subr.mxu0 %v2589
  %2922 = vmatpush1.msra.mxu0 %v2588
  %2923 = vmatprep.subr.mxu0 %v2591
  %2924 = vmatpush1.msra.mxu0 %v2590
  %2925 = vmatprep.subr.mxu0 %v2593
  %2926 = vmatpush1.msra.mxu0 %v2592
  %2927 = vmatprep.subr.mxu0 %v2595
  %2928 = vmatpush1.msra.mxu0 %v2594
  %2929 = vmatprep.subr.mxu0 %v2597
  %2930 = vmatpush1.msra.mxu0 %v2596
  %2931 = vmatprep.subr.mxu0 %v2599
  %2932 = vmatpush1.msra.mxu0 %v2598
  %2933 = vmatprep.subr.mxu0 %v2601
  %2934 = vmatpush1.msra.mxu0 %v2600
  %2935 = vmatprep.subr.mxu0 %v2603
  %2936 = vmatpush1.msra.mxu0 %v2602
  %2937 = vmatprep.subr.mxu0 %v2605
  %2938 = vmatpush1.msra.mxu0 %v2604
  %2939 = vmatprep.subr.mxu0 %v2607
  %2940 = vmatpush1.msra.mxu0 %v2606
  %2941 = vmatprep.subr.mxu0 %v2609
  %2942 = vmatpush1.msra.mxu0 %v2608
  %2943 = vmatprep.subr.mxu0 %v2611
  %2944 = vmatpush1.msra.mxu0 %v2610
  %2945 = vmatprep.mubr.f32.mxu0 %v2359
  %2946 = vmatmul.mubr.f32.gmra.mrb[0].mxu0 %v2358
  %v2947 = vpop.f32.mrb[0].mxu0
  %v2948 = vadd.f32 %v2691, %v2947
  %v2949 = vpop.f32.mrb[0].mxu0
  %v2950 = vadd.f32 %v2693, %v2949
  %2951 = vmatprep.mubr.f32.mxu0 %v2363
  %2952 = vmatmul.mubr.f32.gmra.mrb[0].mxu0 %v2362
  %v2953 = vpop.f32.mrb[0].mxu0
  %v2954 = vadd.f32 %v2697, %v2953
  %v2955 = vpop.f32.mrb[0].mxu0
  %v2956 = vadd.f32 %v2699, %v2955
  %2957 = vmatprep.mubr.f32.mxu0 %v2367
  %2958 = vmatmul.mubr.f32.gmra.mrb[0].mxu0 %v2366
  %v2959 = vpop.f32.mrb[0].mxu0
  %v2960 = vadd.f32 %v2703, %v2959
  %v2961 = vpop.f32.mrb[0].mxu0
  %v2962 = vadd.f32 %v2705, %v2961
  %2963 = vmatprep.mubr.f32.mxu0 %v2371
  %2964 = vmatmul.mubr.f32.gmra.mrb[0].mxu0 %v2370
  %v2965 = vpop.f32.mrb[0].mxu0
  %v2966 = vadd.f32 %v2709, %v2965
  %v2967 = vpop.f32.mrb[0].mxu0
  %v2968 = vadd.f32 %v2711, %v2967
  %2969 = vmatprep.mubr.f32.mxu0 %v2375
  %2970 = vmatmul.mubr.f32.gmra.mrb[0].mxu0 %v2374
  %v2971 = vpop.f32.mrb[0].mxu0
  %v2972 = vadd.f32 %v2715, %v2971
  %v2973 = vpop.f32.mrb[0].mxu0
  %v2974 = vadd.f32 %v2717, %v2973
  %2975 = vmatprep.mubr.f32.mxu0 %v2379
  %2976 = vmatmul.mubr.f32.gmra.mrb[0].mxu0 %v2378
  %v2977 = vpop.f32.mrb[0].mxu0
  %v2978 = vadd.f32 %v2721, %v2977
  %v2979 = vpop.f32.mrb[0].mxu0
  %v2980 = vadd.f32 %v2723, %v2979
  %2981 = vmatprep.mubr.f32.mxu0 %v2383
  %2982 = vmatmul.mubr.f32.gmra.mrb[0].mxu0 %v2382
  %v2983 = vpop.f32.mrb[0].mxu0
  %v2984 = vadd.f32 %v2727, %v2983
  %v2985 = vpop.f32.mrb[0].mxu0
  %v2986 = vadd.f32 %v2729, %v2985
  %2987 = vmatprep.mubr.f32.mxu0 %v2387
  %2988 = vmatmul.mubr.f32.gmra.mrb[0].mxu0 %v2386
  %v2989 = vpop.f32.mrb[0].mxu0
  %v2990 = vadd.f32 %v2733, %v2989
  %v2991 = vpop.f32.mrb[0].mxu0
  %v2992 = vadd.f32 %v2735, %v2991
  %2993 = vmatprep.mubr.f32.mxu0 %v2391
  %2994 = vmatmul.mubr.f32.gmra.mrb[0].mxu0 %v2390
  %v2995 = vpop.f32.mrb[0].mxu0
  %v2996 = vadd.f32 %v2739, %v2995
  %v2997 = vpop.f32.mrb[0].mxu0
  %v2998 = vadd.f32 %v2741, %v2997
  %2999 = vmatprep.mubr.f32.mxu0 %v2395
  %3000 = vmatmul.mubr.f32.gmra.mrb[0].mxu0 %v2394
  %v3001 = vpop.f32.mrb[0].mxu0
  %v3002 = vadd.f32 %v2745, %v3001
  %v3003 = vpop.f32.mrb[0].mxu0
  %v3004 = vadd.f32 %v2747, %v3003
  %3005 = vmatprep.mubr.f32.mxu0 %v2399
  %3006 = vmatmul.mubr.f32.gmra.mrb[0].mxu0 %v2398
  %v3007 = vpop.f32.mrb[0].mxu0
  %v3008 = vadd.f32 %v2751, %v3007
  %v3009 = vpop.f32.mrb[0].mxu0
  %v3010 = vadd.f32 %v2753, %v3009
  %3011 = vmatprep.mubr.f32.mxu0 %v2403
  %3012 = vmatmul.mubr.f32.gmra.mrb[0].mxu0 %v2402
  %v3013 = vpop.f32.mrb[0].mxu0
  %v3014 = vadd.f32 %v2757, %v3013
  %v3015 = vpop.f32.mrb[0].mxu0
  %v3016 = vadd.f32 %v2759, %v3015
  %3017 = vmatprep.mubr.f32.mxu0 %v2407
  %3018 = vmatmul.mubr.f32.gmra.mrb[0].mxu0 %v2406
  %v3019 = vpop.f32.mrb[0].mxu0
  %v3020 = vadd.f32 %v2763, %v3019
  %v3021 = vpop.f32.mrb[0].mxu0
  %v3022 = vadd.f32 %v2765, %v3021
  %3023 = vmatprep.mubr.f32.mxu0 %v2411
  %3024 = vmatmul.mubr.f32.gmra.mrb[0].mxu0 %v2410
  %v3025 = vpop.f32.mrb[0].mxu0
  %v3026 = vadd.f32 %v2769, %v3025
  %v3027 = vpop.f32.mrb[0].mxu0
  %v3028 = vadd.f32 %v2771, %v3027
  %3029 = vmatprep.mubr.f32.mxu0 %v2415
  %3030 = vmatmul.mubr.f32.gmra.mrb[0].mxu0 %v2414
  %v3031 = vpop.f32.mrb[0].mxu0
  %v3032 = vadd.f32 %v2775, %v3031
  %v3033 = vpop.f32.mrb[0].mxu0
  %v3034 = vadd.f32 %v2777, %v3033
  %3035 = vmatprep.mubr.f32.mxu0 %v2419
  %3036 = vmatmul.mubr.f32.gmra.mrb[0].mxu0 %v2418
  %v3037 = vpop.f32.mrb[0].mxu0
  %v3038 = vadd.f32 %v2781, %v3037
  %v3039 = vpop.f32.mrb[0].mxu0
  %v3040 = vadd.f32 %v2783, %v3039
  %3041 = vmatprep.mubr.f32.mxu0 %v2423
  %3042 = vmatmul.mubr.f32.gmra.mrb[0].mxu0 %v2422
  %v3043 = vpop.f32.mrb[0].mxu0
  %v3044 = vadd.f32 %v2787, %v3043
  %v3045 = vpop.f32.mrb[0].mxu0
  %v3046 = vadd.f32 %v2789, %v3045
  %3047 = vmatprep.mubr.f32.mxu0 %v2427
  %3048 = vmatmul.mubr.f32.gmra.mrb[0].mxu0 %v2426
  %v3049 = vpop.f32.mrb[0].mxu0
  %v3050 = vadd.f32 %v2793, %v3049
  %v3051 = vpop.f32.mrb[0].mxu0
  %v3052 = vadd.f32 %v2795, %v3051
  %3053 = vmatprep.mubr.f32.mxu0 %v2431
  %3054 = vmatmul.mubr.f32.gmra.mrb[0].mxu0 %v2430
  %v3055 = vpop.f32.mrb[0].mxu0
  %v3056 = vadd.f32 %v2799, %v3055
  %v3057 = vpop.f32.mrb[0].mxu0
  %v3058 = vadd.f32 %v2801, %v3057
  %3059 = vmatprep.mubr.f32.mxu0 %v2435
  %3060 = vmatmul.mubr.f32.gmra.mrb[0].mxu0 %v2434
  %v3061 = vpop.f32.mrb[0].mxu0
  %v3062 = vadd.f32 %v2805, %v3061
  %v3063 = vpop.f32.mrb[0].mxu0
  %v3064 = vadd.f32 %v2807, %v3063
  %3065 = vmatprep.mubr.f32.mxu0 %v2439
  %3066 = vmatmul.mubr.f32.gmra.mrb[0].mxu0 %v2438
  %v3067 = vpop.f32.mrb[0].mxu0
  %v3068 = vadd.f32 %v2811, %v3067
  %v3069 = vpop.f32.mrb[0].mxu0
  %v3070 = vadd.f32 %v2813, %v3069
  %3071 = vmatprep.mubr.f32.mxu0 %v2443
  %3072 = vmatmul.mubr.f32.gmra.mrb[0].mxu0 %v2442
  %v3073 = vpop.f32.mrb[0].mxu0
  %v3074 = vadd.f32 %v2817, %v3073
  %v3075 = vpop.f32.mrb[0].mxu0
  %v3076 = vadd.f32 %v2819, %v3075
  %3077 = vmatprep.mubr.f32.mxu0 %v2447
  %3078 = vmatmul.mubr.f32.gmra.mrb[0].mxu0 %v2446
  %v3079 = vpop.f32.mrb[0].mxu0
  %v3080 = vadd.f32 %v2823, %v3079
  %v3081 = vpop.f32.mrb[0].mxu0
  %v3082 = vadd.f32 %v2825, %v3081
  %3083 = vmatprep.mubr.f32.mxu0 %v2451
  %3084 = vmatmul.mubr.f32.gmra.mrb[0].mxu0 %v2450
  %v3085 = vpop.f32.mrb[0].mxu0
  %v3086 = vadd.f32 %v2829, %v3085
  %v3087 = vpop.f32.mrb[0].mxu0
  %v3088 = vadd.f32 %v2831, %v3087
  %3089 = vmatprep.mubr.f32.mxu0 %v2455
  %3090 = vmatmul.mubr.f32.gmra.mrb[0].mxu0 %v2454
  %v3091 = vpop.f32.mrb[0].mxu0
  %v3092 = vadd.f32 %v2835, %v3091
  %v3093 = vpop.f32.mrb[0].mxu0
  %v3094 = vadd.f32 %v2837, %v3093
  %3095 = vmatprep.mubr.f32.mxu0 %v2459
  %3096 = vmatmul.mubr.f32.gmra.mrb[0].mxu0 %v2458
  %v3097 = vpop.f32.mrb[0].mxu0
  %v3098 = vadd.f32 %v2841, %v3097
  %v3099 = vpop.f32.mrb[0].mxu0
  %v3100 = vadd.f32 %v2843, %v3099
  %3101 = vmatprep.mubr.f32.mxu0 %v2463
  %3102 = vmatmul.mubr.f32.gmra.mrb[0].mxu0 %v2462
  %v3103 = vpop.f32.mrb[0].mxu0
  %v3104 = vadd.f32 %v2847, %v3103
  %v3105 = vpop.f32.mrb[0].mxu0
  %v3106 = vadd.f32 %v2849, %v3105
  %3107 = vmatprep.mubr.f32.mxu0 %v2467
  %3108 = vmatmul.mubr.f32.gmra.mrb[0].mxu0 %v2466
  %v3109 = vpop.f32.mrb[0].mxu0
  %v3110 = vadd.f32 %v2853, %v3109
  %v3111 = vpop.f32.mrb[0].mxu0
  %v3112 = vadd.f32 %v2855, %v3111
  %3113 = vmatprep.mubr.f32.mxu0 %v2471
  %3114 = vmatmul.mubr.f32.gmra.mrb[0].mxu0 %v2470
  %v3115 = vpop.f32.mrb[0].mxu0
  %v3116 = vadd.f32 %v2859, %v3115
  %v3117 = vpop.f32.mrb[0].mxu0
  %v3118 = vadd.f32 %v2861, %v3117
  %3119 = vmatprep.mubr.f32.mxu0 %v2475
  %3120 = vmatmul.mubr.f32.gmra.mrb[0].mxu0 %v2474
  %v3121 = vpop.f32.mrb[0].mxu0
  %v3122 = vadd.f32 %v2865, %v3121
  %v3123 = vpop.f32.mrb[0].mxu0
  %v3124 = vadd.f32 %v2867, %v3123
  %3125 = vmatprep.mubr.f32.mxu0 %v2479
  %3126 = vmatmul.mubr.f32.gmra.mrb[0].mxu0 %v2478
  %v3127 = vpop.f32.mrb[0].mxu0
  %v3128 = vadd.f32 %v2871, %v3127
  %v3129 = vpop.f32.mrb[0].mxu0
  %v3130 = vadd.f32 %v2873, %v3129
  %3131 = vmatprep.mubr.f32.mxu0 %v2483
  %3132 = vmatmul.mubr.f32.gmra.mrb[0].mxu0 %v2482
  %v3133 = vpop.f32.mrb[0].mxu0
  %v3134 = vadd.f32 %v2877, %v3133
  %v3135 = vpop.f32.mrb[0].mxu0
  %v3136 = vadd.f32 %v2879, %v3135
  %3137 = vdwg.mxu0
  %v3138 = vtanh.pop %v2948
  %v3139 = vtanh.pop %v2950
  %v3140 = vtanh.pop %v2954
  %v3141 = vtanh.pop %v2956
  %v3142 = vtanh.pop %v2960
  %v3143 = vtanh.pop %v2962
  %v3144 = vtanh.pop %v2966
  %v3145 = vtanh.pop %v2968
  %v3146 = vtanh.pop %v2972
  %v3147 = vtanh.pop %v2974
  %v3148 = vtanh.pop %v2978
  %v3149 = vtanh.pop %v2980
  %v3150 = vtanh.pop %v2984
  %v3151 = vtanh.pop %v2986
  %v3152 = vtanh.pop %v2990
  %v3153 = vtanh.pop %v2992
  %v3154 = vtanh.pop %v2996
  %v3155 = vtanh.pop %v2998
  %v3156 = vtanh.pop %v3002
  %v3157 = vtanh.pop %v3004
  %v3158 = vtanh.pop %v3008
  %v3159 = vtanh.pop %v3010
  %v3160 = vtanh.pop %v3014
  %v3161 = vtanh.pop %v3016
  %v3162 = vtanh.pop %v3020
  %v3163 = vtanh.pop %v3022
  %v3164 = vtanh.pop %v3026
  %v3165 = vtanh.pop %v3028
  %v3166 = vtanh.pop %v3032
  %v3167 = vtanh.pop %v3034
  %v3168 = vtanh.pop %v3038
  %v3169 = vtanh.pop %v3040
  %v3170 = vtanh.pop %v3044
  %v3171 = vtanh.pop %v3046
  %v3172 = vtanh.pop %v3050
  %v3173 = vtanh.pop %v3052
  %v3174 = vtanh.pop %v3056
  %v3175 = vtanh.pop %v3058
  %v3176 = vtanh.pop %v3062
  %v3177 = vtanh.pop %v3064
  %v3178 = vtanh.pop %v3068
  %v3179 = vtanh.pop %v3070
  %v3180 = vtanh.pop %v3074
  %v3181 = vtanh.pop %v3076
  %v3182 = vtanh.pop %v3080
  %v3183 = vtanh.pop %v3082
  %v3184 = vtanh.pop %v3086
  %v3185 = vtanh.pop %v3088
  %v3186 = vtanh.pop %v3092
  %v3187 = vtanh.pop %v3094
  %v3188 = vtanh.pop %v3098
  %v3189 = vtanh.pop %v3100
  %v3190 = vtanh.pop %v3104
  %v3191 = vtanh.pop %v3106
  %v3192 = vtanh.pop %v3110
  %v3193 = vtanh.pop %v3112
  %v3194 = vtanh.pop %v3116
  %v3195 = vtanh.pop %v3118
  %v3196 = vtanh.pop %v3122
  %v3197 = vtanh.pop %v3124
  %v3198 = vtanh.pop %v3128
  %v3199 = vtanh.pop %v3130
  %v3200 = vtanh.pop %v3134
  %v3201 = vtanh.pop %v3136
  %v3202 = vld [vmem:[%s12] sm:$0xff]
  %v3203 = vld [vmem:[%s12 + $0x8] sm:$0xff]
  %v3204 = vld [vmem:[%s12 + $0x10] sm:$0xff]
  %v3205 = vld [vmem:[%s12 + $0x18] sm:$0xff]
  %v3206 = vld [vmem:[%s12 + $0x20] sm:$0xff]
  %v3207 = vld [vmem:[%s12 + $0x28] sm:$0xff]
  %v3208 = vld [vmem:[%s12 + $0x30] sm:$0xff]
  %v3209 = vld [vmem:[%s12 + $0x38] sm:$0xff]
  %v3210 = vld [vmem:[%s12 + $0x40] sm:$0xff]
  %v3211 = vld [vmem:[%s12 + $0x48] sm:$0xff]
  %v3212 = vld [vmem:[%s12 + $0x50] sm:$0xff]
  %v3213 = vld [vmem:[%s12 + $0x58] sm:$0xff]
  %v3214 = vld [vmem:[%s12 + $0x60] sm:$0xff]
  %v3215 = vld [vmem:[%s12 + $0x68] sm:$0xff]
  %v3216 = vld [vmem:[%s12 + $0x70] sm:$0xff]
  %v3217 = vld [vmem:[%s12 + $0x78] sm:$0xff]
  %v3218 = vld [vmem:[%s12 + $0x80] sm:$0xff]
  %v3219 = vld [vmem:[%s12 + $0x88] sm:$0xff]
  %v3220 = vld [vmem:[%s12 + $0x90] sm:$0xff]
  %v3221 = vld [vmem:[%s12 + $0x98] sm:$0xff]
  %v3222 = vld [vmem:[%s12 + $0xa0] sm:$0xff]
  %v3223 = vld [vmem:[%s12 + $0xa8] sm:$0xff]
  %v3224 = vld [vmem:[%s12 + $0xb0] sm:$0xff]
  %v3225 = vld [vmem:[%s12 + $0xb8] sm:$0xff]
  %v3226 = vld [vmem:[%s12 + $0xc0] sm:$0xff]
  %v3227 = vld [vmem:[%s12 + $0xc8] sm:$0xff]
  %v3228 = vld [vmem:[%s12 + $0xd0] sm:$0xff]
  %v3229 = vld [vmem:[%s12 + $0xd8] sm:$0xff]
  %v3230 = vld [vmem:[%s12 + $0xe0] sm:$0xff]
  %v3231 = vld [vmem:[%s12 + $0xe8] sm:$0xff]
  %v3232 = vld [vmem:[%s12 + $0xf0] sm:$0xff]
  %v3233 = vld [vmem:[%s12 + $0xf8] sm:$0xff]
  %v3234 = vld [vmem:[%s13] sm:$0x1]
  %v3236 = vlaneseq
  %v3237 = vshrl.u32 %v3236, 7
  %v3238 = vsub.s32 0, %v3237
  %v3239 = vrot.slane %v3234, %v3238
  %3241 = vmatprep.subr.mxu0 0.0
  %3242 = vmatpush1.msra.mxu0 %v3202
  %3243 = vmatprep.subr.mxu0 0.0
  %3244 = vmatpush1.msra.mxu0 %v3203
  %3245 = vmatprep.subr.mxu0 0.0
  %3246 = vmatpush1.msra.mxu0 %v3204
  %3247 = vmatprep.subr.mxu0 0.0
  %3248 = vmatpush1.msra.mxu0 %v3205
  %3249 = vmatprep.subr.mxu0 0.0
  %3250 = vmatpush1.msra.mxu0 %v3206
  %3251 = vmatprep.subr.mxu0 0.0
  %3252 = vmatpush1.msra.mxu0 %v3207
  %3253 = vmatprep.subr.mxu0 0.0
  %3254 = vmatpush1.msra.mxu0 %v3208
  %3255 = vmatprep.subr.mxu0 0.0
  %3256 = vmatpush1.msra.mxu0 %v3209
  %3257 = vmatprep.subr.mxu0 0.0
  %3258 = vmatpush1.msra.mxu0 %v3210
  %3259 = vmatprep.subr.mxu0 0.0
  %3260 = vmatpush1.msra.mxu0 %v3211
  %3261 = vmatprep.subr.mxu0 0.0
  %3262 = vmatpush1.msra.mxu0 %v3212
  %3263 = vmatprep.subr.mxu0 0.0
  %3264 = vmatpush1.msra.mxu0 %v3213
  %3265 = vmatprep.subr.mxu0 0.0
  %3266 = vmatpush1.msra.mxu0 %v3214
  %3267 = vmatprep.subr.mxu0 0.0
  %3268 = vmatpush1.msra.mxu0 %v3215
  %3269 = vmatprep.subr.mxu0 0.0
  %3270 = vmatpush1.msra.mxu0 %v3216
  %3271 = vmatprep.subr.mxu0 0.0
  %3272 = vmatpush1.msra.mxu0 %v3217
  %3273 = vmatprep.subr.mxu0 0.0
  %3274 = vmatpush1.msra.mxu0 %v3218
  %3275 = vmatprep.subr.mxu0 0.0
  %3276 = vmatpush1.msra.mxu0 %v3219
  %3277 = vmatprep.subr.mxu0 0.0
  %3278 = vmatpush1.msra.mxu0 %v3220
  %3279 = vmatprep.subr.mxu0 0.0
  %3280 = vmatpush1.msra.mxu0 %v3221
  %3281 = vmatprep.subr.mxu0 0.0
  %3282 = vmatpush1.msra.mxu0 %v3222
  %3283 = vmatprep.subr.mxu0 0.0
  %3284 = vmatpush1.msra.mxu0 %v3223
  %3285 = vmatprep.subr.mxu0 0.0
  %3286 = vmatpush1.msra.mxu0 %v3224
  %3287 = vmatprep.subr.mxu0 0.0
  %3288 = vmatpush1.msra.mxu0 %v3225
  %3289 = vmatprep.subr.mxu0 0.0
  %3290 = vmatpush1.msra.mxu0 %v3226
  %3291 = vmatprep.subr.mxu0 0.0
  %3292 = vmatpush1.msra.mxu0 %v3227
  %3293 = vmatprep.subr.mxu0 0.0
  %3294 = vmatpush1.msra.mxu0 %v3228
  %3295 = vmatprep.subr.mxu0 0.0
  %3296 = vmatpush1.msra.mxu0 %v3229
  %3297 = vmatprep.subr.mxu0 0.0
  %3298 = vmatpush1.msra.mxu0 %v3230
  %3299 = vmatprep.subr.mxu0 0.0
  %3300 = vmatpush1.msra.mxu0 %v3231
  %3301 = vmatprep.subr.mxu0 0.0
  %3302 = vmatpush1.msra.mxu0 %v3232
  %3303 = vmatprep.subr.mxu0 0.0
  %3304 = vmatpush1.msra.mxu0 %v3233
  %3305 = vmatprep.mubr.f32.mxu0 %v3139
  %3306 = vmatmul.mubr.f32.gmra.mrb[0].mxu0 %v3138
  %v3307 = vpop.f32.mrb[0].mxu0
  %v3308 = vadd.f32 %v3239, %v3307
  %v3309 = vpop.f32.mrb[0].mxu0
  %3310 = vmatprep.mubr.f32.mxu0 %v3141
  %3311 = vmatmul.mubr.f32.gmra.mrb[0].mxu0 %v3140
  %v3312 = vpop.f32.mrb[0].mxu0
  %v3313 = vadd.f32 %v3239, %v3312
  %v3314 = vpop.f32.mrb[0].mxu0
  %3315 = vmatprep.mubr.f32.mxu0 %v3143
  %3316 = vmatmul.mubr.f32.gmra.mrb[0].mxu0 %v3142
  %v3317 = vpop.f32.mrb[0].mxu0
  %v3318 = vadd.f32 %v3239, %v3317
  %v3319 = vpop.f32.mrb[0].mxu0
  %3320 = vmatprep.mubr.f32.mxu0 %v3145
  %3321 = vmatmul.mubr.f32.gmra.mrb[0].mxu0 %v3144
  %v3322 = vpop.f32.mrb[0].mxu0
  %v3323 = vadd.f32 %v3239, %v3322
  %v3324 = vpop.f32.mrb[0].mxu0
  %3325 = vmatprep.mubr.f32.mxu0 %v3147
  %3326 = vmatmul.mubr.f32.gmra.mrb[0].mxu0 %v3146
  %v3327 = vpop.f32.mrb[0].mxu0
  %v3328 = vadd.f32 %v3239, %v3327
  %v3329 = vpop.f32.mrb[0].mxu0
  %3330 = vmatprep.mubr.f32.mxu0 %v3149
  %3331 = vmatmul.mubr.f32.gmra.mrb[0].mxu0 %v3148
  %v3332 = vpop.f32.mrb[0].mxu0
  %v3333 = vadd.f32 %v3239, %v3332
  %v3334 = vpop.f32.mrb[0].mxu0
  %3335 = vmatprep.mubr.f32.mxu0 %v3151
  %3336 = vmatmul.mubr.f32.gmra.mrb[0].mxu0 %v3150
  %v3337 = vpop.f32.mrb[0].mxu0
  %v3338 = vadd.f32 %v3239, %v3337
  %v3339 = vpop.f32.mrb[0].mxu0
  %3340 = vmatprep.mubr.f32.mxu0 %v3153
  %3341 = vmatmul.mubr.f32.gmra.mrb[0].mxu0 %v3152
  %v3342 = vpop.f32.mrb[0].mxu0
  %v3343 = vadd.f32 %v3239, %v3342
  %v3344 = vpop.f32.mrb[0].mxu0
  %3345 = vmatprep.mubr.f32.mxu0 %v3155
  %3346 = vmatmul.mubr.f32.gmra.mrb[0].mxu0 %v3154
  %v3347 = vpop.f32.mrb[0].mxu0
  %v3348 = vadd.f32 %v3239, %v3347
  %v3349 = vpop.f32.mrb[0].mxu0
  %3350 = vmatprep.mubr.f32.mxu0 %v3157
  %3351 = vmatmul.mubr.f32.gmra.mrb[0].mxu0 %v3156
  %v3352 = vpop.f32.mrb[0].mxu0
  %v3353 = vadd.f32 %v3239, %v3352
  %v3354 = vpop.f32.mrb[0].mxu0
  %3355 = vmatprep.mubr.f32.mxu0 %v3159
  %3356 = vmatmul.mubr.f32.gmra.mrb[0].mxu0 %v3158
  %v3357 = vpop.f32.mrb[0].mxu0
  %v3358 = vadd.f32 %v3239, %v3357
  %v3359 = vpop.f32.mrb[0].mxu0
  %3360 = vmatprep.mubr.f32.mxu0 %v3161
  %3361 = vmatmul.mubr.f32.gmra.mrb[0].mxu0 %v3160
  %v3362 = vpop.f32.mrb[0].mxu0
  %v3363 = vadd.f32 %v3239, %v3362
  %v3364 = vpop.f32.mrb[0].mxu0
  %3365 = vmatprep.mubr.f32.mxu0 %v3163
  %3366 = vmatmul.mubr.f32.gmra.mrb[0].mxu0 %v3162
  %v3367 = vpop.f32.mrb[0].mxu0
  %v3368 = vadd.f32 %v3239, %v3367
  %v3369 = vpop.f32.mrb[0].mxu0
  %3370 = vmatprep.mubr.f32.mxu0 %v3165
  %3371 = vmatmul.mubr.f32.gmra.mrb[0].mxu0 %v3164
  %v3372 = vpop.f32.mrb[0].mxu0
  %v3373 = vadd.f32 %v3239, %v3372
  %v3374 = vpop.f32.mrb[0].mxu0
  %3375 = vmatprep.mubr.f32.mxu0 %v3167
  %3376 = vmatmul.mubr.f32.gmra.mrb[0].mxu0 %v3166
  %v3377 = vpop.f32.mrb[0].mxu0
  %v3378 = vadd.f32 %v3239, %v3377
  %v3379 = vpop.f32.mrb[0].mxu0
  %3380 = vmatprep.mubr.f32.mxu0 %v3169
  %3381 = vmatmul.mubr.f32.gmra.mrb[0].mxu0 %v3168
  %v3382 = vpop.f32.mrb[0].mxu0
  %v3383 = vadd.f32 %v3239, %v3382
  %v3384 = vpop.f32.mrb[0].mxu0
  %3385 = vmatprep.mubr.f32.mxu0 %v3171
  %3386 = vmatmul.mubr.f32.gmra.mrb[0].mxu0 %v3170
  %v3387 = vpop.f32.mrb[0].mxu0
  %v3388 = vadd.f32 %v3239, %v3387
  %v3389 = vpop.f32.mrb[0].mxu0
  %3390 = vmatprep.mubr.f32.mxu0 %v3173
  %3391 = vmatmul.mubr.f32.gmra.mrb[0].mxu0 %v3172
  %v3392 = vpop.f32.mrb[0].mxu0
  %v3393 = vadd.f32 %v3239, %v3392
  %v3394 = vpop.f32.mrb[0].mxu0
  %3395 = vmatprep.mubr.f32.mxu0 %v3175
  %3396 = vmatmul.mubr.f32.gmra.mrb[0].mxu0 %v3174
  %v3397 = vpop.f32.mrb[0].mxu0
  %v3398 = vadd.f32 %v3239, %v3397
  %v3399 = vpop.f32.mrb[0].mxu0
  %3400 = vmatprep.mubr.f32.mxu0 %v3177
  %3401 = vmatmul.mubr.f32.gmra.mrb[0].mxu0 %v3176
  %v3402 = vpop.f32.mrb[0].mxu0
  %v3403 = vadd.f32 %v3239, %v3402
  %v3404 = vpop.f32.mrb[0].mxu0
  %3405 = vmatprep.mubr.f32.mxu0 %v3179
  %3406 = vmatmul.mubr.f32.gmra.mrb[0].mxu0 %v3178
  %v3407 = vpop.f32.mrb[0].mxu0
  %v3408 = vadd.f32 %v3239, %v3407
  %v3409 = vpop.f32.mrb[0].mxu0
  %3410 = vmatprep.mubr.f32.mxu0 %v3181
  %3411 = vmatmul.mubr.f32.gmra.mrb[0].mxu0 %v3180
  %v3412 = vpop.f32.mrb[0].mxu0
  %v3413 = vadd.f32 %v3239, %v3412
  %v3414 = vpop.f32.mrb[0].mxu0
  %3415 = vmatprep.mubr.f32.mxu0 %v3183
  %3416 = vmatmul.mubr.f32.gmra.mrb[0].mxu0 %v3182
  %v3417 = vpop.f32.mrb[0].mxu0
  %v3418 = vadd.f32 %v3239, %v3417
  %v3419 = vpop.f32.mrb[0].mxu0
  %3420 = vmatprep.mubr.f32.mxu0 %v3185
  %3421 = vmatmul.mubr.f32.gmra.mrb[0].mxu0 %v3184
  %v3422 = vpop.f32.mrb[0].mxu0
  %v3423 = vadd.f32 %v3239, %v3422
  %v3424 = vpop.f32.mrb[0].mxu0
  %3425 = vmatprep.mubr.f32.mxu0 %v3187
  %3426 = vmatmul.mubr.f32.gmra.mrb[0].mxu0 %v3186
  %v3427 = vpop.f32.mrb[0].mxu0
  %v3428 = vadd.f32 %v3239, %v3427
  %v3429 = vpop.f32.mrb[0].mxu0
  %3430 = vmatprep.mubr.f32.mxu0 %v3189
  %3431 = vmatmul.mubr.f32.gmra.mrb[0].mxu0 %v3188
  %v3432 = vpop.f32.mrb[0].mxu0
  %v3433 = vadd.f32 %v3239, %v3432
  %v3434 = vpop.f32.mrb[0].mxu0
  %3435 = vmatprep.mubr.f32.mxu0 %v3191
  %3436 = vmatmul.mubr.f32.gmra.mrb[0].mxu0 %v3190
  %v3437 = vpop.f32.mrb[0].mxu0
  %v3438 = vadd.f32 %v3239, %v3437
  %v3439 = vpop.f32.mrb[0].mxu0
  %3440 = vmatprep.mubr.f32.mxu0 %v3193
  %3441 = vmatmul.mubr.f32.gmra.mrb[0].mxu0 %v3192
  %v3442 = vpop.f32.mrb[0].mxu0
  %v3443 = vadd.f32 %v3239, %v3442
  %v3444 = vpop.f32.mrb[0].mxu0
  %3445 = vmatprep.mubr.f32.mxu0 %v3195
  %3446 = vmatmul.mubr.f32.gmra.mrb[0].mxu0 %v3194
  %v3447 = vpop.f32.mrb[0].mxu0
  %v3448 = vadd.f32 %v3239, %v3447
  %v3449 = vpop.f32.mrb[0].mxu0
  %3450 = vmatprep.mubr.f32.mxu0 %v3197
  %3451 = vmatmul.mubr.f32.gmra.mrb[0].mxu0 %v3196
  %v3452 = vpop.f32.mrb[0].mxu0
  %v3453 = vadd.f32 %v3239, %v3452
  %v3454 = vpop.f32.mrb[0].mxu0
  %3455 = vmatprep.mubr.f32.mxu0 %v3199
  %3456 = vmatmul.mubr.f32.gmra.mrb[0].mxu0 %v3198
  %v3457 = vpop.f32.mrb[0].mxu0
  %v3458 = vadd.f32 %v3239, %v3457
  %v3459 = vpop.f32.mrb[0].mxu0
  %3460 = vmatprep.mubr.f32.mxu0 %v3201
  %3461 = vmatmul.mubr.f32.gmra.mrb[0].mxu0 %v3200
  %v3462 = vpop.f32.mrb[0].mxu0
  %v3463 = vadd.f32 %v3239, %v3462
  %v3464 = vpop.f32.mrb[0].mxu0
  %3465 = vdwg.mxu0
  %v3466 = vtanh.pop %v3308
  %v3467 = vtanh.pop %v3313
  %v3468 = vtanh.pop %v3318
  %v3469 = vtanh.pop %v3323
  %v3470 = vtanh.pop %v3328
  %v3471 = vtanh.pop %v3333
  %v3472 = vtanh.pop %v3338
  %v3473 = vtanh.pop %v3343
  %v3474 = vtanh.pop %v3348
  %v3475 = vtanh.pop %v3353
  %v3476 = vtanh.pop %v3358
  %v3477 = vtanh.pop %v3363
  %v3478 = vtanh.pop %v3368
  %v3479 = vtanh.pop %v3373
  %v3480 = vtanh.pop %v3378
  %v3481 = vtanh.pop %v3383
  %v3482 = vtanh.pop %v3388
  %v3483 = vtanh.pop %v3393
  %v3484 = vtanh.pop %v3398
  %v3485 = vtanh.pop %v3403
  %v3486 = vtanh.pop %v3408
  %v3487 = vtanh.pop %v3413
  %v3488 = vtanh.pop %v3418
  %v3489 = vtanh.pop %v3423
  %v3490 = vtanh.pop %v3428
  %v3491 = vtanh.pop %v3433
  %v3492 = vtanh.pop %v3438
  %v3493 = vtanh.pop %v3443
  %v3494 = vtanh.pop %v3448
  %v3495 = vtanh.pop %v3453
  %v3496 = vtanh.pop %v3458
  %v3497 = vtanh.pop %v3463
  %v3498 = vld [vmem:[%s14] sm:$0x1]
  %v3499 = vld [vmem:[#allocation2] sm:$0x1]
  %3501 = vset.pattern.permute.xlu0 0
  %3502 = vperm.xlu0 %3501, %v3499
  %v3503 = vpop.permute.xlu0 %3502
  %v3505 = vlaneseq
  %v3506 = vshrl.u32 %v3505, 7
  %v3507 = vsub.s32 0, %v3506
  %v3508 = vrot.slane %v3503, %v3507
  %3509 = vmatprep.subr.mxu0 0.0
  %3510 = vmatpush1.xpose.msra.mxu0 %v3466
  %3511 = vmatprep.subr.mxu0 0.0
  %3512 = vmatpush1.xpose.msra.mxu0 %v3467
  %3513 = vmatprep.subr.mxu0 0.0
  %3514 = vmatpush1.xpose.msra.mxu0 %v3468
  %3515 = vmatprep.subr.mxu0 0.0
  %3516 = vmatpush1.xpose.msra.mxu0 %v3469
  %3517 = vmatprep.subr.mxu0 0.0
  %3518 = vmatpush1.xpose.msra.mxu0 %v3470
  %3519 = vmatprep.subr.mxu0 0.0
  %3520 = vmatpush1.xpose.msra.mxu0 %v3471
  %3521 = vmatprep.subr.mxu0 0.0
  %3522 = vmatpush1.xpose.msra.mxu0 %v3472
  %3523 = vmatprep.subr.mxu0 0.0
  %3524 = vmatpush1.xpose.msra.mxu0 %v3473
  %3525 = vmatprep.subr.mxu0 0.0
  %3526 = vmatpush1.xpose.msra.mxu0 %v3474
  %3527 = vmatprep.subr.mxu0 0.0
  %3528 = vmatpush1.xpose.msra.mxu0 %v3475
  %3529 = vmatprep.subr.mxu0 0.0
  %3530 = vmatpush1.xpose.msra.mxu0 %v3476
  %3531 = vmatprep.subr.mxu0 0.0
  %3532 = vmatpush1.xpose.msra.mxu0 %v3477
  %3533 = vmatprep.subr.mxu0 0.0
  %3534 = vmatpush1.xpose.msra.mxu0 %v3478
  %3535 = vmatprep.subr.mxu0 0.0
  %3536 = vmatpush1.xpose.msra.mxu0 %v3479
  %3537 = vmatprep.subr.mxu0 0.0
  %3538 = vmatpush1.xpose.msra.mxu0 %v3480
  %3539 = vmatprep.subr.mxu0 0.0
  %3540 = vmatpush1.xpose.msra.mxu0 %v3481
  %3541 = vmatprep.subr.mxu0 0.0
  %3542 = vmatpush1.xpose.msra.mxu0 %v3482
  %3543 = vmatprep.subr.mxu0 0.0
  %3544 = vmatpush1.xpose.msra.mxu0 %v3483
  %3545 = vmatprep.subr.mxu0 0.0
  %3546 = vmatpush1.xpose.msra.mxu0 %v3484
  %3547 = vmatprep.subr.mxu0 0.0
  %3548 = vmatpush1.xpose.msra.mxu0 %v3485
  %3549 = vmatprep.subr.mxu0 0.0
  %3550 = vmatpush1.xpose.msra.mxu0 %v3486
  %3551 = vmatprep.subr.mxu0 0.0
  %3552 = vmatpush1.xpose.msra.mxu0 %v3487
  %3553 = vmatprep.subr.mxu0 0.0
  %3554 = vmatpush1.xpose.msra.mxu0 %v3488
  %3555 = vmatprep.subr.mxu0 0.0
  %3556 = vmatpush1.xpose.msra.mxu0 %v3489
  %3557 = vmatprep.subr.mxu0 0.0
  %3558 = vmatpush1.xpose.msra.mxu0 %v3490
  %3559 = vmatprep.subr.mxu0 0.0
  %3560 = vmatpush1.xpose.msra.mxu0 %v3491
  %3561 = vmatprep.subr.mxu0 0.0
  %3562 = vmatpush1.xpose.msra.mxu0 %v3492
  %3563 = vmatprep.subr.mxu0 0.0
  %3564 = vmatpush1.xpose.msra.mxu0 %v3493
  %3565 = vmatprep.subr.mxu0 0.0
  %3566 = vmatpush1.xpose.msra.mxu0 %v3494
  %3567 = vmatprep.subr.mxu0 0.0
  %3568 = vmatpush1.xpose.msra.mxu0 %v3495
  %3569 = vmatprep.subr.mxu0 0.0
  %3570 = vmatpush1.xpose.msra.mxu0 %v3496
  %3571 = vmatprep.subr.mxu0 0.0
  %3572 = vmatpush1.xpose.msra.mxu0 %v3497
  %3573 = vmatprep.mubr.f32.mxu0 0.0
  %3574 = vmatmul.mubr.f32.gmra.mrb[0].mxu0 %v3498
  %v3575 = vpop.f32.mrb[0].mxu0
  %v3576 = vadd.f32 %v3508, %v3575
  %v3577 = vpop.f32.mrb[0].mxu0
  %v3578 = vadd.f32 %v3508, %v3577
  %3579 = vdwg.mxu0
  %v3580 = vxor.u32 %v3576, 2147483648
  %v3581 = vxor.u32 %v3578, 2147483648
  %v3582 = vmul.f32 %v3580, 1.442695
  %v3583 = vpow.pop %v3582
  %v3584 = vmul.f32 %v3581, 1.442695
  %v3585 = vpow.pop %v3584
  %v3586 = vadd.f32 %v3583, 1.0
  %v3587 = vadd.f32 %v3585, 1.0
  %v3588 = vrcp.pop %v3586
  %v3589 = vmul.f32 1.0, %v3588
  %v3590 = vrcp.pop %v3587
  %v3591 = vmul.f32 1.0, %v3590
  %v3594 = vcombine.low %v3589, %v3591
  %v3596 = vunpack.c.l.s4 1966171168
  %v3597 = vunpack.c.0.s8 %v3596
  %v3598 = vlaneseq
  %v3599 = vshrl.u32 %v3598, 7
  %v3600 = vsub.s32 %v3597, %v3599
  %v3601 = vrot.slane %v3594, %v3600
  %v3603 = vunpack.c.l.s4 1966171168
  %v3604 = vunpack.c.0.s8 %v3603
  %v3605 = vlaneseq
  %v3606 = vshrl.u32 %v3605, 7
  %v3607 = vsub.s32 %v3604, %v3606
  %v3608 = vrot.slane %v3601, %v3607
  %v3610 = vlaneseq
  %vm3611 = vcmp.ge.s32.totalorder %v3610, 0
  %vm3612 = vcmp.lt.s32.totalorder %v3610, 256
  %vm3613 = vmand %vm3611, %vm3612
  %3614 = vst.msk [vmem:[%s16] sm:$0x3] %vm3613, %v3608
  // Predicated region
  $region66: #{hscd_forward.21} parent=0 // pred_check
    _
  $region67: #{hscd_forward.21} parent=0 // pred_check_branch
    %3616 = sbr.rel (0) target = $region69
  $region68: #{hscd_forward.21} parent=0 // pred_region
    _
  $region69: #{hscd_forward.21} parent=0 // pred_fallthru
    _
  // Predicated region
  $region70: #{hscd_forward.21} parent=0 // pred_check
    _
  $region71: #{hscd_forward.21} parent=0 // pred_check_branch
    %3618 = sbr.rel (0) target = $region73
  $region72: #{hscd_forward.21} parent=0 // pred_region
    _
  $region73: #{hscd_forward.21} parent=0 // pred_fallthru
    _

</llo_original>
